<compile_context>
chip_gen: v7x
topology: tpu7x:2x2x1
jax: 0.10.0
libtpu: 0.0.40
codegen_flags: <defaults>
</compile_context>

<pallas_src>
import numpy as np

import jax
import jax.numpy as jnp
from jax.experimental import pallas as pl
from jax.experimental.pallas import tpu as pltpu

B_TILE = 8  # images per grid step (batch is zero-padded to a multiple of this)


# ---------------------------------------------------------------------------
# Kernel: the whole forward pass for B_TILE images per grid step
# ---------------------------------------------------------------------------
def _lenet_kernel(xp_ref, w1_ref, b1_ref, s1e_ref, s1o_ref,
                  w2_ref, b2_ref, s2e_ref, s2o_ref,
                  wf1_ref, bf1_ref, wf2_ref, bf2_ref, wf3_ref, bf3_ref,
                  out_ref):
    f32, bf16 = jnp.float32, jnp.bfloat16
    B = out_ref.shape[0]                       # images in this grid step

    # ---- conv1 (5x5, 3->6) + bias + ReLU, batch-stacked -------------------
    # xp_ref[p]: (B*28, 256) bf16, rows = img*28 + ho; lanes 0..95 carry image
    # row (2p+ho) as w*3+ci, lanes 128..223 carry row (2p+ho+1) -> K=256 folds
    # two kh taps per matmul (3 matmuls instead of 5; full MXU depth on v6e/v7x).
    acc1 = jnp.dot(xp_ref[0], w1_ref[0], preferred_element_type=f32)
    for p in range(1, 3):
        acc1 = acc1 + jnp.dot(xp_ref[p], w1_ref[p], preferred_element_type=f32)
    y1 = jnp.maximum(acc1 + b1_ref[...], 0.0)                  # (B*28, 256)

    # ---- 2x2 maxpool #1 ----------------------------------------------------
    # Width: even-wo half vs odd-wo half (lane-aligned).  Height: precomputed
    # 0/1 bf16 selection matmuls (block-diagonal per image); exact selection.
    c1 = jnp.maximum(y1[:, 0:128], y1[:, 128:256]).astype(bf16)  # (B*28, 128)
    p1 = jnp.maximum(
        jnp.dot(s1e_ref[...], c1, preferred_element_type=f32),
        jnp.dot(s1o_ref[...], c1, preferred_element_type=f32)).astype(bf16)
    # p1: (B*14, 128), rows = img*14 + hq, cols = w*6 + ci (w < 14, ci < 6).
    p1pad = jnp.concatenate([p1, jnp.zeros((8, 128), bf16)], axis=0)

    # ---- conv2 (5x5, 6->16) + bias + ReLU, batch-stacked -------------------
    # Build per-pair taps (B*10, 256): first 128 lanes carry p1 row (2p+ho),
    # last 128 lanes carry row (2p+ho+1); weights for nonexistent kh=5 are 0,
    # so the overrun rows read for pair p=2 never contribute.
    acc2 = None
    for p in range(3):
        first = jnp.concatenate(
            [p1pad[b * 14 + 2 * p: b * 14 + 2 * p + 10, :] for b in range(B)],
            axis=0)
        second = jnp.concatenate(
            [p1pad[b * 14 + 2 * p + 1: b * 14 + 2 * p + 11, :] for b in range(B)],
            axis=0)
        tap = jnp.concatenate([first, second], axis=1)           # (B*10, 256)
        d = jnp.dot(tap, w2_ref[p], preferred_element_type=f32)
        acc2 = d if acc2 is None else acc2 + d
    y2 = jnp.maximum(acc2 + b2_ref[...], 0.0)                    # (B*10, 256)

    # ---- 2x2 maxpool #2 ----------------------------------------------------
    c2 = jnp.maximum(y2[:, 0:128], y2[:, 128:256]).astype(bf16)  # (B*10, 128)
    p2 = jnp.maximum(
        jnp.dot(s2e_ref[...], c2, preferred_element_type=f32),
        jnp.dot(s2o_ref[...], c2, preferred_element_type=f32)).astype(bf16)
    # p2: (B*5, 128), rows ordered h*B + b so fc1 slices are aligned (B,128).

    # ---- fc1 (400 -> 120) + ReLU  (torch flatten order baked into wf1) -----
    accf = jnp.dot(p2[0:B, :], wf1_ref[0], preferred_element_type=f32)
    for h in range(1, 5):
        accf = accf + jnp.dot(p2[h * B:(h + 1) * B, :], wf1_ref[h],
                              preferred_element_type=f32)
    a1 = jnp.maximum(accf + bf1_ref[...], 0.0)                   # (B, 128)

    # ---- fc2 (120 -> 84) + ReLU, fc3 (84 -> 10) -----------------------------
    a2 = jnp.maximum(jnp.dot(a1.astype(bf16), wf2_ref[...],
                             preferred_element_type=f32) + bf2_ref[...], 0.0)
    a3 = jnp.dot(a2.astype(bf16), wf3_ref[...],
                 preferred_element_type=f32) + bf3_ref[...]      # (B, 128)

    out_ref[...] = a3           # lane-dense store; real logits in cols 0..9


# ---------------------------------------------------------------------------
# Host-side weight / constant preparation (done ONCE at init)
# ---------------------------------------------------------------------------
def _prep_conv_paired(w, b, in_w, k_pad=128, d_half=128):
    """Bake a 5x5 'valid' conv into 3 kh-pair banded matmul weights (K=256).

    Activation rows (matmul K): half*128 + w_abs*Cin + ci, where half=0 carries
    image row (2p+ho) and half=1 carries row (2p+ho+1).
    Output columns: (wo%2)*128 + (wo//2)*Cout + co (even/odd split so the
    pool's width reduction is an aligned max of halves).
    """
    w = np.asarray(w, np.float32)
    b = np.asarray(b, np.float32)
    cout, cin, kk, _ = w.shape
    wo_n = in_w - kk + 1
    n_pairs = (kk + 1) // 2
    wp = np.zeros((n_pairs, 2 * k_pad, 2 * d_half), np.float32)
    bp = np.zeros((1, 2 * d_half), np.float32)
    for p in range(n_pairs):
        for half in range(2):
            kh = 2 * p + half
            if kh >= kk:
                continue                       # kh=5 doesn't exist -> zeros
            for kw in range(kk):
                for ci in range(cin):
                    for wo in range(wo_n):
                        col = (wo % 2) * d_half + (wo // 2) * cout
                        row = half * k_pad + (wo + kw) * cin + ci
                        wp[p, row, col:col + cout] = w[:, ci, kh, kw]
    for wo in range(wo_n):
        col = (wo % 2) * d_half + (wo // 2) * cout
        bp[0, col:col + cout] = b
    return wp, bp


def _prep_fc1(w, b, d_pad=128):
    """fc1 with the NCHW flatten permutation baked in.

    Kernel activation p2_row_h[b, w*16 + c]; torch flatten index = c*25+h*5+w.
    """
    w = np.asarray(w, np.float32)
    b = np.asarray(b, np.float32)
    nout = w.shape[0]
    wp = np.zeros((5, d_pad, d_pad), np.float32)
    for h in range(5):
        for wq in range(5):
            for c in range(16):
                wp[h, wq * 16 + c, :nout] = w[:, c * 25 + h * 5 + wq]
    bp = np.zeros((1, d_pad), np.float32)
    bp[0, :nout] = b
    return wp, bp


def _prep_fc(w, b, d_pad=128):
    w = np.asarray(w, np.float32)
    b = np.asarray(b, np.float32)
    nout, nin = w.shape
    wp = np.zeros((d_pad, d_pad), np.float32)
    wp[:nin, :nout] = w.T
    bp = np.zeros((1, d_pad), np.float32)
    bp[0, :nout] = b
    return wp, bp


def _make_pool1_select(bt):
    """Row-pool selection for pool1: C1 rows b*28+ho -> P1 rows b*14+hq."""
    se = np.zeros((bt * 14, bt * 28), np.float32)
    so = np.zeros_like(se)
    for b in range(bt):
        for hq in range(14):
            se[b * 14 + hq, b * 28 + 2 * hq] = 1.0
            so[b * 14 + hq, b * 28 + 2 * hq + 1] = 1.0
    return se, so


def _make_pool2_select(bt):
    """Row-pool selection for pool2: C2 rows b*10+ho -> P2 rows h*bt+b
    (h-major so fc1's per-h stacks are contiguous, sublane-aligned slices)."""
    se = np.zeros((bt * 5, bt * 10), np.float32)
    so = np.zeros_like(se)
    for b in range(bt):
        for hq in range(5):
            se[hq * bt + b, b * 10 + 2 * hq] = 1.0
            so[hq * bt + b, b * 10 + 2 * hq + 1] = 1.0
    return se, so


def prepare_params(params):
    """Pre-pad / pre-transpose / re-layout all weights once (bf16 for the MXU)."""
    w1, b1 = _prep_conv_paired(params["conv1_w"], params["conv1_b"], in_w=32)
    w2, b2 = _prep_conv_paired(params["conv2_w"], params["conv2_b"], in_w=14)
    wf1, bf1 = _prep_fc1(params["fc1_w"], params["fc1_b"])
    wf2, bf2 = _prep_fc(params["fc2_w"], params["fc2_b"])
    wf3, bf3 = _prep_fc(params["fc3_w"], params["fc3_b"])
    s1e, s1o = _make_pool1_select(B_TILE)
    s2e, s2o = _make_pool2_select(B_TILE)
    as_w = lambda a: jnp.asarray(a, jnp.bfloat16)
    as_b = lambda a: jnp.asarray(a, jnp.float32)
    return {
        "w1": as_w(w1), "b1": as_b(b1),
        "w2": as_w(w2), "b2": as_b(b2),
        "s1e": as_w(s1e), "s1o": as_w(s1o),
        "s2e": as_w(s2e), "s2o": as_w(s2o),
        "wf1": as_w(wf1), "bf1": as_b(bf1),
        "wf2": as_w(wf2), "bf2": as_b(bf2),
        "wf3": as_w(wf3), "bf3": as_b(bf3),
    }


# ---------------------------------------------------------------------------
# Host-side input relayout (bf16, kh-pair slabs; fused XLA ops, per call)
# ---------------------------------------------------------------------------
def _prep_input(x_nchw, n_pad):
    n = x_nchw.shape[0]
    x = jnp.transpose(x_nchw, (0, 2, 3, 1)).reshape(n, 32, 96)
    if n_pad != n:
        x = jnp.pad(x, ((0, n_pad - n), (0, 0), (0, 0)))
    x = x.astype(jnp.bfloat16)                                   # pre-cast once
    x_lo = jnp.pad(x, ((0, 0), (0, 0), (0, 32)))                 # (n,32,128)
    x_hi = jnp.pad(x, ((0, 0), (0, 1), (0, 32)))[:, 1:, :]       # next row; last=0
    x256 = jnp.concatenate([x_lo, x_hi], axis=-1)                # (n,32,256)
    xp = jnp.stack([x256[:, 2 * p:2 * p + 28, :] for p in range(3)], axis=0)
    return xp.reshape(3, n_pad * 28, 256)                        # rows: img*28+ho


# ---------------------------------------------------------------------------
# Forward pass
# ---------------------------------------------------------------------------
@jax.jit
def net_forward(x_nchw, prep):
    n, c, h, w = x_nchw.shape
    assert (c, h, w) == (3, 32, 32), "Net expects (N, 3, 32, 32) inputs"
    BT = B_TILE
    n_pad = ((n + BT - 1) // BT) * BT
    xp = _prep_input(x_nchw, n_pad)

    weight_bytes = sum(int(np.prod(v.shape)) * v.dtype.itemsize
                       for v in prep.values())
    flops = int(n_pad * 2 * (28 * 28 * 75 * 6 + 10 * 10 * 150 * 16
                             + 400 * 120 + 120 * 84 + 84 * 10) * 1.3)
    bytes_accessed = int(xp.size * 2 + weight_bytes + n_pad * 128 * 4)

    out = pl.pallas_call(
        _lenet_kernel,
        out_shape=jax.ShapeDtypeStruct((n_pad, 128), jnp.float32),
        grid=(n_pad // BT,),
        in_specs=[
            pl.BlockSpec((3, BT * 28, 256), lambda i: (0, i, 0)),   # conv1 pair slabs
            pl.BlockSpec((3, 256, 256), lambda i: (0, 0, 0)),       # conv1 w
            pl.BlockSpec((1, 256), lambda i: (0, 0)),               # conv1 b
            pl.BlockSpec((BT * 14, BT * 28), lambda i: (0, 0)),     # pool1 sel even
            pl.BlockSpec((BT * 14, BT * 28), lambda i: (0, 0)),     # pool1 sel odd
            pl.BlockSpec((3, 256, 256), lambda i: (0, 0, 0)),       # conv2 w
            pl.BlockSpec((1, 256), lambda i: (0, 0)),               # conv2 b
            pl.BlockSpec((BT * 5, BT * 10), lambda i: (0, 0)),      # pool2 sel even
            pl.BlockSpec((BT * 5, BT * 10), lambda i: (0, 0)),      # pool2 sel odd
            pl.BlockSpec((5, 128, 128), lambda i: (0, 0, 0)),       # fc1 w
            pl.BlockSpec((1, 128), lambda i: (0, 0)),               # fc1 b
            pl.BlockSpec((128, 128), lambda i: (0, 0)),             # fc2 w
            pl.BlockSpec((1, 128), lambda i: (0, 0)),               # fc2 b
            pl.BlockSpec((128, 128), lambda i: (0, 0)),             # fc3 w
            pl.BlockSpec((1, 128), lambda i: (0, 0)),               # fc3 b
        ],
        out_specs=pl.BlockSpec((BT, 128), lambda i: (i, 0)),
        compiler_params=pltpu.CompilerParams(
            dimension_semantics=("parallel",),       # shard batch tiles over TCs
            vmem_limit_bytes=32 * 1024 * 1024,       # ~4 MB used; fits all gens
        ),
        cost_estimate=pl.CostEstimate(flops=flops, transcendentals=0,
                                      bytes_accessed=bytes_accessed),
    )(xp, prep["w1"], prep["b1"], prep["s1e"], prep["s1o"],
      prep["w2"], prep["b2"], prep["s2e"], prep["s2o"],
      prep["wf1"], prep["bf1"], prep["wf2"], prep["bf2"],
      prep["wf3"], prep["bf3"])

    # Lane-dense (128-wide) kernel output; slice padded rows + real logits.
    return out[:n, :10]


# ---------------------------------------------------------------------------
# Parameters (deterministic, PyTorch-like uniform init)
# ---------------------------------------------------------------------------
def init_params(key):
    ks = jax.random.split(key, 10)

    def u(k, shape, fan_in):
        bound = 1.0 / float(fan_in) ** 0.5
        return jax.random.uniform(k, shape, jnp.float32, -bound, bound)

    return {
        "conv1_w": u(ks[0], (6, 3, 5, 5), 3 * 25),
        "conv1_b": u(ks[1], (6,), 3 * 25),
        "conv2_w": u(ks[2], (16, 6, 5, 5), 6 * 25),
        "conv2_b": u(ks[3], (16,), 6 * 25),
        "fc1_w": u(ks[4], (120, 16 * 5 * 5), 16 * 5 * 5),
        "fc1_b": u(ks[5], (120,), 16 * 5 * 5),
        "fc2_w": u(ks[6], (84, 120), 120),
        "fc2_b": u(ks[7], (84,), 120),
        "fc3_w": u(ks[8], (10, 84), 84),
        "fc3_b": u(ks[9], (10,), 84),
    }


# ---------------------------------------------------------------------------
# Pure-JAX reference (mirrors the PyTorch module, f32)
# ---------------------------------------------------------------------------
def _reference_forward(x_nchw, params):
    dn = ("NCHW", "OIHW", "NCHW")
    y = jax.lax.conv_general_dilated(x_nchw, params["conv1_w"], (1, 1), "VALID",
                                     dimension_numbers=dn)
    y = jax.nn.relu(y + params["conv1_b"][None, :, None, None])
    y = jax.lax.reduce_window(y, -jnp.inf, jax.lax.max,
                              (1, 1, 2, 2), (1, 1, 2, 2), "VALID")
    y = jax.lax.conv_general_dilated(y, params["conv2_w"], (1, 1), "VALID",
                                     dimension_numbers=dn)
    y = jax.nn.relu(y + params["conv2_b"][None, :, None, None])
    y = jax.lax.reduce_window(y, -jnp.inf, jax.lax.max,
                              (1, 1, 2, 2), (1, 1, 2, 2), "VALID")
    y = y.reshape(y.shape[0], -1)                      # torch.flatten(x, 1)
    y = jax.nn.relu(y @ params["fc1_w"].T + params["fc1_b"])
    y = jax.nn.relu(y @ params["fc2_w"].T + params["fc2_b"])
    return y @ params["fc3_w"].T + params["fc3_b"]


if __name__ == "__main__":
    key = jax.random.PRNGKey(0)
    k_x, k_p = jax.random.split(key)
    # Input must be (N, 3, 32, 32) for the 16*5*5 flatten to hold (CIFAR-10).
    x = jax.random.normal(k_x, (2, 3, 32, 32), dtype=jnp.float32)
    params = init_params(k_p)
    prep = prepare_params(params)

    out = net_forward(x, prep)
    out = jax.block_until_ready(out)
    assert out.shape == (2, 10), out.shape

    # Numerical check vs the f32 reference (bf16 MXU inputs, f32 accumulation).
    ref = jax.block_until_ready(_reference_forward(x, params))
    max_err = float(jnp.max(jnp.abs(out - ref)))
    assert max_err < 5e-2, f"max abs error vs reference: {max_err}"

    print("KERNEL_OK")
</pallas_src>

<mosaic_0001>
module attributes {stable_mosaic.version = 11 : i64} {
  func.func @_lenet_kernel(%arg0: i32, %arg1: memref<3x224x256xbf16, #tpu.memory_space<vmem>>, %arg2: memref<3x256x256xbf16, #tpu.memory_space<vmem>>, %arg3: memref<1x256xf32, #tpu.memory_space<vmem>>, %arg4: memref<112x224xbf16, #tpu.memory_space<vmem>>, %arg5: memref<112x224xbf16, #tpu.memory_space<vmem>>, %arg6: memref<3x256x256xbf16, #tpu.memory_space<vmem>>, %arg7: memref<1x256xf32, #tpu.memory_space<vmem>>, %arg8: memref<40x80xbf16, #tpu.memory_space<vmem>>, %arg9: memref<40x80xbf16, #tpu.memory_space<vmem>>, %arg10: memref<5x128x128xbf16, #tpu.memory_space<vmem>>, %arg11: memref<1x128xf32, #tpu.memory_space<vmem>>, %arg12: memref<128x128xbf16, #tpu.memory_space<vmem>>, %arg13: memref<1x128xf32, #tpu.memory_space<vmem>>, %arg14: memref<128x128xbf16, #tpu.memory_space<vmem>>, %arg15: memref<1x128xf32, #tpu.memory_space<vmem>>, %arg16: memref<8x128xf32, #tpu.memory_space<vmem>>) attributes {dimension_semantics = [#tpu.dimension_semantics<parallel>], iteration_bounds = array<i64: 1>, scalar_prefetch = 0 : i64, scratch_operands = 0 : i64, tpu.core_type = #tpu.core_type<tc>, window_params = [{transform_indices = @transform_0, window_bounds = array<i64: 3, 224, 256>}, {pipeline_mode = #tpu.pipeline_mode<synchronous>, transform_indices = @transform_1, window_bounds = array<i64: 3, 256, 256>}, {pipeline_mode = #tpu.pipeline_mode<synchronous>, transform_indices = @transform_2, window_bounds = array<i64: 1, 256>}, {pipeline_mode = #tpu.pipeline_mode<synchronous>, transform_indices = @transform_3, window_bounds = array<i64: 112, 224>}, {pipeline_mode = #tpu.pipeline_mode<synchronous>, transform_indices = @transform_4, window_bounds = array<i64: 112, 224>}, {pipeline_mode = #tpu.pipeline_mode<synchronous>, transform_indices = @transform_5, window_bounds = array<i64: 3, 256, 256>}, {pipeline_mode = #tpu.pipeline_mode<synchronous>, transform_indices = @transform_6, window_bounds = array<i64: 1, 256>}, {pipeline_mode = #tpu.pipeline_mode<synchronous>, transform_indices = @transform_7, window_bounds = array<i64: 40, 80>}, {pipeline_mode = #tpu.pipeline_mode<synchronous>, transform_indices = @transform_8, window_bounds = array<i64: 40, 80>}, {pipeline_mode = #tpu.pipeline_mode<synchronous>, transform_indices = @transform_9, window_bounds = array<i64: 5, 128, 128>}, {pipeline_mode = #tpu.pipeline_mode<synchronous>, transform_indices = @transform_10, window_bounds = array<i64: 1, 128>}, {pipeline_mode = #tpu.pipeline_mode<synchronous>, transform_indices = @transform_11, window_bounds = array<i64: 128, 128>}, {pipeline_mode = #tpu.pipeline_mode<synchronous>, transform_indices = @transform_12, window_bounds = array<i64: 1, 128>}, {pipeline_mode = #tpu.pipeline_mode<synchronous>, transform_indices = @transform_13, window_bounds = array<i64: 128, 128>}, {pipeline_mode = #tpu.pipeline_mode<synchronous>, transform_indices = @transform_14, window_bounds = array<i64: 1, 128>}, {transform_indices = @transform_15, window_bounds = array<i64: 8, 128>}]} {
    %c0 = arith.constant 0 : index
    %c0_0 = arith.constant 0 : index
    %c0_1 = arith.constant 0 : index
    %0 = vector.load %arg1[%c0, %c0_0, %c0_1] : memref<3x224x256xbf16, #tpu.memory_space<vmem>>, vector<1x224x256xbf16>
    %1 = vector.shape_cast %0 : vector<1x224x256xbf16> to vector<224x256xbf16>
    %c0_2 = arith.constant 0 : index
    %c0_3 = arith.constant 0 : index
    %c0_4 = arith.constant 0 : index
    %2 = vector.load %arg2[%c0_2, %c0_3, %c0_4] : memref<3x256x256xbf16, #tpu.memory_space<vmem>>, vector<1x256x256xbf16>
    %3 = vector.shape_cast %2 : vector<1x256x256xbf16> to vector<256x256xbf16>
    %cst = arith.constant dense<0.000000e+00> : vector<224x256xf32>
    %4 = tpu.matmul %1, %3, %cst {dimension_numbers = #tpu.dot_dimension_numbers<[1], [0], [0], [1], [0, 0, 1, 1], [], []>} : vector<224x256xbf16>, vector<256x256xbf16>, vector<224x256xf32> -> vector<224x256xf32>
    %c1 = arith.constant 1 : index
    %c0_5 = arith.constant 0 : index
    %c0_6 = arith.constant 0 : index
    %5 = vector.load %arg1[%c1, %c0_5, %c0_6] : memref<3x224x256xbf16, #tpu.memory_space<vmem>>, vector<1x224x256xbf16>
    %6 = vector.shape_cast %5 : vector<1x224x256xbf16> to vector<224x256xbf16>
    %c1_7 = arith.constant 1 : index
    %c0_8 = arith.constant 0 : index
    %c0_9 = arith.constant 0 : index
    %7 = vector.load %arg2[%c1_7, %c0_8, %c0_9] : memref<3x256x256xbf16, #tpu.memory_space<vmem>>, vector<1x256x256xbf16>
    %8 = vector.shape_cast %7 : vector<1x256x256xbf16> to vector<256x256xbf16>
    %cst_10 = arith.constant dense<0.000000e+00> : vector<224x256xf32>
    %9 = tpu.matmul %6, %8, %cst_10 {dimension_numbers = #tpu.dot_dimension_numbers<[1], [0], [0], [1], [0, 0, 1, 1], [], []>} : vector<224x256xbf16>, vector<256x256xbf16>, vector<224x256xf32> -> vector<224x256xf32>
    %10 = arith.addf %4, %9 : vector<224x256xf32>
    %c2 = arith.constant 2 : index
    %c0_11 = arith.constant 0 : index
    %c0_12 = arith.constant 0 : index
    %11 = vector.load %arg1[%c2, %c0_11, %c0_12] : memref<3x224x256xbf16, #tpu.memory_space<vmem>>, vector<1x224x256xbf16>
    %12 = vector.shape_cast %11 : vector<1x224x256xbf16> to vector<224x256xbf16>
    %c2_13 = arith.constant 2 : index
    %c0_14 = arith.constant 0 : index
    %c0_15 = arith.constant 0 : index
    %13 = vector.load %arg2[%c2_13, %c0_14, %c0_15] : memref<3x256x256xbf16, #tpu.memory_space<vmem>>, vector<1x256x256xbf16>
    %14 = vector.shape_cast %13 : vector<1x256x256xbf16> to vector<256x256xbf16>
    %cst_16 = arith.constant dense<0.000000e+00> : vector<224x256xf32>
    %15 = tpu.matmul %12, %14, %cst_16 {dimension_numbers = #tpu.dot_dimension_numbers<[1], [0], [0], [1], [0, 0, 1, 1], [], []>} : vector<224x256xbf16>, vector<256x256xbf16>, vector<224x256xf32> -> vector<224x256xf32>
    %16 = arith.addf %10, %15 : vector<224x256xf32>
    %c0_17 = arith.constant 0 : index
    %c0_18 = arith.constant 0 : index
    %17 = vector.load %arg3[%c0_17, %c0_18] : memref<1x256xf32, #tpu.memory_space<vmem>>, vector<1x256xf32>
    %18 = vector.broadcast %17 : vector<1x256xf32> to vector<224x256xf32>
    %19 = arith.addf %16, %18 : vector<224x256xf32>
    %cst_19 = arith.constant 0.000000e+00 : f32
    %20 = vector.broadcast %cst_19 : f32 to vector<224x256xf32>
    %21 = arith.maximumf %19, %20 : vector<224x256xf32>
    %22 = vector.extract_strided_slice %21 {offsets = [0, 0], sizes = [224, 128], strides = [1, 1]} : vector<224x256xf32> to vector<224x128xf32>
    %23 = vector.extract_strided_slice %21 {offsets = [0, 128], sizes = [224, 128], strides = [1, 1]} : vector<224x256xf32> to vector<224x128xf32>
    %24 = arith.maximumf %22, %23 : vector<224x128xf32>
    %25 = arith.truncf %24 : vector<224x128xf32> to vector<224x128xbf16>
    %c0_20 = arith.constant 0 : index
    %c0_21 = arith.constant 0 : index
    %26 = vector.load %arg4[%c0_20, %c0_21] : memref<112x224xbf16, #tpu.memory_space<vmem>>, vector<112x224xbf16>
    %cst_22 = arith.constant dense<0.000000e+00> : vector<112x128xf32>
    %27 = tpu.matmul %26, %25, %cst_22 {dimension_numbers = #tpu.dot_dimension_numbers<[1], [0], [0], [1], [0, 0, 1, 1], [], []>} : vector<112x224xbf16>, vector<224x128xbf16>, vector<112x128xf32> -> vector<112x128xf32>
    %c0_23 = arith.constant 0 : index
    %c0_24 = arith.constant 0 : index
    %28 = vector.load %arg5[%c0_23, %c0_24] : memref<112x224xbf16, #tpu.memory_space<vmem>>, vector<112x224xbf16>
    %cst_25 = arith.constant dense<0.000000e+00> : vector<112x128xf32>
    %29 = tpu.matmul %28, %25, %cst_25 {dimension_numbers = #tpu.dot_dimension_numbers<[1], [0], [0], [1], [0, 0, 1, 1], [], []>} : vector<112x224xbf16>, vector<224x128xbf16>, vector<112x128xf32> -> vector<112x128xf32>
    %30 = arith.maximumf %27, %29 : vector<112x128xf32>
    %31 = arith.truncf %30 : vector<112x128xf32> to vector<112x128xbf16>
    %cst_26 = arith.constant 0.000000e+00 : bf16
    %32 = vector.broadcast %cst_26 : bf16 to vector<8x128xbf16>
    %33 = tpu.concatenate %31, %32 in 0 : vector<112x128xbf16>, vector<8x128xbf16> -> vector<120x128xbf16>
    %34 = vector.extract_strided_slice %33 {offsets = [0, 0], sizes = [10, 128], strides = [1, 1]} : vector<120x128xbf16> to vector<10x128xbf16>
    %35 = vector.extract_strided_slice %33 {offsets = [14, 0], sizes = [10, 128], strides = [1, 1]} : vector<120x128xbf16> to vector<10x128xbf16>
    %36 = vector.extract_strided_slice %33 {offsets = [28, 0], sizes = [10, 128], strides = [1, 1]} : vector<120x128xbf16> to vector<10x128xbf16>
    %37 = vector.extract_strided_slice %33 {offsets = [42, 0], sizes = [10, 128], strides = [1, 1]} : vector<120x128xbf16> to vector<10x128xbf16>
    %38 = vector.extract_strided_slice %33 {offsets = [56, 0], sizes = [10, 128], strides = [1, 1]} : vector<120x128xbf16> to vector<10x128xbf16>
    %39 = vector.extract_strided_slice %33 {offsets = [70, 0], sizes = [10, 128], strides = [1, 1]} : vector<120x128xbf16> to vector<10x128xbf16>
    %40 = vector.extract_strided_slice %33 {offsets = [84, 0], sizes = [10, 128], strides = [1, 1]} : vector<120x128xbf16> to vector<10x128xbf16>
    %41 = vector.extract_strided_slice %33 {offsets = [98, 0], sizes = [10, 128], strides = [1, 1]} : vector<120x128xbf16> to vector<10x128xbf16>
    %42 = tpu.concatenate %34, %35, %36, %37, %38, %39, %40, %41 in 0 : vector<10x128xbf16>, vector<10x128xbf16>, vector<10x128xbf16>, vector<10x128xbf16>, vector<10x128xbf16>, vector<10x128xbf16>, vector<10x128xbf16>, vector<10x128xbf16> -> vector<80x128xbf16>
    %43 = vector.extract_strided_slice %33 {offsets = [1, 0], sizes = [10, 128], strides = [1, 1]} : vector<120x128xbf16> to vector<10x128xbf16>
    %44 = vector.extract_strided_slice %33 {offsets = [15, 0], sizes = [10, 128], strides = [1, 1]} : vector<120x128xbf16> to vector<10x128xbf16>
    %45 = vector.extract_strided_slice %33 {offsets = [29, 0], sizes = [10, 128], strides = [1, 1]} : vector<120x128xbf16> to vector<10x128xbf16>
    %46 = vector.extract_strided_slice %33 {offsets = [43, 0], sizes = [10, 128], strides = [1, 1]} : vector<120x128xbf16> to vector<10x128xbf16>
    %47 = vector.extract_strided_slice %33 {offsets = [57, 0], sizes = [10, 128], strides = [1, 1]} : vector<120x128xbf16> to vector<10x128xbf16>
    %48 = vector.extract_strided_slice %33 {offsets = [71, 0], sizes = [10, 128], strides = [1, 1]} : vector<120x128xbf16> to vector<10x128xbf16>
    %49 = vector.extract_strided_slice %33 {offsets = [85, 0], sizes = [10, 128], strides = [1, 1]} : vector<120x128xbf16> to vector<10x128xbf16>
    %50 = vector.extract_strided_slice %33 {offsets = [99, 0], sizes = [10, 128], strides = [1, 1]} : vector<120x128xbf16> to vector<10x128xbf16>
    %51 = tpu.concatenate %43, %44, %45, %46, %47, %48, %49, %50 in 0 : vector<10x128xbf16>, vector<10x128xbf16>, vector<10x128xbf16>, vector<10x128xbf16>, vector<10x128xbf16>, vector<10x128xbf16>, vector<10x128xbf16>, vector<10x128xbf16> -> vector<80x128xbf16>
    %52 = tpu.concatenate %42, %51 in 1 : vector<80x128xbf16>, vector<80x128xbf16> -> vector<80x256xbf16>
    %c0_27 = arith.constant 0 : index
    %c0_28 = arith.constant 0 : index
    %c0_29 = arith.constant 0 : index
    %53 = vector.load %arg6[%c0_27, %c0_28, %c0_29] : memref<3x256x256xbf16, #tpu.memory_space<vmem>>, vector<1x256x256xbf16>
    %54 = vector.shape_cast %53 : vector<1x256x256xbf16> to vector<256x256xbf16>
    %cst_30 = arith.constant dense<0.000000e+00> : vector<80x256xf32>
    %55 = tpu.matmul %52, %54, %cst_30 {dimension_numbers = #tpu.dot_dimension_numbers<[1], [0], [0], [1], [0, 0, 1, 1], [], []>} : vector<80x256xbf16>, vector<256x256xbf16>, vector<80x256xf32> -> vector<80x256xf32>
    %56 = vector.extract_strided_slice %33 {offsets = [2, 0], sizes = [10, 128], strides = [1, 1]} : vector<120x128xbf16> to vector<10x128xbf16>
    %57 = vector.extract_strided_slice %33 {offsets = [16, 0], sizes = [10, 128], strides = [1, 1]} : vector<120x128xbf16> to vector<10x128xbf16>
    %58 = vector.extract_strided_slice %33 {offsets = [30, 0], sizes = [10, 128], strides = [1, 1]} : vector<120x128xbf16> to vector<10x128xbf16>
    %59 = vector.extract_strided_slice %33 {offsets = [44, 0], sizes = [10, 128], strides = [1, 1]} : vector<120x128xbf16> to vector<10x128xbf16>
    %60 = vector.extract_strided_slice %33 {offsets = [58, 0], sizes = [10, 128], strides = [1, 1]} : vector<120x128xbf16> to vector<10x128xbf16>
    %61 = vector.extract_strided_slice %33 {offsets = [72, 0], sizes = [10, 128], strides = [1, 1]} : vector<120x128xbf16> to vector<10x128xbf16>
    %62 = vector.extract_strided_slice %33 {offsets = [86, 0], sizes = [10, 128], strides = [1, 1]} : vector<120x128xbf16> to vector<10x128xbf16>
    %63 = vector.extract_strided_slice %33 {offsets = [100, 0], sizes = [10, 128], strides = [1, 1]} : vector<120x128xbf16> to vector<10x128xbf16>
    %64 = tpu.concatenate %56, %57, %58, %59, %60, %61, %62, %63 in 0 : vector<10x128xbf16>, vector<10x128xbf16>, vector<10x128xbf16>, vector<10x128xbf16>, vector<10x128xbf16>, vector<10x128xbf16>, vector<10x128xbf16>, vector<10x128xbf16> -> vector<80x128xbf16>
    %65 = vector.extract_strided_slice %33 {offsets = [3, 0], sizes = [10, 128], strides = [1, 1]} : vector<120x128xbf16> to vector<10x128xbf16>
    %66 = vector.extract_strided_slice %33 {offsets = [17, 0], sizes = [10, 128], strides = [1, 1]} : vector<120x128xbf16> to vector<10x128xbf16>
    %67 = vector.extract_strided_slice %33 {offsets = [31, 0], sizes = [10, 128], strides = [1, 1]} : vector<120x128xbf16> to vector<10x128xbf16>
    %68 = vector.extract_strided_slice %33 {offsets = [45, 0], sizes = [10, 128], strides = [1, 1]} : vector<120x128xbf16> to vector<10x128xbf16>
    %69 = vector.extract_strided_slice %33 {offsets = [59, 0], sizes = [10, 128], strides = [1, 1]} : vector<120x128xbf16> to vector<10x128xbf16>
    %70 = vector.extract_strided_slice %33 {offsets = [73, 0], sizes = [10, 128], strides = [1, 1]} : vector<120x128xbf16> to vector<10x128xbf16>
    %71 = vector.extract_strided_slice %33 {offsets = [87, 0], sizes = [10, 128], strides = [1, 1]} : vector<120x128xbf16> to vector<10x128xbf16>
    %72 = vector.extract_strided_slice %33 {offsets = [101, 0], sizes = [10, 128], strides = [1, 1]} : vector<120x128xbf16> to vector<10x128xbf16>
    %73 = tpu.concatenate %65, %66, %67, %68, %69, %70, %71, %72 in 0 : vector<10x128xbf16>, vector<10x128xbf16>, vector<10x128xbf16>, vector<10x128xbf16>, vector<10x128xbf16>, vector<10x128xbf16>, vector<10x128xbf16>, vector<10x128xbf16> -> vector<80x128xbf16>
    %74 = tpu.concatenate %64, %73 in 1 : vector<80x128xbf16>, vector<80x128xbf16> -> vector<80x256xbf16>
    %c1_31 = arith.constant 1 : index
    %c0_32 = arith.constant 0 : index
    %c0_33 = arith.constant 0 : index
    %75 = vector.load %arg6[%c1_31, %c0_32, %c0_33] : memref<3x256x256xbf16, #tpu.memory_space<vmem>>, vector<1x256x256xbf16>
    %76 = vector.shape_cast %75 : vector<1x256x256xbf16> to vector<256x256xbf16>
    %cst_34 = arith.constant dense<0.000000e+00> : vector<80x256xf32>
    %77 = tpu.matmul %74, %76, %cst_34 {dimension_numbers = #tpu.dot_dimension_numbers<[1], [0], [0], [1], [0, 0, 1, 1], [], []>} : vector<80x256xbf16>, vector<256x256xbf16>, vector<80x256xf32> -> vector<80x256xf32>
    %78 = arith.addf %55, %77 : vector<80x256xf32>
    %79 = vector.extract_strided_slice %33 {offsets = [4, 0], sizes = [10, 128], strides = [1, 1]} : vector<120x128xbf16> to vector<10x128xbf16>
    %80 = vector.extract_strided_slice %33 {offsets = [18, 0], sizes = [10, 128], strides = [1, 1]} : vector<120x128xbf16> to vector<10x128xbf16>
    %81 = vector.extract_strided_slice %33 {offsets = [32, 0], sizes = [10, 128], strides = [1, 1]} : vector<120x128xbf16> to vector<10x128xbf16>
    %82 = vector.extract_strided_slice %33 {offsets = [46, 0], sizes = [10, 128], strides = [1, 1]} : vector<120x128xbf16> to vector<10x128xbf16>
    %83 = vector.extract_strided_slice %33 {offsets = [60, 0], sizes = [10, 128], strides = [1, 1]} : vector<120x128xbf16> to vector<10x128xbf16>
    %84 = vector.extract_strided_slice %33 {offsets = [74, 0], sizes = [10, 128], strides = [1, 1]} : vector<120x128xbf16> to vector<10x128xbf16>
    %85 = vector.extract_strided_slice %33 {offsets = [88, 0], sizes = [10, 128], strides = [1, 1]} : vector<120x128xbf16> to vector<10x128xbf16>
    %86 = vector.extract_strided_slice %33 {offsets = [102, 0], sizes = [10, 128], strides = [1, 1]} : vector<120x128xbf16> to vector<10x128xbf16>
    %87 = tpu.concatenate %79, %80, %81, %82, %83, %84, %85, %86 in 0 : vector<10x128xbf16>, vector<10x128xbf16>, vector<10x128xbf16>, vector<10x128xbf16>, vector<10x128xbf16>, vector<10x128xbf16>, vector<10x128xbf16>, vector<10x128xbf16> -> vector<80x128xbf16>
    %88 = vector.extract_strided_slice %33 {offsets = [5, 0], sizes = [10, 128], strides = [1, 1]} : vector<120x128xbf16> to vector<10x128xbf16>
    %89 = vector.extract_strided_slice %33 {offsets = [19, 0], sizes = [10, 128], strides = [1, 1]} : vector<120x128xbf16> to vector<10x128xbf16>
    %90 = vector.extract_strided_slice %33 {offsets = [33, 0], sizes = [10, 128], strides = [1, 1]} : vector<120x128xbf16> to vector<10x128xbf16>
    %91 = vector.extract_strided_slice %33 {offsets = [47, 0], sizes = [10, 128], strides = [1, 1]} : vector<120x128xbf16> to vector<10x128xbf16>
    %92 = vector.extract_strided_slice %33 {offsets = [61, 0], sizes = [10, 128], strides = [1, 1]} : vector<120x128xbf16> to vector<10x128xbf16>
    %93 = vector.extract_strided_slice %33 {offsets = [75, 0], sizes = [10, 128], strides = [1, 1]} : vector<120x128xbf16> to vector<10x128xbf16>
    %94 = vector.extract_strided_slice %33 {offsets = [89, 0], sizes = [10, 128], strides = [1, 1]} : vector<120x128xbf16> to vector<10x128xbf16>
    %95 = vector.extract_strided_slice %33 {offsets = [103, 0], sizes = [10, 128], strides = [1, 1]} : vector<120x128xbf16> to vector<10x128xbf16>
    %96 = tpu.concatenate %88, %89, %90, %91, %92, %93, %94, %95 in 0 : vector<10x128xbf16>, vector<10x128xbf16>, vector<10x128xbf16>, vector<10x128xbf16>, vector<10x128xbf16>, vector<10x128xbf16>, vector<10x128xbf16>, vector<10x128xbf16> -> vector<80x128xbf16>
    %97 = tpu.concatenate %87, %96 in 1 : vector<80x128xbf16>, vector<80x128xbf16> -> vector<80x256xbf16>
    %c2_35 = arith.constant 2 : index
    %c0_36 = arith.constant 0 : index
    %c0_37 = arith.constant 0 : index
    %98 = vector.load %arg6[%c2_35, %c0_36, %c0_37] : memref<3x256x256xbf16, #tpu.memory_space<vmem>>, vector<1x256x256xbf16>
    %99 = vector.shape_cast %98 : vector<1x256x256xbf16> to vector<256x256xbf16>
    %cst_38 = arith.constant dense<0.000000e+00> : vector<80x256xf32>
    %100 = tpu.matmul %97, %99, %cst_38 {dimension_numbers = #tpu.dot_dimension_numbers<[1], [0], [0], [1], [0, 0, 1, 1], [], []>} : vector<80x256xbf16>, vector<256x256xbf16>, vector<80x256xf32> -> vector<80x256xf32>
    %101 = arith.addf %78, %100 : vector<80x256xf32>
    %c0_39 = arith.constant 0 : index
    %c0_40 = arith.constant 0 : index
    %102 = vector.load %arg7[%c0_39, %c0_40] : memref<1x256xf32, #tpu.memory_space<vmem>>, vector<1x256xf32>
    %103 = vector.broadcast %102 : vector<1x256xf32> to vector<80x256xf32>
    %104 = arith.addf %101, %103 : vector<80x256xf32>
    %cst_41 = arith.constant 0.000000e+00 : f32
    %105 = vector.broadcast %cst_41 : f32 to vector<80x256xf32>
    %106 = arith.maximumf %104, %105 : vector<80x256xf32>
    %107 = vector.extract_strided_slice %106 {offsets = [0, 0], sizes = [80, 128], strides = [1, 1]} : vector<80x256xf32> to vector<80x128xf32>
    %108 = vector.extract_strided_slice %106 {offsets = [0, 128], sizes = [80, 128], strides = [1, 1]} : vector<80x256xf32> to vector<80x128xf32>
    %109 = arith.maximumf %107, %108 : vector<80x128xf32>
    %110 = arith.truncf %109 : vector<80x128xf32> to vector<80x128xbf16>
    %c0_42 = arith.constant 0 : index
    %c0_43 = arith.constant 0 : index
    %111 = vector.load %arg8[%c0_42, %c0_43] : memref<40x80xbf16, #tpu.memory_space<vmem>>, vector<40x80xbf16>
    %cst_44 = arith.constant dense<0.000000e+00> : vector<40x128xf32>
    %112 = tpu.matmul %111, %110, %cst_44 {dimension_numbers = #tpu.dot_dimension_numbers<[1], [0], [0], [1], [0, 0, 1, 1], [], []>} : vector<40x80xbf16>, vector<80x128xbf16>, vector<40x128xf32> -> vector<40x128xf32>
    %c0_45 = arith.constant 0 : index
    %c0_46 = arith.constant 0 : index
    %113 = vector.load %arg9[%c0_45, %c0_46] : memref<40x80xbf16, #tpu.memory_space<vmem>>, vector<40x80xbf16>
    %cst_47 = arith.constant dense<0.000000e+00> : vector<40x128xf32>
    %114 = tpu.matmul %113, %110, %cst_47 {dimension_numbers = #tpu.dot_dimension_numbers<[1], [0], [0], [1], [0, 0, 1, 1], [], []>} : vector<40x80xbf16>, vector<80x128xbf16>, vector<40x128xf32> -> vector<40x128xf32>
    %115 = arith.maximumf %112, %114 : vector<40x128xf32>
    %116 = arith.truncf %115 : vector<40x128xf32> to vector<40x128xbf16>
    %117 = vector.extract_strided_slice %116 {offsets = [0, 0], sizes = [8, 128], strides = [1, 1]} : vector<40x128xbf16> to vector<8x128xbf16>
    %c0_48 = arith.constant 0 : index
    %c0_49 = arith.constant 0 : index
    %c0_50 = arith.constant 0 : index
    %118 = vector.load %arg10[%c0_48, %c0_49, %c0_50] : memref<5x128x128xbf16, #tpu.memory_space<vmem>>, vector<1x128x128xbf16>
    %119 = vector.shape_cast %118 : vector<1x128x128xbf16> to vector<128x128xbf16>
    %cst_51 = arith.constant dense<0.000000e+00> : vector<8x128xf32>
    %120 = tpu.matmul %117, %119, %cst_51 {dimension_numbers = #tpu.dot_dimension_numbers<[1], [0], [0], [1], [0, 0, 1, 1], [], []>} : vector<8x128xbf16>, vector<128x128xbf16>, vector<8x128xf32> -> vector<8x128xf32>
    %121 = vector.extract_strided_slice %116 {offsets = [8, 0], sizes = [8, 128], strides = [1, 1]} : vector<40x128xbf16> to vector<8x128xbf16>
    %c1_52 = arith.constant 1 : index
    %c0_53 = arith.constant 0 : index
    %c0_54 = arith.constant 0 : index
    %122 = vector.load %arg10[%c1_52, %c0_53, %c0_54] : memref<5x128x128xbf16, #tpu.memory_space<vmem>>, vector<1x128x128xbf16>
    %123 = vector.shape_cast %122 : vector<1x128x128xbf16> to vector<128x128xbf16>
    %cst_55 = arith.constant dense<0.000000e+00> : vector<8x128xf32>
    %124 = tpu.matmul %121, %123, %cst_55 {dimension_numbers = #tpu.dot_dimension_numbers<[1], [0], [0], [1], [0, 0, 1, 1], [], []>} : vector<8x128xbf16>, vector<128x128xbf16>, vector<8x128xf32> -> vector<8x128xf32>
    %125 = arith.addf %120, %124 : vector<8x128xf32>
    %126 = vector.extract_strided_slice %116 {offsets = [16, 0], sizes = [8, 128], strides = [1, 1]} : vector<40x128xbf16> to vector<8x128xbf16>
    %c2_56 = arith.constant 2 : index
    %c0_57 = arith.constant 0 : index
    %c0_58 = arith.constant 0 : index
    %127 = vector.load %arg10[%c2_56, %c0_57, %c0_58] : memref<5x128x128xbf16, #tpu.memory_space<vmem>>, vector<1x128x128xbf16>
    %128 = vector.shape_cast %127 : vector<1x128x128xbf16> to vector<128x128xbf16>
    %cst_59 = arith.constant dense<0.000000e+00> : vector<8x128xf32>
    %129 = tpu.matmul %126, %128, %cst_59 {dimension_numbers = #tpu.dot_dimension_numbers<[1], [0], [0], [1], [0, 0, 1, 1], [], []>} : vector<8x128xbf16>, vector<128x128xbf16>, vector<8x128xf32> -> vector<8x128xf32>
    %130 = arith.addf %125, %129 : vector<8x128xf32>
    %131 = vector.extract_strided_slice %116 {offsets = [24, 0], sizes = [8, 128], strides = [1, 1]} : vector<40x128xbf16> to vector<8x128xbf16>
    %c3 = arith.constant 3 : index
    %c0_60 = arith.constant 0 : index
    %c0_61 = arith.constant 0 : index
    %132 = vector.load %arg10[%c3, %c0_60, %c0_61] : memref<5x128x128xbf16, #tpu.memory_space<vmem>>, vector<1x128x128xbf16>
    %133 = vector.shape_cast %132 : vector<1x128x128xbf16> to vector<128x128xbf16>
    %cst_62 = arith.constant dense<0.000000e+00> : vector<8x128xf32>
    %134 = tpu.matmul %131, %133, %cst_62 {dimension_numbers = #tpu.dot_dimension_numbers<[1], [0], [0], [1], [0, 0, 1, 1], [], []>} : vector<8x128xbf16>, vector<128x128xbf16>, vector<8x128xf32> -> vector<8x128xf32>
    %135 = arith.addf %130, %134 : vector<8x128xf32>
    %136 = vector.extract_strided_slice %116 {offsets = [32, 0], sizes = [8, 128], strides = [1, 1]} : vector<40x128xbf16> to vector<8x128xbf16>
    %c4 = arith.constant 4 : index
    %c0_63 = arith.constant 0 : index
    %c0_64 = arith.constant 0 : index
    %137 = vector.load %arg10[%c4, %c0_63, %c0_64] : memref<5x128x128xbf16, #tpu.memory_space<vmem>>, vector<1x128x128xbf16>
    %138 = vector.shape_cast %137 : vector<1x128x128xbf16> to vector<128x128xbf16>
    %cst_65 = arith.constant dense<0.000000e+00> : vector<8x128xf32>
    %139 = tpu.matmul %136, %138, %cst_65 {dimension_numbers = #tpu.dot_dimension_numbers<[1], [0], [0], [1], [0, 0, 1, 1], [], []>} : vector<8x128xbf16>, vector<128x128xbf16>, vector<8x128xf32> -> vector<8x128xf32>
    %140 = arith.addf %135, %139 : vector<8x128xf32>
    %c0_66 = arith.constant 0 : index
    %c0_67 = arith.constant 0 : index
    %141 = vector.load %arg11[%c0_66, %c0_67] : memref<1x128xf32, #tpu.memory_space<vmem>>, vector<1x128xf32>
    %142 = vector.broadcast %141 : vector<1x128xf32> to vector<8x128xf32>
    %143 = arith.addf %140, %142 : vector<8x128xf32>
    %cst_68 = arith.constant 0.000000e+00 : f32
    %144 = vector.broadcast %cst_68 : f32 to vector<8x128xf32>
    %145 = arith.maximumf %143, %144 : vector<8x128xf32>
    %146 = arith.truncf %145 : vector<8x128xf32> to vector<8x128xbf16>
    %c0_69 = arith.constant 0 : index
    %c0_70 = arith.constant 0 : index
    %147 = vector.load %arg12[%c0_69, %c0_70] : memref<128x128xbf16, #tpu.memory_space<vmem>>, vector<128x128xbf16>
    %cst_71 = arith.constant dense<0.000000e+00> : vector<8x128xf32>
    %148 = tpu.matmul %146, %147, %cst_71 {dimension_numbers = #tpu.dot_dimension_numbers<[1], [0], [0], [1], [0, 0, 1, 1], [], []>} : vector<8x128xbf16>, vector<128x128xbf16>, vector<8x128xf32> -> vector<8x128xf32>
    %c0_72 = arith.constant 0 : index
    %c0_73 = arith.constant 0 : index
    %149 = vector.load %arg13[%c0_72, %c0_73] : memref<1x128xf32, #tpu.memory_space<vmem>>, vector<1x128xf32>
    %150 = vector.broadcast %149 : vector<1x128xf32> to vector<8x128xf32>
    %151 = arith.addf %148, %150 : vector<8x128xf32>
    %cst_74 = arith.constant 0.000000e+00 : f32
    %152 = vector.broadcast %cst_74 : f32 to vector<8x128xf32>
    %153 = arith.maximumf %151, %152 : vector<8x128xf32>
    %154 = arith.truncf %153 : vector<8x128xf32> to vector<8x128xbf16>
    %c0_75 = arith.constant 0 : index
    %c0_76 = arith.constant 0 : index
    %155 = vector.load %arg14[%c0_75, %c0_76] : memref<128x128xbf16, #tpu.memory_space<vmem>>, vector<128x128xbf16>
    %cst_77 = arith.constant dense<0.000000e+00> : vector<8x128xf32>
    %156 = tpu.matmul %154, %155, %cst_77 {dimension_numbers = #tpu.dot_dimension_numbers<[1], [0], [0], [1], [0, 0, 1, 1], [], []>} : vector<8x128xbf16>, vector<128x128xbf16>, vector<8x128xf32> -> vector<8x128xf32>
    %c0_78 = arith.constant 0 : index
    %c0_79 = arith.constant 0 : index
    %157 = vector.load %arg15[%c0_78, %c0_79] : memref<1x128xf32, #tpu.memory_space<vmem>>, vector<1x128xf32>
    %158 = vector.broadcast %157 : vector<1x128xf32> to vector<8x128xf32>
    %159 = arith.addf %156, %158 : vector<8x128xf32>
    %c0_80 = arith.constant 0 : index
    %c0_81 = arith.constant 0 : index
    %160 = vector.load %arg16[%c0_80, %c0_81] : memref<8x128xf32, #tpu.memory_space<vmem>>, vector<8x128xf32>
    tpu.vector_store %arg16[%c0_80, %c0_81], %159 {strides = array<i32>} : memref<8x128xf32, #tpu.memory_space<vmem>>, vector<8x128xf32>,
    return
  }
  func.func @transform_0(%arg0: i32) -> (i32, i32, i32) {
    %c0_i32 = arith.constant 0 : i32
    %c0_i32_0 = arith.constant 0 : i32
    %c0_i32_1 = arith.constant 0 : i32
    return %c0_i32, %arg0, %c0_i32_0 : i32, i32, i32
  }
  func.func @transform_1(%arg0: i32) -> (i32, i32, i32) {
    %c0_i32 = arith.constant 0 : i32
    %c0_i32_0 = arith.constant 0 : i32
    %c0_i32_1 = arith.constant 0 : i32
    %c0_i32_2 = arith.constant 0 : i32
    return %c0_i32, %c0_i32_0, %c0_i32_1 : i32, i32, i32
  }
  func.func @transform_2(%arg0: i32) -> (i32, i32) {
    %c0_i32 = arith.constant 0 : i32
    %c0_i32_0 = arith.constant 0 : i32
    %c0_i32_1 = arith.constant 0 : i32
    return %c0_i32, %c0_i32_0 : i32, i32
  }
  func.func @transform_3(%arg0: i32) -> (i32, i32) {
    %c0_i32 = arith.constant 0 : i32
    %c0_i32_0 = arith.constant 0 : i32
    %c0_i32_1 = arith.constant 0 : i32
    return %c0_i32, %c0_i32_0 : i32, i32
  }
  func.func @transform_4(%arg0: i32) -> (i32, i32) {
    %c0_i32 = arith.constant 0 : i32
    %c0_i32_0 = arith.constant 0 : i32
    %c0_i32_1 = arith.constant 0 : i32
    return %c0_i32, %c0_i32_0 : i32, i32
  }
  func.func @transform_5(%arg0: i32) -> (i32, i32, i32) {
    %c0_i32 = arith.constant 0 : i32
    %c0_i32_0 = arith.constant 0 : i32
    %c0_i32_1 = arith.constant 0 : i32
    %c0_i32_2 = arith.constant 0 : i32
    return %c0_i32, %c0_i32_0, %c0_i32_1 : i32, i32, i32
  }
  func.func @transform_6(%arg0: i32) -> (i32, i32) {
    %c0_i32 = arith.constant 0 : i32
    %c0_i32_0 = arith.constant 0 : i32
    %c0_i32_1 = arith.constant 0 : i32
    return %c0_i32, %c0_i32_0 : i32, i32
  }
  func.func @transform_7(%arg0: i32) -> (i32, i32) {
    %c0_i32 = arith.constant 0 : i32
    %c0_i32_0 = arith.constant 0 : i32
    %c0_i32_1 = arith.constant 0 : i32
    return %c0_i32, %c0_i32_0 : i32, i32
  }
  func.func @transform_8(%arg0: i32) -> (i32, i32) {
    %c0_i32 = arith.constant 0 : i32
    %c0_i32_0 = arith.constant 0 : i32
    %c0_i32_1 = arith.constant 0 : i32
    return %c0_i32, %c0_i32_0 : i32, i32
  }
  func.func @transform_9(%arg0: i32) -> (i32, i32, i32) {
    %c0_i32 = arith.constant 0 : i32
    %c0_i32_0 = arith.constant 0 : i32
    %c0_i32_1 = arith.constant 0 : i32
    %c0_i32_2 = arith.constant 0 : i32
    return %c0_i32, %c0_i32_0, %c0_i32_1 : i32, i32, i32
  }
  func.func @transform_10(%arg0: i32) -> (i32, i32) {
    %c0_i32 = arith.constant 0 : i32
    %c0_i32_0 = arith.constant 0 : i32
    %c0_i32_1 = arith.constant 0 : i32
    return %c0_i32, %c0_i32_0 : i32, i32
  }
  func.func @transform_11(%arg0: i32) -> (i32, i32) {
    %c0_i32 = arith.constant 0 : i32
    %c0_i32_0 = arith.constant 0 : i32
    %c0_i32_1 = arith.constant 0 : i32
    return %c0_i32, %c0_i32_0 : i32, i32
  }
  func.func @transform_12(%arg0: i32) -> (i32, i32) {
    %c0_i32 = arith.constant 0 : i32
    %c0_i32_0 = arith.constant 0 : i32
    %c0_i32_1 = arith.constant 0 : i32
    return %c0_i32, %c0_i32_0 : i32, i32
  }
  func.func @transform_13(%arg0: i32) -> (i32, i32) {
    %c0_i32 = arith.constant 0 : i32
    %c0_i32_0 = arith.constant 0 : i32
    %c0_i32_1 = arith.constant 0 : i32
    return %c0_i32, %c0_i32_0 : i32, i32
  }
  func.func @transform_14(%arg0: i32) -> (i32, i32) {
    %c0_i32 = arith.constant 0 : i32
    %c0_i32_0 = arith.constant 0 : i32
    %c0_i32_1 = arith.constant 0 : i32
    return %c0_i32, %c0_i32_0 : i32, i32
  }
  func.func @transform_15(%arg0: i32) -> (i32, i32) {
    %c0_i32 = arith.constant 0 : i32
    %c0_i32_0 = arith.constant 0 : i32
    return %arg0, %c0_i32 : i32, i32
  }
}

</mosaic_0001>

<llo_original>
// kernel: net_forward.1
$region0: #{net_forward.1}
  #allocation0 [shape = 'u32[]', space=smem, size = 0x4, offset = 0x4, fixed_abs, tag = 'smem constant byte address 0x4 - core index']
  #allocation1 [shape = 'u32[144,128]{1,0:T(1,128)}', space=vmem, size = 0x12000, scoped, tag = 'internal scratch']
  %s0 = inlined_call_operand.vmem [shape: bf16[3,224,256], index: 0, kind: input, shape index: {}]
  %s1 = inlined_call_operand.vmem [shape: bf16[3,256,256], index: 1, kind: input, shape index: {}]
  %s2 = inlined_call_operand.vmem [shape: f32[1,256], index: 2, kind: input, shape index: {}]
  %s3 = inlined_call_operand.vmem [shape: bf16[112,224], index: 3, kind: input, shape index: {}]
  %s4 = inlined_call_operand.vmem [shape: bf16[112,224], index: 4, kind: input, shape index: {}]
  %s5 = inlined_call_operand.vmem [shape: bf16[3,256,256], index: 5, kind: input, shape index: {}]
  %s6 = inlined_call_operand.vmem [shape: f32[1,256], index: 6, kind: input, shape index: {}]
  %s7 = inlined_call_operand.vmem [shape: bf16[40,80], index: 7, kind: input, shape index: {}]
  %s8 = inlined_call_operand.vmem [shape: bf16[40,80], index: 8, kind: input, shape index: {}]
  %s9 = inlined_call_operand.vmem [shape: bf16[5,128,128], index: 9, kind: input, shape index: {}]
  %s10 = inlined_call_operand.vmem [shape: f32[1,128], index: 10, kind: input, shape index: {}]
  %s11 = inlined_call_operand.vmem [shape: bf16[128,128], index: 11, kind: input, shape index: {}]
  %s12 = inlined_call_operand.vmem [shape: f32[1,128], index: 12, kind: input, shape index: {}]
  %s13 = inlined_call_operand.vmem [shape: bf16[128,128], index: 13, kind: input, shape index: {}]
  %s14 = inlined_call_operand.vmem [shape: f32[1,128], index: 14, kind: input, shape index: {}]
  %s15 = inlined_call_operand.vmem [shape: f32[8,128], index: 15, kind: output, shape index: {}]
  %s16 = sld [smem:[#allocation0]]
  $region70: #{net_forward.1} parent=0
    _
  %s18 = ssub.s32 1, %s16
  %s19 = scalar_select 0, %s18, %s16
  // Predicated region
  $region2: #{net_forward.1} parent=0 // pred_check
    _
  $region3: #{net_forward.1} parent=0 // pred_check_branch
    %21 = sbr.rel (0) target = $region5
  $region4: #{net_forward.1} parent=0 // pred_region
    _
  $region5: #{net_forward.1} parent=0 // pred_fallthru
    _
  // Predicated region
  $region6: #{net_forward.1} parent=0 // pred_check
    _
  $region7: #{net_forward.1} parent=0 // pred_check_branch
    %23 = sbr.rel (0) target = $region9
  $region8: #{net_forward.1} parent=0 // pred_region
    _
  $region9: #{net_forward.1} parent=0 // pred_fallthru
    _
  // Predicated region
  $region10: #{net_forward.1} parent=0 // pred_check
    _
  $region11: #{net_forward.1} parent=0 // pred_check_branch
    %25 = sbr.rel (0) target = $region13
  $region12: #{net_forward.1} parent=0 // pred_region
    _
  $region13: #{net_forward.1} parent=0 // pred_fallthru
    _
  // Predicated region
  $region14: #{net_forward.1} parent=0 // pred_check
    _
  $region15: #{net_forward.1} parent=0 // pred_check_branch
    %27 = sbr.rel (0) target = $region17
  $region16: #{net_forward.1} parent=0 // pred_region
    _
  $region17: #{net_forward.1} parent=0 // pred_fallthru
    _
  // Predicated region
  $region18: #{net_forward.1} parent=0 // pred_check
    _
  $region19: #{net_forward.1} parent=0 // pred_check_branch
    %29 = sbr.rel (0) target = $region21
  $region20: #{net_forward.1} parent=0 // pred_region
    _
  $region21: #{net_forward.1} parent=0 // pred_fallthru
    _
  // Predicated region
  $region22: #{net_forward.1} parent=0 // pred_check
    _
  $region23: #{net_forward.1} parent=0 // pred_check_branch
    %31 = sbr.rel (0) target = $region25
  $region24: #{net_forward.1} parent=0 // pred_region
    _
  $region25: #{net_forward.1} parent=0 // pred_fallthru
    _
  // Predicated region
  $region26: #{net_forward.1} parent=0 // pred_check
    _
  $region27: #{net_forward.1} parent=0 // pred_check_branch
    %33 = sbr.rel (0) target = $region29
  $region28: #{net_forward.1} parent=0 // pred_region
    _
  $region29: #{net_forward.1} parent=0 // pred_fallthru
    _
  // Predicated region
  $region30: #{net_forward.1} parent=0 // pred_check
    _
  $region31: #{net_forward.1} parent=0 // pred_check_branch
    %35 = sbr.rel (0) target = $region33
  $region32: #{net_forward.1} parent=0 // pred_region
    _
  $region33: #{net_forward.1} parent=0 // pred_fallthru
    _
  // Predicated region
  $region34: #{net_forward.1} parent=0 // pred_check
    _
  $region35: #{net_forward.1} parent=0 // pred_check_branch
    %37 = sbr.rel (0) target = $region37
  $region36: #{net_forward.1} parent=0 // pred_region
    _
  $region37: #{net_forward.1} parent=0 // pred_fallthru
    _
  // Predicated region
  $region38: #{net_forward.1} parent=0 // pred_check
    _
  $region39: #{net_forward.1} parent=0 // pred_check_branch
    %39 = sbr.rel (0) target = $region41
  $region40: #{net_forward.1} parent=0 // pred_region
    _
  $region41: #{net_forward.1} parent=0 // pred_fallthru
    _
  // Predicated region
  $region42: #{net_forward.1} parent=0 // pred_check
    _
  $region43: #{net_forward.1} parent=0 // pred_check_branch
    %41 = sbr.rel (0) target = $region45
  $region44: #{net_forward.1} parent=0 // pred_region
    _
  $region45: #{net_forward.1} parent=0 // pred_fallthru
    _
  // Predicated region
  $region46: #{net_forward.1} parent=0 // pred_check
    _
  $region47: #{net_forward.1} parent=0 // pred_check_branch
    %43 = sbr.rel (0) target = $region49
  $region48: #{net_forward.1} parent=0 // pred_region
    _
  $region49: #{net_forward.1} parent=0 // pred_fallthru
    _
  // Predicated region
  $region50: #{net_forward.1} parent=0 // pred_check
    _
  $region51: #{net_forward.1} parent=0 // pred_check_branch
    %45 = sbr.rel (0) target = $region53
  $region52: #{net_forward.1} parent=0 // pred_region
    _
  $region53: #{net_forward.1} parent=0 // pred_fallthru
    _
  // Predicated region
  $region54: #{net_forward.1} parent=0 // pred_check
    _
  $region55: #{net_forward.1} parent=0 // pred_check_branch
    %47 = sbr.rel (0) target = $region57
  $region56: #{net_forward.1} parent=0 // pred_region
    _
  $region57: #{net_forward.1} parent=0 // pred_fallthru
    _
  // Predicated region
  $region58: #{net_forward.1} parent=0 // pred_check
    _
  $region59: #{net_forward.1} parent=0 // pred_check_branch
    %49 = sbr.rel (0) target = $region61
  $region60: #{net_forward.1} parent=0 // pred_region
    _
  $region61: #{net_forward.1} parent=0 // pred_fallthru
    _
  %v51 = vld [vmem:[%s0] sm:$0xff]
  %v52 = vld [vmem:[%s0 + $0x8] sm:$0xff]
  %v53 = vld [vmem:[%s0 + $0x10] sm:$0xff]
  %v54 = vld [vmem:[%s0 + $0x18] sm:$0xff]
  %v55 = vld [vmem:[%s0 + $0x20] sm:$0xff]
  %v56 = vld [vmem:[%s0 + $0x28] sm:$0xff]
  %v57 = vld [vmem:[%s0 + $0x30] sm:$0xff]
  %v58 = vld [vmem:[%s0 + $0x38] sm:$0xff]
  %v59 = vld [vmem:[%s0 + $0x40] sm:$0xff]
  %v60 = vld [vmem:[%s0 + $0x48] sm:$0xff]
  %v61 = vld [vmem:[%s0 + $0x50] sm:$0xff]
  %v62 = vld [vmem:[%s0 + $0x58] sm:$0xff]
  %v63 = vld [vmem:[%s0 + $0x60] sm:$0xff]
  %v64 = vld [vmem:[%s0 + $0x68] sm:$0xff]
  %v65 = vld [vmem:[%s0 + $0x70] sm:$0xff]
  %v66 = vld [vmem:[%s0 + $0x78] sm:$0xff]
  %v67 = vld [vmem:[%s0 + $0x80] sm:$0xff]
  %v68 = vld [vmem:[%s0 + $0x88] sm:$0xff]
  %v69 = vld [vmem:[%s0 + $0x90] sm:$0xff]
  %v70 = vld [vmem:[%s0 + $0x98] sm:$0xff]
  %v71 = vld [vmem:[%s0 + $0xa0] sm:$0xff]
  %v72 = vld [vmem:[%s0 + $0xa8] sm:$0xff]
  %v73 = vld [vmem:[%s0 + $0xb0] sm:$0xff]
  %v74 = vld [vmem:[%s0 + $0xb8] sm:$0xff]
  %v75 = vld [vmem:[%s0 + $0xc0] sm:$0xff]
  %v76 = vld [vmem:[%s0 + $0xc8] sm:$0xff]
  %v77 = vld [vmem:[%s0 + $0xd0] sm:$0xff]
  %v78 = vld [vmem:[%s0 + $0xd8] sm:$0xff]
  %v79 = vld [vmem:[%s1] sm:$0xff]
  %v80 = vld [vmem:[%s1 + $0x8] sm:$0xff]
  %v81 = vld [vmem:[%s1 + $0x10] sm:$0xff]
  %v82 = vld [vmem:[%s1 + $0x18] sm:$0xff]
  %v83 = vld [vmem:[%s1 + $0x20] sm:$0xff]
  %v84 = vld [vmem:[%s1 + $0x28] sm:$0xff]
  %v85 = vld [vmem:[%s1 + $0x30] sm:$0xff]
  %v86 = vld [vmem:[%s1 + $0x38] sm:$0xff]
  %v87 = vld [vmem:[%s1 + $0x40] sm:$0xff]
  %v88 = vld [vmem:[%s1 + $0x48] sm:$0xff]
  %v89 = vld [vmem:[%s1 + $0x50] sm:$0xff]
  %v90 = vld [vmem:[%s1 + $0x58] sm:$0xff]
  %v91 = vld [vmem:[%s1 + $0x60] sm:$0xff]
  %v92 = vld [vmem:[%s1 + $0x68] sm:$0xff]
  %v93 = vld [vmem:[%s1 + $0x70] sm:$0xff]
  %v94 = vld [vmem:[%s1 + $0x78] sm:$0xff]
  %v95 = vld [vmem:[%s1 + $0x80] sm:$0xff]
  %v96 = vld [vmem:[%s1 + $0x88] sm:$0xff]
  %v97 = vld [vmem:[%s1 + $0x90] sm:$0xff]
  %v98 = vld [vmem:[%s1 + $0x98] sm:$0xff]
  %v99 = vld [vmem:[%s1 + $0xa0] sm:$0xff]
  %v100 = vld [vmem:[%s1 + $0xa8] sm:$0xff]
  %v101 = vld [vmem:[%s1 + $0xb0] sm:$0xff]
  %v102 = vld [vmem:[%s1 + $0xb8] sm:$0xff]
  %v103 = vld [vmem:[%s1 + $0xc0] sm:$0xff]
  %v104 = vld [vmem:[%s1 + $0xc8] sm:$0xff]
  %v105 = vld [vmem:[%s1 + $0xd0] sm:$0xff]
  %v106 = vld [vmem:[%s1 + $0xd8] sm:$0xff]
  %v107 = vld [vmem:[%s1 + $0xe0] sm:$0xff]
  %v108 = vld [vmem:[%s1 + $0xe8] sm:$0xff]
  %v109 = vld [vmem:[%s1 + $0xf0] sm:$0xff]
  %v110 = vld [vmem:[%s1 + $0xf8] sm:$0xff]
  %s111 = scalar_lea.vmem %s0, 224
  %v112 = vld [vmem:[%s111] sm:$0xff]
  %v113 = vld [vmem:[%s111 + $0x8] sm:$0xff]
  %v114 = vld [vmem:[%s111 + $0x10] sm:$0xff]
  %v115 = vld [vmem:[%s111 + $0x18] sm:$0xff]
  %v116 = vld [vmem:[%s111 + $0x20] sm:$0xff]
  %v117 = vld [vmem:[%s111 + $0x28] sm:$0xff]
  %v118 = vld [vmem:[%s111 + $0x30] sm:$0xff]
  %v119 = vld [vmem:[%s111 + $0x38] sm:$0xff]
  %v120 = vld [vmem:[%s111 + $0x40] sm:$0xff]
  %v121 = vld [vmem:[%s111 + $0x48] sm:$0xff]
  %v122 = vld [vmem:[%s111 + $0x50] sm:$0xff]
  %v123 = vld [vmem:[%s111 + $0x58] sm:$0xff]
  %v124 = vld [vmem:[%s111 + $0x60] sm:$0xff]
  %v125 = vld [vmem:[%s111 + $0x68] sm:$0xff]
  %v126 = vld [vmem:[%s111 + $0x70] sm:$0xff]
  %v127 = vld [vmem:[%s111 + $0x78] sm:$0xff]
  %v128 = vld [vmem:[%s111 + $0x80] sm:$0xff]
  %v129 = vld [vmem:[%s111 + $0x88] sm:$0xff]
  %v130 = vld [vmem:[%s111 + $0x90] sm:$0xff]
  %v131 = vld [vmem:[%s111 + $0x98] sm:$0xff]
  %v132 = vld [vmem:[%s111 + $0xa0] sm:$0xff]
  %v133 = vld [vmem:[%s111 + $0xa8] sm:$0xff]
  %v134 = vld [vmem:[%s111 + $0xb0] sm:$0xff]
  %v135 = vld [vmem:[%s111 + $0xb8] sm:$0xff]
  %v136 = vld [vmem:[%s111 + $0xc0] sm:$0xff]
  %v137 = vld [vmem:[%s111 + $0xc8] sm:$0xff]
  %v138 = vld [vmem:[%s111 + $0xd0] sm:$0xff]
  %v139 = vld [vmem:[%s111 + $0xd8] sm:$0xff]
  %s140 = scalar_lea.vmem %s1, 256
  %v141 = vld [vmem:[%s140] sm:$0xff]
  %v142 = vld [vmem:[%s140 + $0x8] sm:$0xff]
  %v143 = vld [vmem:[%s140 + $0x10] sm:$0xff]
  %v144 = vld [vmem:[%s140 + $0x18] sm:$0xff]
  %v145 = vld [vmem:[%s140 + $0x20] sm:$0xff]
  %v146 = vld [vmem:[%s140 + $0x28] sm:$0xff]
  %v147 = vld [vmem:[%s140 + $0x30] sm:$0xff]
  %v148 = vld [vmem:[%s140 + $0x38] sm:$0xff]
  %v149 = vld [vmem:[%s140 + $0x40] sm:$0xff]
  %v150 = vld [vmem:[%s140 + $0x48] sm:$0xff]
  %v151 = vld [vmem:[%s140 + $0x50] sm:$0xff]
  %v152 = vld [vmem:[%s140 + $0x58] sm:$0xff]
  %v153 = vld [vmem:[%s140 + $0x60] sm:$0xff]
  %v154 = vld [vmem:[%s140 + $0x68] sm:$0xff]
  %v155 = vld [vmem:[%s140 + $0x70] sm:$0xff]
  %v156 = vld [vmem:[%s140 + $0x78] sm:$0xff]
  %v157 = vld [vmem:[%s140 + $0x80] sm:$0xff]
  %v158 = vld [vmem:[%s140 + $0x88] sm:$0xff]
  %v159 = vld [vmem:[%s140 + $0x90] sm:$0xff]
  %v160 = vld [vmem:[%s140 + $0x98] sm:$0xff]
  %v161 = vld [vmem:[%s140 + $0xa0] sm:$0xff]
  %v162 = vld [vmem:[%s140 + $0xa8] sm:$0xff]
  %v163 = vld [vmem:[%s140 + $0xb0] sm:$0xff]
  %v164 = vld [vmem:[%s140 + $0xb8] sm:$0xff]
  %v165 = vld [vmem:[%s140 + $0xc0] sm:$0xff]
  %v166 = vld [vmem:[%s140 + $0xc8] sm:$0xff]
  %v167 = vld [vmem:[%s140 + $0xd0] sm:$0xff]
  %v168 = vld [vmem:[%s140 + $0xd8] sm:$0xff]
  %v169 = vld [vmem:[%s140 + $0xe0] sm:$0xff]
  %v170 = vld [vmem:[%s140 + $0xe8] sm:$0xff]
  %v171 = vld [vmem:[%s140 + $0xf0] sm:$0xff]
  %v172 = vld [vmem:[%s140 + $0xf8] sm:$0xff]
  %v201 = vunpack.c.l.b16 %v112
  %v202 = vunpack.c.h.b16 %v112
  %v203 = vunpack.c.l.b16 %v113
  %v204 = vunpack.c.h.b16 %v113
  %v205 = vunpack.c.l.b16 %v114
  %v206 = vunpack.c.h.b16 %v114
  %v207 = vunpack.c.l.b16 %v115
  %v208 = vunpack.c.h.b16 %v115
  %v209 = vunpack.c.l.b16 %v116
  %v210 = vunpack.c.h.b16 %v116
  %v211 = vunpack.c.l.b16 %v117
  %v212 = vunpack.c.h.b16 %v117
  %v213 = vunpack.c.l.b16 %v118
  %v214 = vunpack.c.h.b16 %v118
  %v215 = vunpack.c.l.b16 %v119
  %v216 = vunpack.c.h.b16 %v119
  %v217 = vunpack.c.l.b16 %v120
  %v218 = vunpack.c.h.b16 %v120
  %v219 = vunpack.c.l.b16 %v121
  %v220 = vunpack.c.h.b16 %v121
  %v221 = vunpack.c.l.b16 %v122
  %v222 = vunpack.c.h.b16 %v122
  %v223 = vunpack.c.l.b16 %v123
  %v224 = vunpack.c.h.b16 %v123
  %v225 = vunpack.c.l.b16 %v124
  %v226 = vunpack.c.h.b16 %v124
  %v227 = vunpack.c.l.b16 %v125
  %v228 = vunpack.c.h.b16 %v125
  %v229 = vunpack.c.l.b16 %v126
  %v230 = vunpack.c.h.b16 %v126
  %v231 = vunpack.c.l.b16 %v127
  %v232 = vunpack.c.h.b16 %v127
  %v233 = vunpack.c.l.b16 %v128
  %v234 = vunpack.c.h.b16 %v128
  %v235 = vunpack.c.l.b16 %v129
  %v236 = vunpack.c.h.b16 %v129
  %v237 = vunpack.c.l.b16 %v130
  %v238 = vunpack.c.h.b16 %v130
  %v239 = vunpack.c.l.b16 %v131
  %v240 = vunpack.c.h.b16 %v131
  %v241 = vunpack.c.l.b16 %v132
  %v242 = vunpack.c.h.b16 %v132
  %v243 = vunpack.c.l.b16 %v133
  %v244 = vunpack.c.h.b16 %v133
  %v245 = vunpack.c.l.b16 %v134
  %v246 = vunpack.c.h.b16 %v134
  %v247 = vunpack.c.l.b16 %v135
  %v248 = vunpack.c.h.b16 %v135
  %v249 = vunpack.c.l.b16 %v136
  %v250 = vunpack.c.h.b16 %v136
  %v251 = vunpack.c.l.b16 %v137
  %v252 = vunpack.c.h.b16 %v137
  %v253 = vunpack.c.l.b16 %v138
  %v254 = vunpack.c.h.b16 %v138
  %v255 = vunpack.c.l.b16 %v139
  %v256 = vunpack.c.h.b16 %v139
  %v257 = vpack.c.b16 %v203, %v201
  %v258 = vpack.c.b16 %v204, %v202
  %v259 = vpack.c.b16 %v207, %v205
  %v260 = vpack.c.b16 %v208, %v206
  %v261 = vpack.c.b16 %v211, %v209
  %v262 = vpack.c.b16 %v212, %v210
  %v263 = vpack.c.b16 %v215, %v213
  %v264 = vpack.c.b16 %v216, %v214
  %v265 = vpack.c.b16 %v219, %v217
  %v266 = vpack.c.b16 %v220, %v218
  %v267 = vpack.c.b16 %v223, %v221
  %v268 = vpack.c.b16 %v224, %v222
  %v269 = vpack.c.b16 %v227, %v225
  %v270 = vpack.c.b16 %v228, %v226
  %v271 = vpack.c.b16 %v231, %v229
  %v272 = vpack.c.b16 %v232, %v230
  %v273 = vpack.c.b16 %v235, %v233
  %v274 = vpack.c.b16 %v236, %v234
  %v275 = vpack.c.b16 %v239, %v237
  %v276 = vpack.c.b16 %v240, %v238
  %v277 = vpack.c.b16 %v243, %v241
  %v278 = vpack.c.b16 %v244, %v242
  %v279 = vpack.c.b16 %v247, %v245
  %v280 = vpack.c.b16 %v248, %v246
  %v281 = vpack.c.b16 %v251, %v249
  %v282 = vpack.c.b16 %v252, %v250
  %v283 = vpack.c.b16 %v255, %v253
  %v284 = vpack.c.b16 %v256, %v254
  %v345 = vunpack.c.l.b16 %v141
  %v346 = vunpack.c.h.b16 %v141
  %v347 = vunpack.c.l.b16 %v142
  %v348 = vunpack.c.h.b16 %v142
  %v349 = vunpack.c.l.b16 %v143
  %v350 = vunpack.c.h.b16 %v143
  %v351 = vunpack.c.l.b16 %v144
  %v352 = vunpack.c.h.b16 %v144
  %v353 = vunpack.c.l.b16 %v145
  %v354 = vunpack.c.h.b16 %v145
  %v355 = vunpack.c.l.b16 %v146
  %v356 = vunpack.c.h.b16 %v146
  %v357 = vunpack.c.l.b16 %v147
  %v358 = vunpack.c.h.b16 %v147
  %v359 = vunpack.c.l.b16 %v148
  %v360 = vunpack.c.h.b16 %v148
  %v361 = vunpack.c.l.b16 %v149
  %v362 = vunpack.c.h.b16 %v149
  %v363 = vunpack.c.l.b16 %v150
  %v364 = vunpack.c.h.b16 %v150
  %v365 = vunpack.c.l.b16 %v151
  %v366 = vunpack.c.h.b16 %v151
  %v367 = vunpack.c.l.b16 %v152
  %v368 = vunpack.c.h.b16 %v152
  %v369 = vunpack.c.l.b16 %v153
  %v370 = vunpack.c.h.b16 %v153
  %v371 = vunpack.c.l.b16 %v154
  %v372 = vunpack.c.h.b16 %v154
  %v373 = vunpack.c.l.b16 %v155
  %v374 = vunpack.c.h.b16 %v155
  %v375 = vunpack.c.l.b16 %v156
  %v376 = vunpack.c.h.b16 %v156
  %v377 = vunpack.c.l.b16 %v157
  %v378 = vunpack.c.h.b16 %v157
  %v379 = vunpack.c.l.b16 %v158
  %v380 = vunpack.c.h.b16 %v158
  %v381 = vunpack.c.l.b16 %v159
  %v382 = vunpack.c.h.b16 %v159
  %v383 = vunpack.c.l.b16 %v160
  %v384 = vunpack.c.h.b16 %v160
  %v385 = vunpack.c.l.b16 %v161
  %v386 = vunpack.c.h.b16 %v161
  %v387 = vunpack.c.l.b16 %v162
  %v388 = vunpack.c.h.b16 %v162
  %v389 = vunpack.c.l.b16 %v163
  %v390 = vunpack.c.h.b16 %v163
  %v391 = vunpack.c.l.b16 %v164
  %v392 = vunpack.c.h.b16 %v164
  %v393 = vunpack.c.l.b16 %v165
  %v394 = vunpack.c.h.b16 %v165
  %v395 = vunpack.c.l.b16 %v166
  %v396 = vunpack.c.h.b16 %v166
  %v397 = vunpack.c.l.b16 %v167
  %v398 = vunpack.c.h.b16 %v167
  %v399 = vunpack.c.l.b16 %v168
  %v400 = vunpack.c.h.b16 %v168
  %v401 = vunpack.c.l.b16 %v169
  %v402 = vunpack.c.h.b16 %v169
  %v403 = vunpack.c.l.b16 %v170
  %v404 = vunpack.c.h.b16 %v170
  %v405 = vunpack.c.l.b16 %v171
  %v406 = vunpack.c.h.b16 %v171
  %v407 = vunpack.c.l.b16 %v172
  %v408 = vunpack.c.h.b16 %v172
  %v409 = vpack.c.b16 %v347, %v345
  %v410 = vpack.c.b16 %v348, %v346
  %v411 = vpack.c.b16 %v351, %v349
  %v412 = vpack.c.b16 %v352, %v350
  %v413 = vpack.c.b16 %v355, %v353
  %v414 = vpack.c.b16 %v356, %v354
  %v415 = vpack.c.b16 %v359, %v357
  %v416 = vpack.c.b16 %v360, %v358
  %v417 = vpack.c.b16 %v363, %v361
  %v418 = vpack.c.b16 %v364, %v362
  %v419 = vpack.c.b16 %v367, %v365
  %v420 = vpack.c.b16 %v368, %v366
  %v421 = vpack.c.b16 %v371, %v369
  %v422 = vpack.c.b16 %v372, %v370
  %v423 = vpack.c.b16 %v375, %v373
  %v424 = vpack.c.b16 %v376, %v374
  %v425 = vpack.c.b16 %v379, %v377
  %v426 = vpack.c.b16 %v380, %v378
  %v427 = vpack.c.b16 %v383, %v381
  %v428 = vpack.c.b16 %v384, %v382
  %v429 = vpack.c.b16 %v387, %v385
  %v430 = vpack.c.b16 %v388, %v386
  %v431 = vpack.c.b16 %v391, %v389
  %v432 = vpack.c.b16 %v392, %v390
  %v433 = vpack.c.b16 %v395, %v393
  %v434 = vpack.c.b16 %v396, %v394
  %v435 = vpack.c.b16 %v399, %v397
  %v436 = vpack.c.b16 %v400, %v398
  %v437 = vpack.c.b16 %v403, %v401
  %v438 = vpack.c.b16 %v404, %v402
  %v439 = vpack.c.b16 %v407, %v405
  %v440 = vpack.c.b16 %v408, %v406
  %473 = vmatprep.subr.bf16.mxu0 %v410
  %474 = vmatpush1.bf16.msra.mxu0 %v409
  %475 = vmatprep.subr.bf16.mxu0 %v412
  %476 = vmatpush1.bf16.msra.mxu0 %v411
  %477 = vmatprep.subr.bf16.mxu0 %v414
  %478 = vmatpush1.bf16.msra.mxu0 %v413
  %479 = vmatprep.subr.bf16.mxu0 %v416
  %480 = vmatpush1.bf16.msra.mxu0 %v415
  %481 = vmatprep.subr.bf16.mxu0 %v418
  %482 = vmatpush1.bf16.msra.mxu0 %v417
  %483 = vmatprep.subr.bf16.mxu0 %v420
  %484 = vmatpush1.bf16.msra.mxu0 %v419
  %485 = vmatprep.subr.bf16.mxu0 %v422
  %486 = vmatpush1.bf16.msra.mxu0 %v421
  %487 = vmatprep.subr.bf16.mxu0 %v424
  %488 = vmatpush1.bf16.msra.mxu0 %v423
  %489 = vmatprep.subr.bf16.mxu0 %v426
  %490 = vmatpush1.bf16.msra.mxu0 %v425
  %491 = vmatprep.subr.bf16.mxu0 %v428
  %492 = vmatpush1.bf16.msra.mxu0 %v427
  %493 = vmatprep.subr.bf16.mxu0 %v430
  %494 = vmatpush1.bf16.msra.mxu0 %v429
  %495 = vmatprep.subr.bf16.mxu0 %v432
  %496 = vmatpush1.bf16.msra.mxu0 %v431
  %497 = vmatprep.subr.bf16.mxu0 %v434
  %498 = vmatpush1.bf16.msra.mxu0 %v433
  %499 = vmatprep.subr.bf16.mxu0 %v436
  %500 = vmatpush1.bf16.msra.mxu0 %v435
  %501 = vmatprep.subr.bf16.mxu0 %v438
  %502 = vmatpush1.bf16.msra.mxu0 %v437
  %503 = vmatprep.subr.bf16.mxu0 %v440
  %504 = vmatpush1.bf16.msra.mxu0 %v439
  %505 = vmatprep.mubr.bf16.mxu0 %v258
  %506 = vmatmul.mubr.bf16.gmra.mrb[0].mxu0 %v257
  %v507 = vpop.f32.mrb[0].mxu0
  %v508 = vadd.f32 0.0, %v507
  %v509 = vpop.f32.mrb[0].mxu0
  %v510 = vadd.f32 0.0, %v509
  %v511 = vpop.f32.mrb[0].mxu0
  %v512 = vadd.f32 0.0, %v511
  %v513 = vpop.f32.mrb[0].mxu0
  %v514 = vadd.f32 0.0, %v513
  %515 = vmatprep.mubr.bf16.mxu0 %v260
  %516 = vmatmul.mubr.bf16.gmra.mrb[0].mxu0 %v259
  %v517 = vpop.f32.mrb[0].mxu0
  %v518 = vadd.f32 0.0, %v517
  %v519 = vpop.f32.mrb[0].mxu0
  %v520 = vadd.f32 0.0, %v519
  %v521 = vpop.f32.mrb[0].mxu0
  %v522 = vadd.f32 0.0, %v521
  %v523 = vpop.f32.mrb[0].mxu0
  %v524 = vadd.f32 0.0, %v523
  %525 = vmatprep.mubr.bf16.mxu0 %v262
  %526 = vmatmul.mubr.bf16.gmra.mrb[0].mxu0 %v261
  %v527 = vpop.f32.mrb[0].mxu0
  %v528 = vadd.f32 0.0, %v527
  %v529 = vpop.f32.mrb[0].mxu0
  %v530 = vadd.f32 0.0, %v529
  %v531 = vpop.f32.mrb[0].mxu0
  %v532 = vadd.f32 0.0, %v531
  %v533 = vpop.f32.mrb[0].mxu0
  %v534 = vadd.f32 0.0, %v533
  %535 = vmatprep.mubr.bf16.mxu0 %v264
  %536 = vmatmul.mubr.bf16.gmra.mrb[0].mxu0 %v263
  %v537 = vpop.f32.mrb[0].mxu0
  %v538 = vadd.f32 0.0, %v537
  %v539 = vpop.f32.mrb[0].mxu0
  %v540 = vadd.f32 0.0, %v539
  %v541 = vpop.f32.mrb[0].mxu0
  %v542 = vadd.f32 0.0, %v541
  %v543 = vpop.f32.mrb[0].mxu0
  %v544 = vadd.f32 0.0, %v543
  %545 = vmatprep.mubr.bf16.mxu0 %v266
  %546 = vmatmul.mubr.bf16.gmra.mrb[0].mxu0 %v265
  %v547 = vpop.f32.mrb[0].mxu0
  %v548 = vadd.f32 0.0, %v547
  %v549 = vpop.f32.mrb[0].mxu0
  %v550 = vadd.f32 0.0, %v549
  %v551 = vpop.f32.mrb[0].mxu0
  %v552 = vadd.f32 0.0, %v551
  %v553 = vpop.f32.mrb[0].mxu0
  %v554 = vadd.f32 0.0, %v553
  %555 = vmatprep.mubr.bf16.mxu0 %v268
  %556 = vmatmul.mubr.bf16.gmra.mrb[0].mxu0 %v267
  %v557 = vpop.f32.mrb[0].mxu0
  %v558 = vadd.f32 0.0, %v557
  %v559 = vpop.f32.mrb[0].mxu0
  %v560 = vadd.f32 0.0, %v559
  %v561 = vpop.f32.mrb[0].mxu0
  %v562 = vadd.f32 0.0, %v561
  %v563 = vpop.f32.mrb[0].mxu0
  %v564 = vadd.f32 0.0, %v563
  %565 = vmatprep.mubr.bf16.mxu0 %v270
  %566 = vmatmul.mubr.bf16.gmra.mrb[0].mxu0 %v269
  %v567 = vpop.f32.mrb[0].mxu0
  %v568 = vadd.f32 0.0, %v567
  %v569 = vpop.f32.mrb[0].mxu0
  %v570 = vadd.f32 0.0, %v569
  %v571 = vpop.f32.mrb[0].mxu0
  %v572 = vadd.f32 0.0, %v571
  %v573 = vpop.f32.mrb[0].mxu0
  %v574 = vadd.f32 0.0, %v573
  %575 = vmatprep.mubr.bf16.mxu0 %v272
  %576 = vmatmul.mubr.bf16.gmra.mrb[0].mxu0 %v271
  %v577 = vpop.f32.mrb[0].mxu0
  %v578 = vadd.f32 0.0, %v577
  %v579 = vpop.f32.mrb[0].mxu0
  %v580 = vadd.f32 0.0, %v579
  %v581 = vpop.f32.mrb[0].mxu0
  %v582 = vadd.f32 0.0, %v581
  %v583 = vpop.f32.mrb[0].mxu0
  %v584 = vadd.f32 0.0, %v583
  %585 = vmatprep.mubr.bf16.mxu0 %v274
  %586 = vmatmul.mubr.bf16.gmra.mrb[0].mxu0 %v273
  %v587 = vpop.f32.mrb[0].mxu0
  %v588 = vadd.f32 0.0, %v587
  %v589 = vpop.f32.mrb[0].mxu0
  %v590 = vadd.f32 0.0, %v589
  %v591 = vpop.f32.mrb[0].mxu0
  %v592 = vadd.f32 0.0, %v591
  %v593 = vpop.f32.mrb[0].mxu0
  %v594 = vadd.f32 0.0, %v593
  %595 = vmatprep.mubr.bf16.mxu0 %v276
  %596 = vmatmul.mubr.bf16.gmra.mrb[0].mxu0 %v275
  %v597 = vpop.f32.mrb[0].mxu0
  %v598 = vadd.f32 0.0, %v597
  %v599 = vpop.f32.mrb[0].mxu0
  %v600 = vadd.f32 0.0, %v599
  %v601 = vpop.f32.mrb[0].mxu0
  %v602 = vadd.f32 0.0, %v601
  %v603 = vpop.f32.mrb[0].mxu0
  %v604 = vadd.f32 0.0, %v603
  %605 = vmatprep.mubr.bf16.mxu0 %v278
  %606 = vmatmul.mubr.bf16.gmra.mrb[0].mxu0 %v277
  %v607 = vpop.f32.mrb[0].mxu0
  %v608 = vadd.f32 0.0, %v607
  %v609 = vpop.f32.mrb[0].mxu0
  %v610 = vadd.f32 0.0, %v609
  %v611 = vpop.f32.mrb[0].mxu0
  %v612 = vadd.f32 0.0, %v611
  %v613 = vpop.f32.mrb[0].mxu0
  %v614 = vadd.f32 0.0, %v613
  %615 = vmatprep.mubr.bf16.mxu0 %v280
  %616 = vmatmul.mubr.bf16.gmra.mrb[0].mxu0 %v279
  %v617 = vpop.f32.mrb[0].mxu0
  %v618 = vadd.f32 0.0, %v617
  %v619 = vpop.f32.mrb[0].mxu0
  %v620 = vadd.f32 0.0, %v619
  %v621 = vpop.f32.mrb[0].mxu0
  %v622 = vadd.f32 0.0, %v621
  %v623 = vpop.f32.mrb[0].mxu0
  %v624 = vadd.f32 0.0, %v623
  %625 = vmatprep.mubr.bf16.mxu0 %v282
  %626 = vmatmul.mubr.bf16.gmra.mrb[0].mxu0 %v281
  %v627 = vpop.f32.mrb[0].mxu0
  %v628 = vadd.f32 0.0, %v627
  %v629 = vpop.f32.mrb[0].mxu0
  %v630 = vadd.f32 0.0, %v629
  %v631 = vpop.f32.mrb[0].mxu0
  %v632 = vadd.f32 0.0, %v631
  %v633 = vpop.f32.mrb[0].mxu0
  %v634 = vadd.f32 0.0, %v633
  %635 = vmatprep.mubr.bf16.mxu0 %v284
  %636 = vmatmul.mubr.bf16.gmra.mrb[0].mxu0 %v283
  %v637 = vpop.f32.mrb[0].mxu0
  %v638 = vadd.f32 0.0, %v637
  %v639 = vpop.f32.mrb[0].mxu0
  %v640 = vadd.f32 0.0, %v639
  %v641 = vpop.f32.mrb[0].mxu0
  %v642 = vadd.f32 0.0, %v641
  %v643 = vpop.f32.mrb[0].mxu0
  %v644 = vadd.f32 0.0, %v643
  %645 = vdwg.mxu0
  %v674 = vunpack.c.l.b16 %v51
  %v675 = vunpack.c.h.b16 %v51
  %v676 = vunpack.c.l.b16 %v52
  %v677 = vunpack.c.h.b16 %v52
  %v678 = vunpack.c.l.b16 %v53
  %v679 = vunpack.c.h.b16 %v53
  %v680 = vunpack.c.l.b16 %v54
  %v681 = vunpack.c.h.b16 %v54
  %v682 = vunpack.c.l.b16 %v55
  %v683 = vunpack.c.h.b16 %v55
  %v684 = vunpack.c.l.b16 %v56
  %v685 = vunpack.c.h.b16 %v56
  %v686 = vunpack.c.l.b16 %v57
  %v687 = vunpack.c.h.b16 %v57
  %v688 = vunpack.c.l.b16 %v58
  %v689 = vunpack.c.h.b16 %v58
  %v690 = vunpack.c.l.b16 %v59
  %v691 = vunpack.c.h.b16 %v59
  %v692 = vunpack.c.l.b16 %v60
  %v693 = vunpack.c.h.b16 %v60
  %v694 = vunpack.c.l.b16 %v61
  %v695 = vunpack.c.h.b16 %v61
  %v696 = vunpack.c.l.b16 %v62
  %v697 = vunpack.c.h.b16 %v62
  %v698 = vunpack.c.l.b16 %v63
  %v699 = vunpack.c.h.b16 %v63
  %v700 = vunpack.c.l.b16 %v64
  %v701 = vunpack.c.h.b16 %v64
  %v702 = vunpack.c.l.b16 %v65
  %v703 = vunpack.c.h.b16 %v65
  %v704 = vunpack.c.l.b16 %v66
  %v705 = vunpack.c.h.b16 %v66
  %v706 = vunpack.c.l.b16 %v67
  %v707 = vunpack.c.h.b16 %v67
  %v708 = vunpack.c.l.b16 %v68
  %v709 = vunpack.c.h.b16 %v68
  %v710 = vunpack.c.l.b16 %v69
  %v711 = vunpack.c.h.b16 %v69
  %v712 = vunpack.c.l.b16 %v70
  %v713 = vunpack.c.h.b16 %v70
  %v714 = vunpack.c.l.b16 %v71
  %v715 = vunpack.c.h.b16 %v71
  %v716 = vunpack.c.l.b16 %v72
  %v717 = vunpack.c.h.b16 %v72
  %v718 = vunpack.c.l.b16 %v73
  %v719 = vunpack.c.h.b16 %v73
  %v720 = vunpack.c.l.b16 %v74
  %v721 = vunpack.c.h.b16 %v74
  %v722 = vunpack.c.l.b16 %v75
  %v723 = vunpack.c.h.b16 %v75
  %v724 = vunpack.c.l.b16 %v76
  %v725 = vunpack.c.h.b16 %v76
  %v726 = vunpack.c.l.b16 %v77
  %v727 = vunpack.c.h.b16 %v77
  %v728 = vunpack.c.l.b16 %v78
  %v729 = vunpack.c.h.b16 %v78
  %v730 = vpack.c.b16 %v676, %v674
  %v731 = vpack.c.b16 %v677, %v675
  %v732 = vpack.c.b16 %v680, %v678
  %v733 = vpack.c.b16 %v681, %v679
  %v734 = vpack.c.b16 %v684, %v682
  %v735 = vpack.c.b16 %v685, %v683
  %v736 = vpack.c.b16 %v688, %v686
  %v737 = vpack.c.b16 %v689, %v687
  %v738 = vpack.c.b16 %v692, %v690
  %v739 = vpack.c.b16 %v693, %v691
  %v740 = vpack.c.b16 %v696, %v694
  %v741 = vpack.c.b16 %v697, %v695
  %v742 = vpack.c.b16 %v700, %v698
  %v743 = vpack.c.b16 %v701, %v699
  %v744 = vpack.c.b16 %v704, %v702
  %v745 = vpack.c.b16 %v705, %v703
  %v746 = vpack.c.b16 %v708, %v706
  %v747 = vpack.c.b16 %v709, %v707
  %v748 = vpack.c.b16 %v712, %v710
  %v749 = vpack.c.b16 %v713, %v711
  %v750 = vpack.c.b16 %v716, %v714
  %v751 = vpack.c.b16 %v717, %v715
  %v752 = vpack.c.b16 %v720, %v718
  %v753 = vpack.c.b16 %v721, %v719
  %v754 = vpack.c.b16 %v724, %v722
  %v755 = vpack.c.b16 %v725, %v723
  %v756 = vpack.c.b16 %v728, %v726
  %v757 = vpack.c.b16 %v729, %v727
  %v818 = vunpack.c.l.b16 %v79
  %v819 = vunpack.c.h.b16 %v79
  %v820 = vunpack.c.l.b16 %v80
  %v821 = vunpack.c.h.b16 %v80
  %v822 = vunpack.c.l.b16 %v81
  %v823 = vunpack.c.h.b16 %v81
  %v824 = vunpack.c.l.b16 %v82
  %v825 = vunpack.c.h.b16 %v82
  %v826 = vunpack.c.l.b16 %v83
  %v827 = vunpack.c.h.b16 %v83
  %v828 = vunpack.c.l.b16 %v84
  %v829 = vunpack.c.h.b16 %v84
  %v830 = vunpack.c.l.b16 %v85
  %v831 = vunpack.c.h.b16 %v85
  %v832 = vunpack.c.l.b16 %v86
  %v833 = vunpack.c.h.b16 %v86
  %v834 = vunpack.c.l.b16 %v87
  %v835 = vunpack.c.h.b16 %v87
  %v836 = vunpack.c.l.b16 %v88
  %v837 = vunpack.c.h.b16 %v88
  %v838 = vunpack.c.l.b16 %v89
  %v839 = vunpack.c.h.b16 %v89
  %v840 = vunpack.c.l.b16 %v90
  %v841 = vunpack.c.h.b16 %v90
  %v842 = vunpack.c.l.b16 %v91
  %v843 = vunpack.c.h.b16 %v91
  %v844 = vunpack.c.l.b16 %v92
  %v845 = vunpack.c.h.b16 %v92
  %v846 = vunpack.c.l.b16 %v93
  %v847 = vunpack.c.h.b16 %v93
  %v848 = vunpack.c.l.b16 %v94
  %v849 = vunpack.c.h.b16 %v94
  %v850 = vunpack.c.l.b16 %v95
  %v851 = vunpack.c.h.b16 %v95
  %v852 = vunpack.c.l.b16 %v96
  %v853 = vunpack.c.h.b16 %v96
  %v854 = vunpack.c.l.b16 %v97
  %v855 = vunpack.c.h.b16 %v97
  %v856 = vunpack.c.l.b16 %v98
  %v857 = vunpack.c.h.b16 %v98
  %v858 = vunpack.c.l.b16 %v99
  %v859 = vunpack.c.h.b16 %v99
  %v860 = vunpack.c.l.b16 %v100
  %v861 = vunpack.c.h.b16 %v100
  %v862 = vunpack.c.l.b16 %v101
  %v863 = vunpack.c.h.b16 %v101
  %v864 = vunpack.c.l.b16 %v102
  %v865 = vunpack.c.h.b16 %v102
  %v866 = vunpack.c.l.b16 %v103
  %v867 = vunpack.c.h.b16 %v103
  %v868 = vunpack.c.l.b16 %v104
  %v869 = vunpack.c.h.b16 %v104
  %v870 = vunpack.c.l.b16 %v105
  %v871 = vunpack.c.h.b16 %v105
  %v872 = vunpack.c.l.b16 %v106
  %v873 = vunpack.c.h.b16 %v106
  %v874 = vunpack.c.l.b16 %v107
  %v875 = vunpack.c.h.b16 %v107
  %v876 = vunpack.c.l.b16 %v108
  %v877 = vunpack.c.h.b16 %v108
  %v878 = vunpack.c.l.b16 %v109
  %v879 = vunpack.c.h.b16 %v109
  %v880 = vunpack.c.l.b16 %v110
  %v881 = vunpack.c.h.b16 %v110
  %v882 = vpack.c.b16 %v820, %v818
  %v883 = vpack.c.b16 %v821, %v819
  %v884 = vpack.c.b16 %v824, %v822
  %v885 = vpack.c.b16 %v825, %v823
  %v886 = vpack.c.b16 %v828, %v826
  %v887 = vpack.c.b16 %v829, %v827
  %v888 = vpack.c.b16 %v832, %v830
  %v889 = vpack.c.b16 %v833, %v831
  %v890 = vpack.c.b16 %v836, %v834
  %v891 = vpack.c.b16 %v837, %v835
  %v892 = vpack.c.b16 %v840, %v838
  %v893 = vpack.c.b16 %v841, %v839
  %v894 = vpack.c.b16 %v844, %v842
  %v895 = vpack.c.b16 %v845, %v843
  %v896 = vpack.c.b16 %v848, %v846
  %v897 = vpack.c.b16 %v849, %v847
  %v898 = vpack.c.b16 %v852, %v850
  %v899 = vpack.c.b16 %v853, %v851
  %v900 = vpack.c.b16 %v856, %v854
  %v901 = vpack.c.b16 %v857, %v855
  %v902 = vpack.c.b16 %v860, %v858
  %v903 = vpack.c.b16 %v861, %v859
  %v904 = vpack.c.b16 %v864, %v862
  %v905 = vpack.c.b16 %v865, %v863
  %v906 = vpack.c.b16 %v868, %v866
  %v907 = vpack.c.b16 %v869, %v867
  %v908 = vpack.c.b16 %v872, %v870
  %v909 = vpack.c.b16 %v873, %v871
  %v910 = vpack.c.b16 %v876, %v874
  %v911 = vpack.c.b16 %v877, %v875
  %v912 = vpack.c.b16 %v880, %v878
  %v913 = vpack.c.b16 %v881, %v879
  %946 = vmatprep.subr.bf16.mxu0 %v883
  %947 = vmatpush1.bf16.msra.mxu0 %v882
  %948 = vmatprep.subr.bf16.mxu0 %v885
  %949 = vmatpush1.bf16.msra.mxu0 %v884
  %950 = vmatprep.subr.bf16.mxu0 %v887
  %951 = vmatpush1.bf16.msra.mxu0 %v886
  %952 = vmatprep.subr.bf16.mxu0 %v889
  %953 = vmatpush1.bf16.msra.mxu0 %v888
  %954 = vmatprep.subr.bf16.mxu0 %v891
  %955 = vmatpush1.bf16.msra.mxu0 %v890
  %956 = vmatprep.subr.bf16.mxu0 %v893
  %957 = vmatpush1.bf16.msra.mxu0 %v892
  %958 = vmatprep.subr.bf16.mxu0 %v895
  %959 = vmatpush1.bf16.msra.mxu0 %v894
  %960 = vmatprep.subr.bf16.mxu0 %v897
  %961 = vmatpush1.bf16.msra.mxu0 %v896
  %962 = vmatprep.subr.bf16.mxu0 %v899
  %963 = vmatpush1.bf16.msra.mxu0 %v898
  %964 = vmatprep.subr.bf16.mxu0 %v901
  %965 = vmatpush1.bf16.msra.mxu0 %v900
  %966 = vmatprep.subr.bf16.mxu0 %v903
  %967 = vmatpush1.bf16.msra.mxu0 %v902
  %968 = vmatprep.subr.bf16.mxu0 %v905
  %969 = vmatpush1.bf16.msra.mxu0 %v904
  %970 = vmatprep.subr.bf16.mxu0 %v907
  %971 = vmatpush1.bf16.msra.mxu0 %v906
  %972 = vmatprep.subr.bf16.mxu0 %v909
  %973 = vmatpush1.bf16.msra.mxu0 %v908
  %974 = vmatprep.subr.bf16.mxu0 %v911
  %975 = vmatpush1.bf16.msra.mxu0 %v910
  %976 = vmatprep.subr.bf16.mxu0 %v913
  %977 = vmatpush1.bf16.msra.mxu0 %v912
  %978 = vmatprep.mubr.bf16.mxu0 %v731
  %979 = vmatmul.mubr.bf16.gmra.mrb[0].mxu0 %v730
  %v980 = vpop.f32.mrb[0].mxu0
  %v981 = vadd.f32 %v508, %v980
  %v982 = vpop.f32.mrb[0].mxu0
  %v983 = vadd.f32 %v510, %v982
  %v984 = vpop.f32.mrb[0].mxu0
  %v985 = vadd.f32 %v512, %v984
  %v986 = vpop.f32.mrb[0].mxu0
  %v987 = vadd.f32 %v514, %v986
  %988 = vmatprep.mubr.bf16.mxu0 %v733
  %989 = vmatmul.mubr.bf16.gmra.mrb[0].mxu0 %v732
  %v990 = vpop.f32.mrb[0].mxu0
  %v991 = vadd.f32 %v518, %v990
  %v992 = vpop.f32.mrb[0].mxu0
  %v993 = vadd.f32 %v520, %v992
  %v994 = vpop.f32.mrb[0].mxu0
  %v995 = vadd.f32 %v522, %v994
  %v996 = vpop.f32.mrb[0].mxu0
  %v997 = vadd.f32 %v524, %v996
  %998 = vmatprep.mubr.bf16.mxu0 %v735
  %999 = vmatmul.mubr.bf16.gmra.mrb[0].mxu0 %v734
  %v1000 = vpop.f32.mrb[0].mxu0
  %v1001 = vadd.f32 %v528, %v1000
  %v1002 = vpop.f32.mrb[0].mxu0
  %v1003 = vadd.f32 %v530, %v1002
  %v1004 = vpop.f32.mrb[0].mxu0
  %v1005 = vadd.f32 %v532, %v1004
  %v1006 = vpop.f32.mrb[0].mxu0
  %v1007 = vadd.f32 %v534, %v1006
  %1008 = vmatprep.mubr.bf16.mxu0 %v737
  %1009 = vmatmul.mubr.bf16.gmra.mrb[0].mxu0 %v736
  %v1010 = vpop.f32.mrb[0].mxu0
  %v1011 = vadd.f32 %v538, %v1010
  %v1012 = vpop.f32.mrb[0].mxu0
  %v1013 = vadd.f32 %v540, %v1012
  %v1014 = vpop.f32.mrb[0].mxu0
  %v1015 = vadd.f32 %v542, %v1014
  %v1016 = vpop.f32.mrb[0].mxu0
  %v1017 = vadd.f32 %v544, %v1016
  %1018 = vmatprep.mubr.bf16.mxu0 %v739
  %1019 = vmatmul.mubr.bf16.gmra.mrb[0].mxu0 %v738
  %v1020 = vpop.f32.mrb[0].mxu0
  %v1021 = vadd.f32 %v548, %v1020
  %v1022 = vpop.f32.mrb[0].mxu0
  %v1023 = vadd.f32 %v550, %v1022
  %v1024 = vpop.f32.mrb[0].mxu0
  %v1025 = vadd.f32 %v552, %v1024
  %v1026 = vpop.f32.mrb[0].mxu0
  %v1027 = vadd.f32 %v554, %v1026
  %1028 = vmatprep.mubr.bf16.mxu0 %v741
  %1029 = vmatmul.mubr.bf16.gmra.mrb[0].mxu0 %v740
  %v1030 = vpop.f32.mrb[0].mxu0
  %v1031 = vadd.f32 %v558, %v1030
  %v1032 = vpop.f32.mrb[0].mxu0
  %v1033 = vadd.f32 %v560, %v1032
  %v1034 = vpop.f32.mrb[0].mxu0
  %v1035 = vadd.f32 %v562, %v1034
  %v1036 = vpop.f32.mrb[0].mxu0
  %v1037 = vadd.f32 %v564, %v1036
  %1038 = vmatprep.mubr.bf16.mxu0 %v743
  %1039 = vmatmul.mubr.bf16.gmra.mrb[0].mxu0 %v742
  %v1040 = vpop.f32.mrb[0].mxu0
  %v1041 = vadd.f32 %v568, %v1040
  %v1042 = vpop.f32.mrb[0].mxu0
  %v1043 = vadd.f32 %v570, %v1042
  %v1044 = vpop.f32.mrb[0].mxu0
  %v1045 = vadd.f32 %v572, %v1044
  %v1046 = vpop.f32.mrb[0].mxu0
  %v1047 = vadd.f32 %v574, %v1046
  %1048 = vmatprep.mubr.bf16.mxu0 %v745
  %1049 = vmatmul.mubr.bf16.gmra.mrb[0].mxu0 %v744
  %v1050 = vpop.f32.mrb[0].mxu0
  %v1051 = vadd.f32 %v578, %v1050
  %v1052 = vpop.f32.mrb[0].mxu0
  %v1053 = vadd.f32 %v580, %v1052
  %v1054 = vpop.f32.mrb[0].mxu0
  %v1055 = vadd.f32 %v582, %v1054
  %v1056 = vpop.f32.mrb[0].mxu0
  %v1057 = vadd.f32 %v584, %v1056
  %1058 = vmatprep.mubr.bf16.mxu0 %v747
  %1059 = vmatmul.mubr.bf16.gmra.mrb[0].mxu0 %v746
  %v1060 = vpop.f32.mrb[0].mxu0
  %v1061 = vadd.f32 %v588, %v1060
  %v1062 = vpop.f32.mrb[0].mxu0
  %v1063 = vadd.f32 %v590, %v1062
  %v1064 = vpop.f32.mrb[0].mxu0
  %v1065 = vadd.f32 %v592, %v1064
  %v1066 = vpop.f32.mrb[0].mxu0
  %v1067 = vadd.f32 %v594, %v1066
  %1068 = vmatprep.mubr.bf16.mxu0 %v749
  %1069 = vmatmul.mubr.bf16.gmra.mrb[0].mxu0 %v748
  %v1070 = vpop.f32.mrb[0].mxu0
  %v1071 = vadd.f32 %v598, %v1070
  %v1072 = vpop.f32.mrb[0].mxu0
  %v1073 = vadd.f32 %v600, %v1072
  %v1074 = vpop.f32.mrb[0].mxu0
  %v1075 = vadd.f32 %v602, %v1074
  %v1076 = vpop.f32.mrb[0].mxu0
  %v1077 = vadd.f32 %v604, %v1076
  %1078 = vmatprep.mubr.bf16.mxu0 %v751
  %1079 = vmatmul.mubr.bf16.gmra.mrb[0].mxu0 %v750
  %v1080 = vpop.f32.mrb[0].mxu0
  %v1081 = vadd.f32 %v608, %v1080
  %v1082 = vpop.f32.mrb[0].mxu0
  %v1083 = vadd.f32 %v610, %v1082
  %v1084 = vpop.f32.mrb[0].mxu0
  %v1085 = vadd.f32 %v612, %v1084
  %v1086 = vpop.f32.mrb[0].mxu0
  %v1087 = vadd.f32 %v614, %v1086
  %1088 = vmatprep.mubr.bf16.mxu0 %v753
  %1089 = vmatmul.mubr.bf16.gmra.mrb[0].mxu0 %v752
  %v1090 = vpop.f32.mrb[0].mxu0
  %v1091 = vadd.f32 %v618, %v1090
  %v1092 = vpop.f32.mrb[0].mxu0
  %v1093 = vadd.f32 %v620, %v1092
  %v1094 = vpop.f32.mrb[0].mxu0
  %v1095 = vadd.f32 %v622, %v1094
  %v1096 = vpop.f32.mrb[0].mxu0
  %v1097 = vadd.f32 %v624, %v1096
  %1098 = vmatprep.mubr.bf16.mxu0 %v755
  %1099 = vmatmul.mubr.bf16.gmra.mrb[0].mxu0 %v754
  %v1100 = vpop.f32.mrb[0].mxu0
  %v1101 = vadd.f32 %v628, %v1100
  %v1102 = vpop.f32.mrb[0].mxu0
  %v1103 = vadd.f32 %v630, %v1102
  %v1104 = vpop.f32.mrb[0].mxu0
  %v1105 = vadd.f32 %v632, %v1104
  %v1106 = vpop.f32.mrb[0].mxu0
  %v1107 = vadd.f32 %v634, %v1106
  %1108 = vmatprep.mubr.bf16.mxu0 %v757
  %1109 = vmatmul.mubr.bf16.gmra.mrb[0].mxu0 %v756
  %v1110 = vpop.f32.mrb[0].mxu0
  %v1111 = vadd.f32 %v638, %v1110
  %v1112 = vpop.f32.mrb[0].mxu0
  %v1113 = vadd.f32 %v640, %v1112
  %v1114 = vpop.f32.mrb[0].mxu0
  %v1115 = vadd.f32 %v642, %v1114
  %v1116 = vpop.f32.mrb[0].mxu0
  %v1117 = vadd.f32 %v644, %v1116
  %1118 = vdwg.mxu0
  %s1119 = scalar_lea.vmem %s0, 448
  %v1120 = vld [vmem:[%s1119] sm:$0xff]
  %v1121 = vld [vmem:[%s1119 + $0x8] sm:$0xff]
  %v1122 = vld [vmem:[%s1119 + $0x10] sm:$0xff]
  %v1123 = vld [vmem:[%s1119 + $0x18] sm:$0xff]
  %v1124 = vld [vmem:[%s1119 + $0x20] sm:$0xff]
  %v1125 = vld [vmem:[%s1119 + $0x28] sm:$0xff]
  %v1126 = vld [vmem:[%s1119 + $0x30] sm:$0xff]
  %v1127 = vld [vmem:[%s1119 + $0x38] sm:$0xff]
  %v1128 = vld [vmem:[%s1119 + $0x40] sm:$0xff]
  %v1129 = vld [vmem:[%s1119 + $0x48] sm:$0xff]
  %v1130 = vld [vmem:[%s1119 + $0x50] sm:$0xff]
  %v1131 = vld [vmem:[%s1119 + $0x58] sm:$0xff]
  %v1132 = vld [vmem:[%s1119 + $0x60] sm:$0xff]
  %v1133 = vld [vmem:[%s1119 + $0x68] sm:$0xff]
  %v1134 = vld [vmem:[%s1119 + $0x70] sm:$0xff]
  %v1135 = vld [vmem:[%s1119 + $0x78] sm:$0xff]
  %v1136 = vld [vmem:[%s1119 + $0x80] sm:$0xff]
  %v1137 = vld [vmem:[%s1119 + $0x88] sm:$0xff]
  %v1138 = vld [vmem:[%s1119 + $0x90] sm:$0xff]
  %v1139 = vld [vmem:[%s1119 + $0x98] sm:$0xff]
  %v1140 = vld [vmem:[%s1119 + $0xa0] sm:$0xff]
  %v1141 = vld [vmem:[%s1119 + $0xa8] sm:$0xff]
  %v1142 = vld [vmem:[%s1119 + $0xb0] sm:$0xff]
  %v1143 = vld [vmem:[%s1119 + $0xb8] sm:$0xff]
  %v1144 = vld [vmem:[%s1119 + $0xc0] sm:$0xff]
  %v1145 = vld [vmem:[%s1119 + $0xc8] sm:$0xff]
  %v1146 = vld [vmem:[%s1119 + $0xd0] sm:$0xff]
  %v1147 = vld [vmem:[%s1119 + $0xd8] sm:$0xff]
  %s1148 = scalar_lea.vmem %s1, 512
  %v1149 = vld [vmem:[%s1148] sm:$0xff]
  %v1150 = vld [vmem:[%s1148 + $0x8] sm:$0xff]
  %v1151 = vld [vmem:[%s1148 + $0x10] sm:$0xff]
  %v1152 = vld [vmem:[%s1148 + $0x18] sm:$0xff]
  %v1153 = vld [vmem:[%s1148 + $0x20] sm:$0xff]
  %v1154 = vld [vmem:[%s1148 + $0x28] sm:$0xff]
  %v1155 = vld [vmem:[%s1148 + $0x30] sm:$0xff]
  %v1156 = vld [vmem:[%s1148 + $0x38] sm:$0xff]
  %v1157 = vld [vmem:[%s1148 + $0x40] sm:$0xff]
  %v1158 = vld [vmem:[%s1148 + $0x48] sm:$0xff]
  %v1159 = vld [vmem:[%s1148 + $0x50] sm:$0xff]
  %v1160 = vld [vmem:[%s1148 + $0x58] sm:$0xff]
  %v1161 = vld [vmem:[%s1148 + $0x60] sm:$0xff]
  %v1162 = vld [vmem:[%s1148 + $0x68] sm:$0xff]
  %v1163 = vld [vmem:[%s1148 + $0x70] sm:$0xff]
  %v1164 = vld [vmem:[%s1148 + $0x78] sm:$0xff]
  %v1165 = vld [vmem:[%s1148 + $0x80] sm:$0xff]
  %v1166 = vld [vmem:[%s1148 + $0x88] sm:$0xff]
  %v1167 = vld [vmem:[%s1148 + $0x90] sm:$0xff]
  %v1168 = vld [vmem:[%s1148 + $0x98] sm:$0xff]
  %v1169 = vld [vmem:[%s1148 + $0xa0] sm:$0xff]
  %v1170 = vld [vmem:[%s1148 + $0xa8] sm:$0xff]
  %v1171 = vld [vmem:[%s1148 + $0xb0] sm:$0xff]
  %v1172 = vld [vmem:[%s1148 + $0xb8] sm:$0xff]
  %v1173 = vld [vmem:[%s1148 + $0xc0] sm:$0xff]
  %v1174 = vld [vmem:[%s1148 + $0xc8] sm:$0xff]
  %v1175 = vld [vmem:[%s1148 + $0xd0] sm:$0xff]
  %v1176 = vld [vmem:[%s1148 + $0xd8] sm:$0xff]
  %v1177 = vld [vmem:[%s1148 + $0xe0] sm:$0xff]
  %v1178 = vld [vmem:[%s1148 + $0xe8] sm:$0xff]
  %v1179 = vld [vmem:[%s1148 + $0xf0] sm:$0xff]
  %v1180 = vld [vmem:[%s1148 + $0xf8] sm:$0xff]
  %v1209 = vunpack.c.l.b16 %v1120
  %v1210 = vunpack.c.h.b16 %v1120
  %v1211 = vunpack.c.l.b16 %v1121
  %v1212 = vunpack.c.h.b16 %v1121
  %v1213 = vunpack.c.l.b16 %v1122
  %v1214 = vunpack.c.h.b16 %v1122
  %v1215 = vunpack.c.l.b16 %v1123
  %v1216 = vunpack.c.h.b16 %v1123
  %v1217 = vunpack.c.l.b16 %v1124
  %v1218 = vunpack.c.h.b16 %v1124
  %v1219 = vunpack.c.l.b16 %v1125
  %v1220 = vunpack.c.h.b16 %v1125
  %v1221 = vunpack.c.l.b16 %v1126
  %v1222 = vunpack.c.h.b16 %v1126
  %v1223 = vunpack.c.l.b16 %v1127
  %v1224 = vunpack.c.h.b16 %v1127
  %v1225 = vunpack.c.l.b16 %v1128
  %v1226 = vunpack.c.h.b16 %v1128
  %v1227 = vunpack.c.l.b16 %v1129
  %v1228 = vunpack.c.h.b16 %v1129
  %v1229 = vunpack.c.l.b16 %v1130
  %v1230 = vunpack.c.h.b16 %v1130
  %v1231 = vunpack.c.l.b16 %v1131
  %v1232 = vunpack.c.h.b16 %v1131
  %v1233 = vunpack.c.l.b16 %v1132
  %v1234 = vunpack.c.h.b16 %v1132
  %v1235 = vunpack.c.l.b16 %v1133
  %v1236 = vunpack.c.h.b16 %v1133
  %v1237 = vunpack.c.l.b16 %v1134
  %v1238 = vunpack.c.h.b16 %v1134
  %v1239 = vunpack.c.l.b16 %v1135
  %v1240 = vunpack.c.h.b16 %v1135
  %v1241 = vunpack.c.l.b16 %v1136
  %v1242 = vunpack.c.h.b16 %v1136
  %v1243 = vunpack.c.l.b16 %v1137
  %v1244 = vunpack.c.h.b16 %v1137
  %v1245 = vunpack.c.l.b16 %v1138
  %v1246 = vunpack.c.h.b16 %v1138
  %v1247 = vunpack.c.l.b16 %v1139
  %v1248 = vunpack.c.h.b16 %v1139
  %v1249 = vunpack.c.l.b16 %v1140
  %v1250 = vunpack.c.h.b16 %v1140
  %v1251 = vunpack.c.l.b16 %v1141
  %v1252 = vunpack.c.h.b16 %v1141
  %v1253 = vunpack.c.l.b16 %v1142
  %v1254 = vunpack.c.h.b16 %v1142
  %v1255 = vunpack.c.l.b16 %v1143
  %v1256 = vunpack.c.h.b16 %v1143
  %v1257 = vunpack.c.l.b16 %v1144
  %v1258 = vunpack.c.h.b16 %v1144
  %v1259 = vunpack.c.l.b16 %v1145
  %v1260 = vunpack.c.h.b16 %v1145
  %v1261 = vunpack.c.l.b16 %v1146
  %v1262 = vunpack.c.h.b16 %v1146
  %v1263 = vunpack.c.l.b16 %v1147
  %v1264 = vunpack.c.h.b16 %v1147
  %v1265 = vpack.c.b16 %v1211, %v1209
  %v1266 = vpack.c.b16 %v1212, %v1210
  %v1267 = vpack.c.b16 %v1215, %v1213
  %v1268 = vpack.c.b16 %v1216, %v1214
  %v1269 = vpack.c.b16 %v1219, %v1217
  %v1270 = vpack.c.b16 %v1220, %v1218
  %v1271 = vpack.c.b16 %v1223, %v1221
  %v1272 = vpack.c.b16 %v1224, %v1222
  %v1273 = vpack.c.b16 %v1227, %v1225
  %v1274 = vpack.c.b16 %v1228, %v1226
  %v1275 = vpack.c.b16 %v1231, %v1229
  %v1276 = vpack.c.b16 %v1232, %v1230
  %v1277 = vpack.c.b16 %v1235, %v1233
  %v1278 = vpack.c.b16 %v1236, %v1234
  %v1279 = vpack.c.b16 %v1239, %v1237
  %v1280 = vpack.c.b16 %v1240, %v1238
  %v1281 = vpack.c.b16 %v1243, %v1241
  %v1282 = vpack.c.b16 %v1244, %v1242
  %v1283 = vpack.c.b16 %v1247, %v1245
  %v1284 = vpack.c.b16 %v1248, %v1246
  %v1285 = vpack.c.b16 %v1251, %v1249
  %v1286 = vpack.c.b16 %v1252, %v1250
  %v1287 = vpack.c.b16 %v1255, %v1253
  %v1288 = vpack.c.b16 %v1256, %v1254
  %v1289 = vpack.c.b16 %v1259, %v1257
  %v1290 = vpack.c.b16 %v1260, %v1258
  %v1291 = vpack.c.b16 %v1263, %v1261
  %v1292 = vpack.c.b16 %v1264, %v1262
  %v1353 = vunpack.c.l.b16 %v1149
  %v1354 = vunpack.c.h.b16 %v1149
  %v1355 = vunpack.c.l.b16 %v1150
  %v1356 = vunpack.c.h.b16 %v1150
  %v1357 = vunpack.c.l.b16 %v1151
  %v1358 = vunpack.c.h.b16 %v1151
  %v1359 = vunpack.c.l.b16 %v1152
  %v1360 = vunpack.c.h.b16 %v1152
  %v1361 = vunpack.c.l.b16 %v1153
  %v1362 = vunpack.c.h.b16 %v1153
  %v1363 = vunpack.c.l.b16 %v1154
  %v1364 = vunpack.c.h.b16 %v1154
  %v1365 = vunpack.c.l.b16 %v1155
  %v1366 = vunpack.c.h.b16 %v1155
  %v1367 = vunpack.c.l.b16 %v1156
  %v1368 = vunpack.c.h.b16 %v1156
  %v1369 = vunpack.c.l.b16 %v1157
  %v1370 = vunpack.c.h.b16 %v1157
  %v1371 = vunpack.c.l.b16 %v1158
  %v1372 = vunpack.c.h.b16 %v1158
  %v1373 = vunpack.c.l.b16 %v1159
  %v1374 = vunpack.c.h.b16 %v1159
  %v1375 = vunpack.c.l.b16 %v1160
  %v1376 = vunpack.c.h.b16 %v1160
  %v1377 = vunpack.c.l.b16 %v1161
  %v1378 = vunpack.c.h.b16 %v1161
  %v1379 = vunpack.c.l.b16 %v1162
  %v1380 = vunpack.c.h.b16 %v1162
  %v1381 = vunpack.c.l.b16 %v1163
  %v1382 = vunpack.c.h.b16 %v1163
  %v1383 = vunpack.c.l.b16 %v1164
  %v1384 = vunpack.c.h.b16 %v1164
  %v1385 = vunpack.c.l.b16 %v1165
  %v1386 = vunpack.c.h.b16 %v1165
  %v1387 = vunpack.c.l.b16 %v1166
  %v1388 = vunpack.c.h.b16 %v1166
  %v1389 = vunpack.c.l.b16 %v1167
  %v1390 = vunpack.c.h.b16 %v1167
  %v1391 = vunpack.c.l.b16 %v1168
  %v1392 = vunpack.c.h.b16 %v1168
  %v1393 = vunpack.c.l.b16 %v1169
  %v1394 = vunpack.c.h.b16 %v1169
  %v1395 = vunpack.c.l.b16 %v1170
  %v1396 = vunpack.c.h.b16 %v1170
  %v1397 = vunpack.c.l.b16 %v1171
  %v1398 = vunpack.c.h.b16 %v1171
  %v1399 = vunpack.c.l.b16 %v1172
  %v1400 = vunpack.c.h.b16 %v1172
  %v1401 = vunpack.c.l.b16 %v1173
  %v1402 = vunpack.c.h.b16 %v1173
  %v1403 = vunpack.c.l.b16 %v1174
  %v1404 = vunpack.c.h.b16 %v1174
  %v1405 = vunpack.c.l.b16 %v1175
  %v1406 = vunpack.c.h.b16 %v1175
  %v1407 = vunpack.c.l.b16 %v1176
  %v1408 = vunpack.c.h.b16 %v1176
  %v1409 = vunpack.c.l.b16 %v1177
  %v1410 = vunpack.c.h.b16 %v1177
  %v1411 = vunpack.c.l.b16 %v1178
  %v1412 = vunpack.c.h.b16 %v1178
  %v1413 = vunpack.c.l.b16 %v1179
  %v1414 = vunpack.c.h.b16 %v1179
  %v1415 = vunpack.c.l.b16 %v1180
  %v1416 = vunpack.c.h.b16 %v1180
  %v1417 = vpack.c.b16 %v1355, %v1353
  %v1418 = vpack.c.b16 %v1356, %v1354
  %v1419 = vpack.c.b16 %v1359, %v1357
  %v1420 = vpack.c.b16 %v1360, %v1358
  %v1421 = vpack.c.b16 %v1363, %v1361
  %v1422 = vpack.c.b16 %v1364, %v1362
  %v1423 = vpack.c.b16 %v1367, %v1365
  %v1424 = vpack.c.b16 %v1368, %v1366
  %v1425 = vpack.c.b16 %v1371, %v1369
  %v1426 = vpack.c.b16 %v1372, %v1370
  %v1427 = vpack.c.b16 %v1375, %v1373
  %v1428 = vpack.c.b16 %v1376, %v1374
  %v1429 = vpack.c.b16 %v1379, %v1377
  %v1430 = vpack.c.b16 %v1380, %v1378
  %v1431 = vpack.c.b16 %v1383, %v1381
  %v1432 = vpack.c.b16 %v1384, %v1382
  %v1433 = vpack.c.b16 %v1387, %v1385
  %v1434 = vpack.c.b16 %v1388, %v1386
  %v1435 = vpack.c.b16 %v1391, %v1389
  %v1436 = vpack.c.b16 %v1392, %v1390
  %v1437 = vpack.c.b16 %v1395, %v1393
  %v1438 = vpack.c.b16 %v1396, %v1394
  %v1439 = vpack.c.b16 %v1399, %v1397
  %v1440 = vpack.c.b16 %v1400, %v1398
  %v1441 = vpack.c.b16 %v1403, %v1401
  %v1442 = vpack.c.b16 %v1404, %v1402
  %v1443 = vpack.c.b16 %v1407, %v1405
  %v1444 = vpack.c.b16 %v1408, %v1406
  %v1445 = vpack.c.b16 %v1411, %v1409
  %v1446 = vpack.c.b16 %v1412, %v1410
  %v1447 = vpack.c.b16 %v1415, %v1413
  %v1448 = vpack.c.b16 %v1416, %v1414
  %1481 = vmatprep.subr.bf16.mxu0 %v1418
  %1482 = vmatpush1.bf16.msra.mxu0 %v1417
  %1483 = vmatprep.subr.bf16.mxu0 %v1420
  %1484 = vmatpush1.bf16.msra.mxu0 %v1419
  %1485 = vmatprep.subr.bf16.mxu0 %v1422
  %1486 = vmatpush1.bf16.msra.mxu0 %v1421
  %1487 = vmatprep.subr.bf16.mxu0 %v1424
  %1488 = vmatpush1.bf16.msra.mxu0 %v1423
  %1489 = vmatprep.subr.bf16.mxu0 %v1426
  %1490 = vmatpush1.bf16.msra.mxu0 %v1425
  %1491 = vmatprep.subr.bf16.mxu0 %v1428
  %1492 = vmatpush1.bf16.msra.mxu0 %v1427
  %1493 = vmatprep.subr.bf16.mxu0 %v1430
  %1494 = vmatpush1.bf16.msra.mxu0 %v1429
  %1495 = vmatprep.subr.bf16.mxu0 %v1432
  %1496 = vmatpush1.bf16.msra.mxu0 %v1431
  %1497 = vmatprep.subr.bf16.mxu0 %v1434
  %1498 = vmatpush1.bf16.msra.mxu0 %v1433
  %1499 = vmatprep.subr.bf16.mxu0 %v1436
  %1500 = vmatpush1.bf16.msra.mxu0 %v1435
  %1501 = vmatprep.subr.bf16.mxu0 %v1438
  %1502 = vmatpush1.bf16.msra.mxu0 %v1437
  %1503 = vmatprep.subr.bf16.mxu0 %v1440
  %1504 = vmatpush1.bf16.msra.mxu0 %v1439
  %1505 = vmatprep.subr.bf16.mxu0 %v1442
  %1506 = vmatpush1.bf16.msra.mxu0 %v1441
  %1507 = vmatprep.subr.bf16.mxu0 %v1444
  %1508 = vmatpush1.bf16.msra.mxu0 %v1443
  %1509 = vmatprep.subr.bf16.mxu0 %v1446
  %1510 = vmatpush1.bf16.msra.mxu0 %v1445
  %1511 = vmatprep.subr.bf16.mxu0 %v1448
  %1512 = vmatpush1.bf16.msra.mxu0 %v1447
  %1513 = vmatprep.mubr.bf16.mxu0 %v1266
  %1514 = vmatmul.mubr.bf16.gmra.mrb[0].mxu0 %v1265
  %v1515 = vpop.f32.mrb[0].mxu0
  %v1516 = vadd.f32 0.0, %v1515
  %v1517 = vpop.f32.mrb[0].mxu0
  %v1518 = vadd.f32 0.0, %v1517
  %v1519 = vpop.f32.mrb[0].mxu0
  %v1520 = vadd.f32 0.0, %v1519
  %v1521 = vpop.f32.mrb[0].mxu0
  %v1522 = vadd.f32 0.0, %v1521
  %1523 = vmatprep.mubr.bf16.mxu0 %v1268
  %1524 = vmatmul.mubr.bf16.gmra.mrb[0].mxu0 %v1267
  %v1525 = vpop.f32.mrb[0].mxu0
  %v1526 = vadd.f32 0.0, %v1525
  %v1527 = vpop.f32.mrb[0].mxu0
  %v1528 = vadd.f32 0.0, %v1527
  %v1529 = vpop.f32.mrb[0].mxu0
  %v1530 = vadd.f32 0.0, %v1529
  %v1531 = vpop.f32.mrb[0].mxu0
  %v1532 = vadd.f32 0.0, %v1531
  %1533 = vmatprep.mubr.bf16.mxu0 %v1270
  %1534 = vmatmul.mubr.bf16.gmra.mrb[0].mxu0 %v1269
  %v1535 = vpop.f32.mrb[0].mxu0
  %v1536 = vadd.f32 0.0, %v1535
  %v1537 = vpop.f32.mrb[0].mxu0
  %v1538 = vadd.f32 0.0, %v1537
  %v1539 = vpop.f32.mrb[0].mxu0
  %v1540 = vadd.f32 0.0, %v1539
  %v1541 = vpop.f32.mrb[0].mxu0
  %v1542 = vadd.f32 0.0, %v1541
  %1543 = vmatprep.mubr.bf16.mxu0 %v1272
  %1544 = vmatmul.mubr.bf16.gmra.mrb[0].mxu0 %v1271
  %v1545 = vpop.f32.mrb[0].mxu0
  %v1546 = vadd.f32 0.0, %v1545
  %v1547 = vpop.f32.mrb[0].mxu0
  %v1548 = vadd.f32 0.0, %v1547
  %v1549 = vpop.f32.mrb[0].mxu0
  %v1550 = vadd.f32 0.0, %v1549
  %v1551 = vpop.f32.mrb[0].mxu0
  %v1552 = vadd.f32 0.0, %v1551
  %1553 = vmatprep.mubr.bf16.mxu0 %v1274
  %1554 = vmatmul.mubr.bf16.gmra.mrb[0].mxu0 %v1273
  %v1555 = vpop.f32.mrb[0].mxu0
  %v1556 = vadd.f32 0.0, %v1555
  %v1557 = vpop.f32.mrb[0].mxu0
  %v1558 = vadd.f32 0.0, %v1557
  %v1559 = vpop.f32.mrb[0].mxu0
  %v1560 = vadd.f32 0.0, %v1559
  %v1561 = vpop.f32.mrb[0].mxu0
  %v1562 = vadd.f32 0.0, %v1561
  %1563 = vmatprep.mubr.bf16.mxu0 %v1276
  %1564 = vmatmul.mubr.bf16.gmra.mrb[0].mxu0 %v1275
  %v1565 = vpop.f32.mrb[0].mxu0
  %v1566 = vadd.f32 0.0, %v1565
  %v1567 = vpop.f32.mrb[0].mxu0
  %v1568 = vadd.f32 0.0, %v1567
  %v1569 = vpop.f32.mrb[0].mxu0
  %v1570 = vadd.f32 0.0, %v1569
  %v1571 = vpop.f32.mrb[0].mxu0
  %v1572 = vadd.f32 0.0, %v1571
  %1573 = vmatprep.mubr.bf16.mxu0 %v1278
  %1574 = vmatmul.mubr.bf16.gmra.mrb[0].mxu0 %v1277
  %v1575 = vpop.f32.mrb[0].mxu0
  %v1576 = vadd.f32 0.0, %v1575
  %v1577 = vpop.f32.mrb[0].mxu0
  %v1578 = vadd.f32 0.0, %v1577
  %v1579 = vpop.f32.mrb[0].mxu0
  %v1580 = vadd.f32 0.0, %v1579
  %v1581 = vpop.f32.mrb[0].mxu0
  %v1582 = vadd.f32 0.0, %v1581
  %1583 = vmatprep.mubr.bf16.mxu0 %v1280
  %1584 = vmatmul.mubr.bf16.gmra.mrb[0].mxu0 %v1279
  %v1585 = vpop.f32.mrb[0].mxu0
  %v1586 = vadd.f32 0.0, %v1585
  %v1587 = vpop.f32.mrb[0].mxu0
  %v1588 = vadd.f32 0.0, %v1587
  %v1589 = vpop.f32.mrb[0].mxu0
  %v1590 = vadd.f32 0.0, %v1589
  %v1591 = vpop.f32.mrb[0].mxu0
  %v1592 = vadd.f32 0.0, %v1591
  %1593 = vmatprep.mubr.bf16.mxu0 %v1282
  %1594 = vmatmul.mubr.bf16.gmra.mrb[0].mxu0 %v1281
  %v1595 = vpop.f32.mrb[0].mxu0
  %v1596 = vadd.f32 0.0, %v1595
  %v1597 = vpop.f32.mrb[0].mxu0
  %v1598 = vadd.f32 0.0, %v1597
  %v1599 = vpop.f32.mrb[0].mxu0
  %v1600 = vadd.f32 0.0, %v1599
  %v1601 = vpop.f32.mrb[0].mxu0
  %v1602 = vadd.f32 0.0, %v1601
  %1603 = vmatprep.mubr.bf16.mxu0 %v1284
  %1604 = vmatmul.mubr.bf16.gmra.mrb[0].mxu0 %v1283
  %v1605 = vpop.f32.mrb[0].mxu0
  %v1606 = vadd.f32 0.0, %v1605
  %v1607 = vpop.f32.mrb[0].mxu0
  %v1608 = vadd.f32 0.0, %v1607
  %v1609 = vpop.f32.mrb[0].mxu0
  %v1610 = vadd.f32 0.0, %v1609
  %v1611 = vpop.f32.mrb[0].mxu0
  %v1612 = vadd.f32 0.0, %v1611
  %1613 = vmatprep.mubr.bf16.mxu0 %v1286
  %1614 = vmatmul.mubr.bf16.gmra.mrb[0].mxu0 %v1285
  %v1615 = vpop.f32.mrb[0].mxu0
  %v1616 = vadd.f32 0.0, %v1615
  %v1617 = vpop.f32.mrb[0].mxu0
  %v1618 = vadd.f32 0.0, %v1617
  %v1619 = vpop.f32.mrb[0].mxu0
  %v1620 = vadd.f32 0.0, %v1619
  %v1621 = vpop.f32.mrb[0].mxu0
  %v1622 = vadd.f32 0.0, %v1621
  %1623 = vmatprep.mubr.bf16.mxu0 %v1288
  %1624 = vmatmul.mubr.bf16.gmra.mrb[0].mxu0 %v1287
  %v1625 = vpop.f32.mrb[0].mxu0
  %v1626 = vadd.f32 0.0, %v1625
  %v1627 = vpop.f32.mrb[0].mxu0
  %v1628 = vadd.f32 0.0, %v1627
  %v1629 = vpop.f32.mrb[0].mxu0
  %v1630 = vadd.f32 0.0, %v1629
  %v1631 = vpop.f32.mrb[0].mxu0
  %v1632 = vadd.f32 0.0, %v1631
  %1633 = vmatprep.mubr.bf16.mxu0 %v1290
  %1634 = vmatmul.mubr.bf16.gmra.mrb[0].mxu0 %v1289
  %v1635 = vpop.f32.mrb[0].mxu0
  %v1636 = vadd.f32 0.0, %v1635
  %v1637 = vpop.f32.mrb[0].mxu0
  %v1638 = vadd.f32 0.0, %v1637
  %v1639 = vpop.f32.mrb[0].mxu0
  %v1640 = vadd.f32 0.0, %v1639
  %v1641 = vpop.f32.mrb[0].mxu0
  %v1642 = vadd.f32 0.0, %v1641
  %1643 = vmatprep.mubr.bf16.mxu0 %v1292
  %1644 = vmatmul.mubr.bf16.gmra.mrb[0].mxu0 %v1291
  %v1645 = vpop.f32.mrb[0].mxu0
  %v1646 = vadd.f32 0.0, %v1645
  %v1647 = vpop.f32.mrb[0].mxu0
  %v1648 = vadd.f32 0.0, %v1647
  %v1649 = vpop.f32.mrb[0].mxu0
  %v1650 = vadd.f32 0.0, %v1649
  %v1651 = vpop.f32.mrb[0].mxu0
  %v1652 = vadd.f32 0.0, %v1651
  %1653 = vdwg.mxu0
  %v1654 = vadd.f32 %v981, %v1516
  %v1655 = vadd.f32 %v983, %v1518
  %v1656 = vadd.f32 %v985, %v1520
  %v1657 = vadd.f32 %v987, %v1522
  %v1658 = vadd.f32 %v991, %v1526
  %v1659 = vadd.f32 %v993, %v1528
  %v1660 = vadd.f32 %v995, %v1530
  %v1661 = vadd.f32 %v997, %v1532
  %v1662 = vadd.f32 %v1001, %v1536
  %v1663 = vadd.f32 %v1003, %v1538
  %v1664 = vadd.f32 %v1005, %v1540
  %v1665 = vadd.f32 %v1007, %v1542
  %v1666 = vadd.f32 %v1011, %v1546
  %v1667 = vadd.f32 %v1013, %v1548
  %v1668 = vadd.f32 %v1015, %v1550
  %v1669 = vadd.f32 %v1017, %v1552
  %v1670 = vadd.f32 %v1021, %v1556
  %v1671 = vadd.f32 %v1023, %v1558
  %v1672 = vadd.f32 %v1025, %v1560
  %v1673 = vadd.f32 %v1027, %v1562
  %v1674 = vadd.f32 %v1031, %v1566
  %v1675 = vadd.f32 %v1033, %v1568
  %v1676 = vadd.f32 %v1035, %v1570
  %v1677 = vadd.f32 %v1037, %v1572
  %v1678 = vadd.f32 %v1041, %v1576
  %v1679 = vadd.f32 %v1043, %v1578
  %v1680 = vadd.f32 %v1045, %v1580
  %v1681 = vadd.f32 %v1047, %v1582
  %v1682 = vadd.f32 %v1051, %v1586
  %v1683 = vadd.f32 %v1053, %v1588
  %v1684 = vadd.f32 %v1055, %v1590
  %v1685 = vadd.f32 %v1057, %v1592
  %v1686 = vadd.f32 %v1061, %v1596
  %v1687 = vadd.f32 %v1063, %v1598
  %v1688 = vadd.f32 %v1065, %v1600
  %v1689 = vadd.f32 %v1067, %v1602
  %v1690 = vadd.f32 %v1071, %v1606
  %v1691 = vadd.f32 %v1073, %v1608
  %v1692 = vadd.f32 %v1075, %v1610
  %v1693 = vadd.f32 %v1077, %v1612
  %v1694 = vadd.f32 %v1081, %v1616
  %v1695 = vadd.f32 %v1083, %v1618
  %v1696 = vadd.f32 %v1085, %v1620
  %v1697 = vadd.f32 %v1087, %v1622
  %v1698 = vadd.f32 %v1091, %v1626
  %v1699 = vadd.f32 %v1093, %v1628
  %v1700 = vadd.f32 %v1095, %v1630
  %v1701 = vadd.f32 %v1097, %v1632
  %v1702 = vadd.f32 %v1101, %v1636
  %v1703 = vadd.f32 %v1103, %v1638
  %v1704 = vadd.f32 %v1105, %v1640
  %v1705 = vadd.f32 %v1107, %v1642
  %v1706 = vadd.f32 %v1111, %v1646
  %v1707 = vadd.f32 %v1113, %v1648
  %v1708 = vadd.f32 %v1115, %v1650
  %v1709 = vadd.f32 %v1117, %v1652
  %v1710 = vld [vmem:[%s2] sm:$0x3]
  %v1712 = vlaneseq
  %v1713 = vshrl.u32 %v1712, 7
  %v1714 = vsub.s32 0, %v1713
  %v1715 = vrot.slane %v1710, %v1714
  %v1716 = vlaneseq
  %v1717 = vshrl.u32 %v1716, 7
  %v1718 = vsub.s32 1, %v1717
  %v1719 = vrot.slane %v1710, %v1718
  %v1722 = vadd.f32 %v1654, %v1715
  %v1723 = vadd.f32 %v1655, %v1719
  %v1724 = vadd.f32 %v1656, %v1715
  %v1725 = vadd.f32 %v1657, %v1719
  %v1726 = vadd.f32 %v1658, %v1715
  %v1727 = vadd.f32 %v1659, %v1719
  %v1728 = vadd.f32 %v1660, %v1715
  %v1729 = vadd.f32 %v1661, %v1719
  %v1730 = vadd.f32 %v1662, %v1715
  %v1731 = vadd.f32 %v1663, %v1719
  %v1732 = vadd.f32 %v1664, %v1715
  %v1733 = vadd.f32 %v1665, %v1719
  %v1734 = vadd.f32 %v1666, %v1715
  %v1735 = vadd.f32 %v1667, %v1719
  %v1736 = vadd.f32 %v1668, %v1715
  %v1737 = vadd.f32 %v1669, %v1719
  %v1738 = vadd.f32 %v1670, %v1715
  %v1739 = vadd.f32 %v1671, %v1719
  %v1740 = vadd.f32 %v1672, %v1715
  %v1741 = vadd.f32 %v1673, %v1719
  %v1742 = vadd.f32 %v1674, %v1715
  %v1743 = vadd.f32 %v1675, %v1719
  %v1744 = vadd.f32 %v1676, %v1715
  %v1745 = vadd.f32 %v1677, %v1719
  %v1746 = vadd.f32 %v1678, %v1715
  %v1747 = vadd.f32 %v1679, %v1719
  %v1748 = vadd.f32 %v1680, %v1715
  %v1749 = vadd.f32 %v1681, %v1719
  %v1750 = vadd.f32 %v1682, %v1715
  %v1751 = vadd.f32 %v1683, %v1719
  %v1752 = vadd.f32 %v1684, %v1715
  %v1753 = vadd.f32 %v1685, %v1719
  %v1754 = vadd.f32 %v1686, %v1715
  %v1755 = vadd.f32 %v1687, %v1719
  %v1756 = vadd.f32 %v1688, %v1715
  %v1757 = vadd.f32 %v1689, %v1719
  %v1758 = vadd.f32 %v1690, %v1715
  %v1759 = vadd.f32 %v1691, %v1719
  %v1760 = vadd.f32 %v1692, %v1715
  %v1761 = vadd.f32 %v1693, %v1719
  %v1762 = vadd.f32 %v1694, %v1715
  %v1763 = vadd.f32 %v1695, %v1719
  %v1764 = vadd.f32 %v1696, %v1715
  %v1765 = vadd.f32 %v1697, %v1719
  %v1766 = vadd.f32 %v1698, %v1715
  %v1767 = vadd.f32 %v1699, %v1719
  %v1768 = vadd.f32 %v1700, %v1715
  %v1769 = vadd.f32 %v1701, %v1719
  %v1770 = vadd.f32 %v1702, %v1715
  %v1771 = vadd.f32 %v1703, %v1719
  %v1772 = vadd.f32 %v1704, %v1715
  %v1773 = vadd.f32 %v1705, %v1719
  %v1774 = vadd.f32 %v1706, %v1715
  %v1775 = vadd.f32 %v1707, %v1719
  %v1776 = vadd.f32 %v1708, %v1715
  %v1777 = vadd.f32 %v1709, %v1719
  %v1778 = vmax.f32 %v1722, 0.0
  %v1779 = vmax.f32 %v1723, 0.0
  %v1780 = vmax.f32 %v1724, 0.0
  %v1781 = vmax.f32 %v1725, 0.0
  %v1782 = vmax.f32 %v1726, 0.0
  %v1783 = vmax.f32 %v1727, 0.0
  %v1784 = vmax.f32 %v1728, 0.0
  %v1785 = vmax.f32 %v1729, 0.0
  %v1786 = vmax.f32 %v1730, 0.0
  %v1787 = vmax.f32 %v1731, 0.0
  %v1788 = vmax.f32 %v1732, 0.0
  %v1789 = vmax.f32 %v1733, 0.0
  %v1790 = vmax.f32 %v1734, 0.0
  %v1791 = vmax.f32 %v1735, 0.0
  %v1792 = vmax.f32 %v1736, 0.0
  %v1793 = vmax.f32 %v1737, 0.0
  %v1794 = vmax.f32 %v1738, 0.0
  %v1795 = vmax.f32 %v1739, 0.0
  %v1796 = vmax.f32 %v1740, 0.0
  %v1797 = vmax.f32 %v1741, 0.0
  %v1798 = vmax.f32 %v1742, 0.0
  %v1799 = vmax.f32 %v1743, 0.0
  %v1800 = vmax.f32 %v1744, 0.0
  %v1801 = vmax.f32 %v1745, 0.0
  %v1802 = vmax.f32 %v1746, 0.0
  %v1803 = vmax.f32 %v1747, 0.0
  %v1804 = vmax.f32 %v1748, 0.0
  %v1805 = vmax.f32 %v1749, 0.0
  %v1806 = vmax.f32 %v1750, 0.0
  %v1807 = vmax.f32 %v1751, 0.0
  %v1808 = vmax.f32 %v1752, 0.0
  %v1809 = vmax.f32 %v1753, 0.0
  %v1810 = vmax.f32 %v1754, 0.0
  %v1811 = vmax.f32 %v1755, 0.0
  %v1812 = vmax.f32 %v1756, 0.0
  %v1813 = vmax.f32 %v1757, 0.0
  %v1814 = vmax.f32 %v1758, 0.0
  %v1815 = vmax.f32 %v1759, 0.0
  %v1816 = vmax.f32 %v1760, 0.0
  %v1817 = vmax.f32 %v1761, 0.0
  %v1818 = vmax.f32 %v1762, 0.0
  %v1819 = vmax.f32 %v1763, 0.0
  %v1820 = vmax.f32 %v1764, 0.0
  %v1821 = vmax.f32 %v1765, 0.0
  %v1822 = vmax.f32 %v1766, 0.0
  %v1823 = vmax.f32 %v1767, 0.0
  %v1824 = vmax.f32 %v1768, 0.0
  %v1825 = vmax.f32 %v1769, 0.0
  %v1826 = vmax.f32 %v1770, 0.0
  %v1827 = vmax.f32 %v1771, 0.0
  %v1828 = vmax.f32 %v1772, 0.0
  %v1829 = vmax.f32 %v1773, 0.0
  %v1830 = vmax.f32 %v1774, 0.0
  %v1831 = vmax.f32 %v1775, 0.0
  %v1832 = vmax.f32 %v1776, 0.0
  %v1833 = vmax.f32 %v1777, 0.0
  %v1834 = vmax.f32 %v1778, %v1779
  %v1835 = vmax.f32 %v1780, %v1781
  %v1836 = vmax.f32 %v1782, %v1783
  %v1837 = vmax.f32 %v1784, %v1785
  %v1838 = vmax.f32 %v1786, %v1787
  %v1839 = vmax.f32 %v1788, %v1789
  %v1840 = vmax.f32 %v1790, %v1791
  %v1841 = vmax.f32 %v1792, %v1793
  %v1842 = vmax.f32 %v1794, %v1795
  %v1843 = vmax.f32 %v1796, %v1797
  %v1844 = vmax.f32 %v1798, %v1799
  %v1845 = vmax.f32 %v1800, %v1801
  %v1846 = vmax.f32 %v1802, %v1803
  %v1847 = vmax.f32 %v1804, %v1805
  %v1848 = vmax.f32 %v1806, %v1807
  %v1849 = vmax.f32 %v1808, %v1809
  %v1850 = vmax.f32 %v1810, %v1811
  %v1851 = vmax.f32 %v1812, %v1813
  %v1852 = vmax.f32 %v1814, %v1815
  %v1853 = vmax.f32 %v1816, %v1817
  %v1854 = vmax.f32 %v1818, %v1819
  %v1855 = vmax.f32 %v1820, %v1821
  %v1856 = vmax.f32 %v1822, %v1823
  %v1857 = vmax.f32 %v1824, %v1825
  %v1858 = vmax.f32 %v1826, %v1827
  %v1859 = vmax.f32 %v1828, %v1829
  %v1860 = vmax.f32 %v1830, %v1831
  %v1861 = vmax.f32 %v1832, %v1833
  %v1862 = vpack.c.bf16 %v1835, %v1834
  %v1863 = vpack.c.bf16 %v1837, %v1836
  %v1864 = vpack.c.bf16 %v1839, %v1838
  %v1865 = vpack.c.bf16 %v1841, %v1840
  %v1866 = vpack.c.bf16 %v1843, %v1842
  %v1867 = vpack.c.bf16 %v1845, %v1844
  %v1868 = vpack.c.bf16 %v1847, %v1846
  %v1869 = vpack.c.bf16 %v1849, %v1848
  %v1870 = vpack.c.bf16 %v1851, %v1850
  %v1871 = vpack.c.bf16 %v1853, %v1852
  %v1872 = vpack.c.bf16 %v1855, %v1854
  %v1873 = vpack.c.bf16 %v1857, %v1856
  %v1874 = vpack.c.bf16 %v1859, %v1858
  %v1875 = vpack.c.bf16 %v1861, %v1860
  %v1876 = vld [vmem:[%s3] sm:$0xff]
  %v1877 = vld [vmem:[%s3 + $0x8] sm:$0xff]
  %v1878 = vld [vmem:[%s3 + $0x10] sm:$0xff]
  %v1879 = vld [vmem:[%s3 + $0x18] sm:$0xff]
  %v1880 = vld [vmem:[%s3 + $0x20] sm:$0xff]
  %v1881 = vld [vmem:[%s3 + $0x28] sm:$0xff]
  %v1882 = vld [vmem:[%s3 + $0x30] sm:$0xff]
  %v1883 = vld [vmem:[%s3 + $0x38] sm:$0xff]
  %v1884 = vld [vmem:[%s3 + $0x40] sm:$0xff]
  %v1885 = vld [vmem:[%s3 + $0x48] sm:$0xff]
  %v1886 = vld [vmem:[%s3 + $0x50] sm:$0xff]
  %v1887 = vld [vmem:[%s3 + $0x58] sm:$0xff]
  %v1888 = vld [vmem:[%s3 + $0x60] sm:$0xff]
  %v1889 = vld [vmem:[%s3 + $0x68] sm:$0xff]
  %v1904 = vunpack.c.l.b16 %v1876
  %v1905 = vunpack.c.h.b16 %v1876
  %v1906 = vunpack.c.l.b16 %v1877
  %v1907 = vunpack.c.h.b16 %v1877
  %v1908 = vunpack.c.l.b16 %v1878
  %v1909 = vunpack.c.h.b16 %v1878
  %v1910 = vunpack.c.l.b16 %v1879
  %v1911 = vunpack.c.h.b16 %v1879
  %v1912 = vunpack.c.l.b16 %v1880
  %v1913 = vunpack.c.h.b16 %v1880
  %v1914 = vunpack.c.l.b16 %v1881
  %v1915 = vunpack.c.h.b16 %v1881
  %v1916 = vunpack.c.l.b16 %v1882
  %v1917 = vunpack.c.h.b16 %v1882
  %v1918 = vunpack.c.l.b16 %v1883
  %v1919 = vunpack.c.h.b16 %v1883
  %v1920 = vunpack.c.l.b16 %v1884
  %v1921 = vunpack.c.h.b16 %v1884
  %v1922 = vunpack.c.l.b16 %v1885
  %v1923 = vunpack.c.h.b16 %v1885
  %v1924 = vunpack.c.l.b16 %v1886
  %v1925 = vunpack.c.h.b16 %v1886
  %v1926 = vunpack.c.l.b16 %v1887
  %v1927 = vunpack.c.h.b16 %v1887
  %v1928 = vunpack.c.l.b16 %v1888
  %v1929 = vunpack.c.h.b16 %v1888
  %v1930 = vunpack.c.l.b16 %v1889
  %v1931 = vunpack.c.h.b16 %v1889
  %v1932 = vpack.c.b16 %v1906, %v1904
  %v1933 = vpack.c.b16 %v1907, %v1905
  %v1934 = vpack.c.b16 %v1910, %v1908
  %v1935 = vpack.c.b16 %v1911, %v1909
  %v1936 = vpack.c.b16 %v1914, %v1912
  %v1937 = vpack.c.b16 %v1915, %v1913
  %v1938 = vpack.c.b16 %v1918, %v1916
  %v1939 = vpack.c.b16 %v1919, %v1917
  %v1940 = vpack.c.b16 %v1922, %v1920
  %v1941 = vpack.c.b16 %v1923, %v1921
  %v1942 = vpack.c.b16 %v1926, %v1924
  %v1943 = vpack.c.b16 %v1927, %v1925
  %v1944 = vpack.c.b16 %v1930, %v1928
  %v1945 = vpack.c.b16 %v1931, %v1929
  %vm1953 = vcmask 785408
  %v1955 = vsel %vm1953, %v1933, 0
  %v1958 = vsel %vm1953, %v1935, 0
  %v1961 = vsel %vm1953, %v1937, 0
  %v1964 = vsel %vm1953, %v1939, 0
  %v1967 = vsel %vm1953, %v1941, 0
  %v1970 = vsel %vm1953, %v1943, 0
  %v1973 = vsel %vm1953, %v1945, 0
  %1975 = vmatprep.subr.bf16.mxu0 0
  %1976 = vmatpush1.bf16.msra.mxu0 %v1862
  %1977 = vmatprep.subr.bf16.mxu0 0
  %1978 = vmatpush1.bf16.msra.mxu0 %v1863
  %1979 = vmatprep.subr.bf16.mxu0 0
  %1980 = vmatpush1.bf16.msra.mxu0 %v1864
  %1981 = vmatprep.subr.bf16.mxu0 0
  %1982 = vmatpush1.bf16.msra.mxu0 %v1865
  %1983 = vmatprep.subr.bf16.mxu0 0
  %1984 = vmatpush1.bf16.msra.mxu0 %v1866
  %1985 = vmatprep.subr.bf16.mxu0 0
  %1986 = vmatpush1.bf16.msra.mxu0 %v1867
  %1987 = vmatprep.subr.bf16.mxu0 0
  %1988 = vmatpush1.bf16.msra.mxu0 %v1868
  %1989 = vmatprep.subr.bf16.mxu0 0
  %1990 = vmatpush1.bf16.msra.mxu0 %v1869
  %1991 = vmatprep.subr.bf16.mxu0 0
  %1992 = vmatpush1.bf16.msra.mxu0 %v1870
  %1993 = vmatprep.subr.bf16.mxu0 0
  %1994 = vmatpush1.bf16.msra.mxu0 %v1871
  %1995 = vmatprep.subr.bf16.mxu0 0
  %1996 = vmatpush1.bf16.msra.mxu0 %v1872
  %1997 = vmatprep.subr.bf16.mxu0 0
  %1998 = vmatpush1.bf16.msra.mxu0 %v1873
  %1999 = vmatprep.subr.bf16.mxu0 0
  %2000 = vmatpush1.bf16.msra.mxu0 %v1874
  %2001 = vmatprep.subr.bf16.mxu0 0
  %2002 = vmatpush1.bf16.msra.mxu0 %v1875
  %2003 = vmatprep.subr.bf16.mxu0 0
  %2004 = vmatpush1.bf16.msra.mxu0 0
  %2005 = vmatprep.subr.bf16.mxu0 0
  %2006 = vmatpush1.bf16.msra.mxu0 0
  %2007 = vmatprep.mubr.bf16.mxu0 %v1955
  %2008 = vmatmul.mubr.bf16.gmra.mrb[0].mxu0 %v1932
  %v2009 = vpop.f32.mrb[0].mxu0
  %v2010 = vadd.f32 0.0, %v2009
  %v2011 = vpop.f32.mrb[0].mxu0
  %v2012 = vpop.f32.mrb[0].mxu0
  %v2013 = vadd.f32 0.0, %v2012
  %v2014 = vpop.f32.mrb[0].mxu0
  %2015 = vmatprep.mubr.bf16.mxu0 %v1958
  %2016 = vmatmul.mubr.bf16.gmra.mrb[0].mxu0 %v1934
  %v2017 = vpop.f32.mrb[0].mxu0
  %v2018 = vadd.f32 0.0, %v2017
  %v2019 = vpop.f32.mrb[0].mxu0
  %v2020 = vpop.f32.mrb[0].mxu0
  %v2021 = vadd.f32 0.0, %v2020
  %v2022 = vpop.f32.mrb[0].mxu0
  %2023 = vmatprep.mubr.bf16.mxu0 %v1961
  %2024 = vmatmul.mubr.bf16.gmra.mrb[0].mxu0 %v1936
  %v2025 = vpop.f32.mrb[0].mxu0
  %v2026 = vadd.f32 0.0, %v2025
  %v2027 = vpop.f32.mrb[0].mxu0
  %v2028 = vpop.f32.mrb[0].mxu0
  %v2029 = vadd.f32 0.0, %v2028
  %v2030 = vpop.f32.mrb[0].mxu0
  %2031 = vmatprep.mubr.bf16.mxu0 %v1964
  %2032 = vmatmul.mubr.bf16.gmra.mrb[0].mxu0 %v1938
  %v2033 = vpop.f32.mrb[0].mxu0
  %v2034 = vadd.f32 0.0, %v2033
  %v2035 = vpop.f32.mrb[0].mxu0
  %v2036 = vpop.f32.mrb[0].mxu0
  %v2037 = vadd.f32 0.0, %v2036
  %v2038 = vpop.f32.mrb[0].mxu0
  %2039 = vmatprep.mubr.bf16.mxu0 %v1967
  %2040 = vmatmul.mubr.bf16.gmra.mrb[0].mxu0 %v1940
  %v2041 = vpop.f32.mrb[0].mxu0
  %v2042 = vadd.f32 0.0, %v2041
  %v2043 = vpop.f32.mrb[0].mxu0
  %v2044 = vpop.f32.mrb[0].mxu0
  %v2045 = vadd.f32 0.0, %v2044
  %v2046 = vpop.f32.mrb[0].mxu0
  %2047 = vmatprep.mubr.bf16.mxu0 %v1970
  %2048 = vmatmul.mubr.bf16.gmra.mrb[0].mxu0 %v1942
  %v2049 = vpop.f32.mrb[0].mxu0
  %v2050 = vadd.f32 0.0, %v2049
  %v2051 = vpop.f32.mrb[0].mxu0
  %v2052 = vpop.f32.mrb[0].mxu0
  %v2053 = vadd.f32 0.0, %v2052
  %v2054 = vpop.f32.mrb[0].mxu0
  %2055 = vmatprep.mubr.bf16.mxu0 %v1973
  %2056 = vmatmul.mubr.bf16.gmra.mrb[0].mxu0 %v1944
  %v2057 = vpop.f32.mrb[0].mxu0
  %v2058 = vadd.f32 0.0, %v2057
  %v2059 = vpop.f32.mrb[0].mxu0
  %v2060 = vpop.f32.mrb[0].mxu0
  %v2061 = vadd.f32 0.0, %v2060
  %v2062 = vpop.f32.mrb[0].mxu0
  %2063 = vdwg.mxu0
  %v2064 = vld [vmem:[%s4] sm:$0xff]
  %v2065 = vld [vmem:[%s4 + $0x8] sm:$0xff]
  %v2066 = vld [vmem:[%s4 + $0x10] sm:$0xff]
  %v2067 = vld [vmem:[%s4 + $0x18] sm:$0xff]
  %v2068 = vld [vmem:[%s4 + $0x20] sm:$0xff]
  %v2069 = vld [vmem:[%s4 + $0x28] sm:$0xff]
  %v2070 = vld [vmem:[%s4 + $0x30] sm:$0xff]
  %v2071 = vld [vmem:[%s4 + $0x38] sm:$0xff]
  %v2072 = vld [vmem:[%s4 + $0x40] sm:$0xff]
  %v2073 = vld [vmem:[%s4 + $0x48] sm:$0xff]
  %v2074 = vld [vmem:[%s4 + $0x50] sm:$0xff]
  %v2075 = vld [vmem:[%s4 + $0x58] sm:$0xff]
  %v2076 = vld [vmem:[%s4 + $0x60] sm:$0xff]
  %v2077 = vld [vmem:[%s4 + $0x68] sm:$0xff]
  %v2092 = vunpack.c.l.b16 %v2064
  %v2093 = vunpack.c.h.b16 %v2064
  %v2094 = vunpack.c.l.b16 %v2065
  %v2095 = vunpack.c.h.b16 %v2065
  %v2096 = vunpack.c.l.b16 %v2066
  %v2097 = vunpack.c.h.b16 %v2066
  %v2098 = vunpack.c.l.b16 %v2067
  %v2099 = vunpack.c.h.b16 %v2067
  %v2100 = vunpack.c.l.b16 %v2068
  %v2101 = vunpack.c.h.b16 %v2068
  %v2102 = vunpack.c.l.b16 %v2069
  %v2103 = vunpack.c.h.b16 %v2069
  %v2104 = vunpack.c.l.b16 %v2070
  %v2105 = vunpack.c.h.b16 %v2070
  %v2106 = vunpack.c.l.b16 %v2071
  %v2107 = vunpack.c.h.b16 %v2071
  %v2108 = vunpack.c.l.b16 %v2072
  %v2109 = vunpack.c.h.b16 %v2072
  %v2110 = vunpack.c.l.b16 %v2073
  %v2111 = vunpack.c.h.b16 %v2073
  %v2112 = vunpack.c.l.b16 %v2074
  %v2113 = vunpack.c.h.b16 %v2074
  %v2114 = vunpack.c.l.b16 %v2075
  %v2115 = vunpack.c.h.b16 %v2075
  %v2116 = vunpack.c.l.b16 %v2076
  %v2117 = vunpack.c.h.b16 %v2076
  %v2118 = vunpack.c.l.b16 %v2077
  %v2119 = vunpack.c.h.b16 %v2077
  %v2120 = vpack.c.b16 %v2094, %v2092
  %v2121 = vpack.c.b16 %v2095, %v2093
  %v2122 = vpack.c.b16 %v2098, %v2096
  %v2123 = vpack.c.b16 %v2099, %v2097
  %v2124 = vpack.c.b16 %v2102, %v2100
  %v2125 = vpack.c.b16 %v2103, %v2101
  %v2126 = vpack.c.b16 %v2106, %v2104
  %v2127 = vpack.c.b16 %v2107, %v2105
  %v2128 = vpack.c.b16 %v2110, %v2108
  %v2129 = vpack.c.b16 %v2111, %v2109
  %v2130 = vpack.c.b16 %v2114, %v2112
  %v2131 = vpack.c.b16 %v2115, %v2113
  %v2132 = vpack.c.b16 %v2118, %v2116
  %v2133 = vpack.c.b16 %v2119, %v2117
  %v2142 = vsel %vm1953, %v2121, 0
  %v2145 = vsel %vm1953, %v2123, 0
  %v2148 = vsel %vm1953, %v2125, 0
  %v2151 = vsel %vm1953, %v2127, 0
  %v2154 = vsel %vm1953, %v2129, 0
  %v2157 = vsel %vm1953, %v2131, 0
  %v2160 = vsel %vm1953, %v2133, 0
  %2162 = vmatprep.subr.bf16.mxu0 0
  %2163 = vmatpush1.bf16.msra.mxu0 %v1862
  %2164 = vmatprep.subr.bf16.mxu0 0
  %2165 = vmatpush1.bf16.msra.mxu0 %v1863
  %2166 = vmatprep.subr.bf16.mxu0 0
  %2167 = vmatpush1.bf16.msra.mxu0 %v1864
  %2168 = vmatprep.subr.bf16.mxu0 0
  %2169 = vmatpush1.bf16.msra.mxu0 %v1865
  %2170 = vmatprep.subr.bf16.mxu0 0
  %2171 = vmatpush1.bf16.msra.mxu0 %v1866
  %2172 = vmatprep.subr.bf16.mxu0 0
  %2173 = vmatpush1.bf16.msra.mxu0 %v1867
  %2174 = vmatprep.subr.bf16.mxu0 0
  %2175 = vmatpush1.bf16.msra.mxu0 %v1868
  %2176 = vmatprep.subr.bf16.mxu0 0
  %2177 = vmatpush1.bf16.msra.mxu0 %v1869
  %2178 = vmatprep.subr.bf16.mxu0 0
  %2179 = vmatpush1.bf16.msra.mxu0 %v1870
  %2180 = vmatprep.subr.bf16.mxu0 0
  %2181 = vmatpush1.bf16.msra.mxu0 %v1871
  %2182 = vmatprep.subr.bf16.mxu0 0
  %2183 = vmatpush1.bf16.msra.mxu0 %v1872
  %2184 = vmatprep.subr.bf16.mxu0 0
  %2185 = vmatpush1.bf16.msra.mxu0 %v1873
  %2186 = vmatprep.subr.bf16.mxu0 0
  %2187 = vmatpush1.bf16.msra.mxu0 %v1874
  %2188 = vmatprep.subr.bf16.mxu0 0
  %2189 = vmatpush1.bf16.msra.mxu0 %v1875
  %2190 = vmatprep.subr.bf16.mxu0 0
  %2191 = vmatpush1.bf16.msra.mxu0 0
  %2192 = vmatprep.subr.bf16.mxu0 0
  %2193 = vmatpush1.bf16.msra.mxu0 0
  %2194 = vmatprep.mubr.bf16.mxu0 %v2142
  %2195 = vmatmul.mubr.bf16.gmra.mrb[0].mxu0 %v2120
  %v2196 = vpop.f32.mrb[0].mxu0
  %v2197 = vadd.f32 0.0, %v2196
  %v2198 = vpop.f32.mrb[0].mxu0
  %v2199 = vpop.f32.mrb[0].mxu0
  %v2200 = vadd.f32 0.0, %v2199
  %v2201 = vpop.f32.mrb[0].mxu0
  %2202 = vmatprep.mubr.bf16.mxu0 %v2145
  %2203 = vmatmul.mubr.bf16.gmra.mrb[0].mxu0 %v2122
  %v2204 = vpop.f32.mrb[0].mxu0
  %v2205 = vadd.f32 0.0, %v2204
  %v2206 = vpop.f32.mrb[0].mxu0
  %v2207 = vpop.f32.mrb[0].mxu0
  %v2208 = vadd.f32 0.0, %v2207
  %v2209 = vpop.f32.mrb[0].mxu0
  %2210 = vmatprep.mubr.bf16.mxu0 %v2148
  %2211 = vmatmul.mubr.bf16.gmra.mrb[0].mxu0 %v2124
  %v2212 = vpop.f32.mrb[0].mxu0
  %v2213 = vadd.f32 0.0, %v2212
  %v2214 = vpop.f32.mrb[0].mxu0
  %v2215 = vpop.f32.mrb[0].mxu0
  %v2216 = vadd.f32 0.0, %v2215
  %v2217 = vpop.f32.mrb[0].mxu0
  %2218 = vmatprep.mubr.bf16.mxu0 %v2151
  %2219 = vmatmul.mubr.bf16.gmra.mrb[0].mxu0 %v2126
  %v2220 = vpop.f32.mrb[0].mxu0
  %v2221 = vadd.f32 0.0, %v2220
  %v2222 = vpop.f32.mrb[0].mxu0
  %v2223 = vpop.f32.mrb[0].mxu0
  %v2224 = vadd.f32 0.0, %v2223
  %v2225 = vpop.f32.mrb[0].mxu0
  %2226 = vmatprep.mubr.bf16.mxu0 %v2154
  %2227 = vmatmul.mubr.bf16.gmra.mrb[0].mxu0 %v2128
  %v2228 = vpop.f32.mrb[0].mxu0
  %v2229 = vadd.f32 0.0, %v2228
  %v2230 = vpop.f32.mrb[0].mxu0
  %v2231 = vpop.f32.mrb[0].mxu0
  %v2232 = vadd.f32 0.0, %v2231
  %v2233 = vpop.f32.mrb[0].mxu0
  %2234 = vmatprep.mubr.bf16.mxu0 %v2157
  %2235 = vmatmul.mubr.bf16.gmra.mrb[0].mxu0 %v2130
  %v2236 = vpop.f32.mrb[0].mxu0
  %v2237 = vadd.f32 0.0, %v2236
  %v2238 = vpop.f32.mrb[0].mxu0
  %v2239 = vpop.f32.mrb[0].mxu0
  %v2240 = vadd.f32 0.0, %v2239
  %v2241 = vpop.f32.mrb[0].mxu0
  %2242 = vmatprep.mubr.bf16.mxu0 %v2160
  %2243 = vmatmul.mubr.bf16.gmra.mrb[0].mxu0 %v2132
  %v2244 = vpop.f32.mrb[0].mxu0
  %v2245 = vadd.f32 0.0, %v2244
  %v2246 = vpop.f32.mrb[0].mxu0
  %v2247 = vpop.f32.mrb[0].mxu0
  %v2248 = vadd.f32 0.0, %v2247
  %v2249 = vpop.f32.mrb[0].mxu0
  %2250 = vdwg.mxu0
  %v2251 = vmax.f32 %v2010, %v2197
  %v2252 = vmax.f32 %v2013, %v2200
  %v2253 = vmax.f32 %v2018, %v2205
  %v2254 = vmax.f32 %v2021, %v2208
  %v2255 = vmax.f32 %v2026, %v2213
  %v2256 = vmax.f32 %v2029, %v2216
  %v2257 = vmax.f32 %v2034, %v2221
  %v2258 = vmax.f32 %v2037, %v2224
  %v2259 = vmax.f32 %v2042, %v2229
  %v2260 = vmax.f32 %v2045, %v2232
  %v2261 = vmax.f32 %v2050, %v2237
  %v2262 = vmax.f32 %v2053, %v2240
  %v2263 = vmax.f32 %v2058, %v2245
  %v2264 = vmax.f32 %v2061, %v2248
  %v2265 = vpack.c.bf16 %v2252, %v2251
  %v2266 = vpack.c.bf16 %v2254, %v2253
  %v2267 = vpack.c.bf16 %v2256, %v2255
  %v2268 = vpack.c.bf16 %v2258, %v2257
  %v2269 = vpack.c.bf16 %v2260, %v2259
  %v2270 = vpack.c.bf16 %v2262, %v2261
  %v2271 = vpack.c.bf16 %v2264, %v2263
  %vm2274 = vcmask 1045504
  %v2275 = vrot.slane %v2265, 2
  %v2276 = vrot.slane %v2266, 2
  %v2277 = vsel %vm2274, %v2275, %v2276
  %vm2279 = vcmask 1043456
  %v2280 = vrot.slane %v2266, 4
  %v2281 = vrot.slane %v2267, 4
  %v2282 = vsel %vm2279, %v2280, %v2281
  %vm2284 = vcmask 1041408
  %v2285 = vrot.slane %v2267, 6
  %v2286 = vrot.slane %v2268, 6
  %v2287 = vsel %vm2284, %v2285, %v2286
  %v2289 = vrot.slane %v2269, 2
  %v2291 = vrot.slane %v2270, 4
  %v2293 = vrot.slane %v2271, 6
  %vm2294 = vcmask 1044480
  %v2297 = vsel %vm2294, %v2265, %v2277
  %vm2299 = vcmask 1041408
  %v2302 = vsel %vm2299, %v2276, %v2282
  %vm2303 = vcmask 1046528
  %v2305 = vsel %vm2303, %v2302, %v2285
  %vm2307 = vcmask 1043456
  %v2310 = vsel %vm2307, %v2287, %v2268
  %vm2312 = vcmask 1040384
  %v2315 = vsel %vm2312, %v2269, %v2289
  %vm2316 = vcmask 1045504
  %v2318 = vsel %vm2316, %v2315, %v2291
  %vm2320 = vcmask 1042432
  %v2322 = vsel %vm2320, %v2291, %v2293
  %v2324 = vshrl.u32 %v2265, 16
  %v2326 = vshll.u32 %v2265, 16
  %v2328 = vrot.slane %v2326, 1
  %v2329 = vor.u32 %v2324, %v2328
  %vm2330 = vsmask.f32 5376
  %v2331 = vrot.slane %v2324, 2
  %v2333 = vshrl.u32 %v2266, 16
  %v2335 = vrot.slane %v2333, 2
  %v2336 = vshll.u32 %v2266, 16
  %v2338 = vrot.slane %v2336, 3
  %v2339 = vor.u32 %v2335, %v2338
  %v2340 = vsel %vm2330, %v2331, %v2339
  %vm2341 = vsmask.f32 3328
  %v2342 = vrot.slane %v2333, 4
  %v2343 = vrot.slane %v2336, 5
  %v2344 = vor.u32 %v2342, %v2343
  %v2346 = vshrl.u32 %v2267, 16
  %v2348 = vrot.slane %v2346, 4
  %v2349 = vshll.u32 %v2267, 16
  %v2351 = vrot.slane %v2349, 5
  %v2352 = vor.u32 %v2348, %v2351
  %v2353 = vsel %vm2341, %v2344, %v2352
  %vm2354 = vsmask.f32 1280
  %v2355 = vrot.slane %v2346, 6
  %v2356 = vrot.slane %v2349, 7
  %v2357 = vor.u32 %v2355, %v2356
  %v2358 = vshrl.u32 %v2268, 16
  %v2360 = vrot.slane %v2358, 6
  %v2361 = vshll.u32 %v2268, 16
  %v2363 = vrot.slane %v2361, 7
  %v2364 = vor.u32 %v2360, %v2363
  %v2365 = vsel %vm2354, %v2357, %v2364
  %vm2366 = vsmask.f32 7424
  %v2367 = vrot.slane %v2361, 1
  %v2368 = vor.u32 %v2358, %v2367
  %v2369 = vshll.u32 %v2269, 16
  %v2371 = vrot.slane %v2369, 1
  %v2372 = vsel %vm2366, %v2368, %v2371
  %v2373 = vshrl.u32 %v2269, 16
  %v2375 = vor.u32 %v2373, %v2371
  %v2376 = vrot.slane %v2373, 2
  %v2377 = vrot.slane %v2369, 3
  %v2378 = vor.u32 %v2376, %v2377
  %v2380 = vshll.u32 %v2270, 16
  %v2382 = vrot.slane %v2380, 3
  %v2383 = vsel %vm2330, %v2378, %v2382
  %v2384 = vshrl.u32 %v2270, 16
  %v2386 = vrot.slane %v2384, 4
  %v2387 = vrot.slane %v2380, 5
  %v2388 = vor.u32 %v2386, %v2387
  %v2390 = vshrl.u32 %v2271, 16
  %v2392 = vrot.slane %v2390, 6
  %v2393 = vshll.u32 %v2271, 16
  %v2395 = vrot.slane %v2393, 7
  %v2396 = vor.u32 %v2392, %v2395
  %v2399 = vsel %vm2294, %v2329, %v2340
  %v2403 = vsel %vm2299, %v2339, %v2353
  %v2405 = vsel %vm2303, %v2403, %v2357
  %v2409 = vsel %vm2307, %v2365, %v2372
  %v2413 = vsel %vm2312, %v2375, %v2383
  %v2415 = vsel %vm2316, %v2413, %v2388
  %v2418 = vsel %vm2320, %v2388, %v2396
  %v2420 = vld [vmem:[%s5] sm:$0xff]
  %v2421 = vld [vmem:[%s5 + $0x8] sm:$0xff]
  %v2422 = vld [vmem:[%s5 + $0x10] sm:$0xff]
  %v2423 = vld [vmem:[%s5 + $0x18] sm:$0xff]
  %v2424 = vld [vmem:[%s5 + $0x20] sm:$0xff]
  %v2425 = vld [vmem:[%s5 + $0x28] sm:$0xff]
  %v2426 = vld [vmem:[%s5 + $0x30] sm:$0xff]
  %v2427 = vld [vmem:[%s5 + $0x38] sm:$0xff]
  %v2428 = vld [vmem:[%s5 + $0x40] sm:$0xff]
  %v2429 = vld [vmem:[%s5 + $0x48] sm:$0xff]
  %v2430 = vld [vmem:[%s5 + $0x50] sm:$0xff]
  %v2431 = vld [vmem:[%s5 + $0x58] sm:$0xff]
  %v2432 = vld [vmem:[%s5 + $0x60] sm:$0xff]
  %v2433 = vld [vmem:[%s5 + $0x68] sm:$0xff]
  %v2434 = vld [vmem:[%s5 + $0x70] sm:$0xff]
  %v2435 = vld [vmem:[%s5 + $0x78] sm:$0xff]
  %v2436 = vld [vmem:[%s5 + $0x80] sm:$0xff]
  %v2437 = vld [vmem:[%s5 + $0x88] sm:$0xff]
  %v2438 = vld [vmem:[%s5 + $0x90] sm:$0xff]
  %v2439 = vld [vmem:[%s5 + $0x98] sm:$0xff]
  %v2440 = vld [vmem:[%s5 + $0xa0] sm:$0xff]
  %v2441 = vld [vmem:[%s5 + $0xa8] sm:$0xff]
  %v2442 = vld [vmem:[%s5 + $0xb0] sm:$0xff]
  %v2443 = vld [vmem:[%s5 + $0xb8] sm:$0xff]
  %v2444 = vld [vmem:[%s5 + $0xc0] sm:$0xff]
  %v2445 = vld [vmem:[%s5 + $0xc8] sm:$0xff]
  %v2446 = vld [vmem:[%s5 + $0xd0] sm:$0xff]
  %v2447 = vld [vmem:[%s5 + $0xd8] sm:$0xff]
  %v2448 = vld [vmem:[%s5 + $0xe0] sm:$0xff]
  %v2449 = vld [vmem:[%s5 + $0xe8] sm:$0xff]
  %v2450 = vld [vmem:[%s5 + $0xf0] sm:$0xff]
  %v2451 = vld [vmem:[%s5 + $0xf8] sm:$0xff]
  %v2452 = vrot.slane %v2265, 1
  %v2453 = vrot.slane %v2266, 3
  %vm2454 = vcmask 1042432
  %v2455 = vrot.slane %v2266, 5
  %v2456 = vrot.slane %v2267, 5
  %v2457 = vsel %vm2454, %v2455, %v2456
  %vm2458 = vcmask 1040384
  %v2459 = vrot.slane %v2267, 7
  %v2460 = vrot.slane %v2268, 7
  %v2461 = vsel %vm2458, %v2459, %v2460
  %vm2462 = vcmask 1046528
  %v2463 = vrot.slane %v2268, 1
  %v2464 = vrot.slane %v2269, 1
  %v2465 = vsel %vm2462, %v2463, %v2464
  %vm2466 = vcmask 1044480
  %v2467 = vrot.slane %v2269, 3
  %v2468 = vrot.slane %v2270, 3
  %v2469 = vsel %vm2466, %v2467, %v2468
  %v2470 = vrot.slane %v2270, 5
  %v2471 = vrot.slane %v2271, 7
  %v2474 = vsel %vm2294, %v2452, %v2453
  %v2477 = vsel %vm2299, %v2453, %v2457
  %v2479 = vsel %vm2303, %v2477, %v2459
  %v2483 = vsel %vm2307, %v2461, %v2465
  %v2487 = vsel %vm2312, %v2464, %v2469
  %v2489 = vsel %vm2316, %v2487, %v2470
  %v2492 = vsel %vm2320, %v2470, %v2471
  %v2494 = vrot.slane %v2324, 1
  %v2495 = vrot.slane %v2326, 2
  %v2496 = vor.u32 %v2494, %v2495
  %v2497 = vrot.slane %v2333, 3
  %v2498 = vrot.slane %v2336, 4
  %v2499 = vor.u32 %v2497, %v2498
  %vm2500 = vsmask.f32 2304
  %v2501 = vrot.slane %v2333, 5
  %v2502 = vrot.slane %v2346, 5
  %v2503 = vrot.slane %v2349, 6
  %v2504 = vor.u32 %v2502, %v2503
  %v2505 = vsel %vm2500, %v2501, %v2504
  %vm2506 = vsmask.f32 256
  %v2507 = vrot.slane %v2346, 7
  %v2508 = vor.u32 %v2507, %v2349
  %v2509 = vrot.slane %v2358, 7
  %v2510 = vor.u32 %v2509, %v2361
  %v2511 = vsel %vm2506, %v2507, %v2510
  %vm2512 = vsmask.f32 6400
  %v2513 = vrot.slane %v2358, 1
  %v2514 = vrot.slane %v2361, 2
  %v2515 = vor.u32 %v2513, %v2514
  %v2516 = vrot.slane %v2373, 1
  %v2517 = vrot.slane %v2369, 2
  %v2518 = vor.u32 %v2516, %v2517
  %v2519 = vsel %vm2512, %v2515, %v2518
  %vm2520 = vsmask.f32 4352
  %v2521 = vrot.slane %v2373, 3
  %v2522 = vrot.slane %v2369, 4
  %v2523 = vor.u32 %v2521, %v2522
  %v2524 = vrot.slane %v2384, 3
  %v2525 = vrot.slane %v2380, 4
  %v2526 = vor.u32 %v2524, %v2525
  %v2527 = vsel %vm2520, %v2523, %v2526
  %v2528 = vrot.slane %v2384, 5
  %v2529 = vrot.slane %v2380, 6
  %v2530 = vor.u32 %v2528, %v2529
  %v2531 = vrot.slane %v2393, 6
  %v2532 = vsel %vm2500, %v2530, %v2531
  %v2533 = vrot.slane %v2390, 7
  %v2534 = vor.u32 %v2533, %v2393
  %v2537 = vsel %vm2294, %v2496, %v2499
  %v2540 = vsel %vm2299, %v2499, %v2505
  %v2542 = vsel %vm2303, %v2540, %v2508
  %v2546 = vsel %vm2307, %v2511, %v2519
  %v2550 = vsel %vm2312, %v2518, %v2527
  %v2552 = vsel %vm2316, %v2550, %v2530
  %v2556 = vsel %vm2320, %v2532, %v2534
  %s2558 = scalar_lea.vmem %s5, 256
  %v2559 = vld [vmem:[%s2558] sm:$0xff]
  %v2560 = vld [vmem:[%s2558 + $0x8] sm:$0xff]
  %v2561 = vld [vmem:[%s2558 + $0x10] sm:$0xff]
  %v2562 = vld [vmem:[%s2558 + $0x18] sm:$0xff]
  %v2563 = vld [vmem:[%s2558 + $0x20] sm:$0xff]
  %v2564 = vld [vmem:[%s2558 + $0x28] sm:$0xff]
  %v2565 = vld [vmem:[%s2558 + $0x30] sm:$0xff]
  %v2566 = vld [vmem:[%s2558 + $0x38] sm:$0xff]
  %v2567 = vld [vmem:[%s2558 + $0x40] sm:$0xff]
  %v2568 = vld [vmem:[%s2558 + $0x48] sm:$0xff]
  %v2569 = vld [vmem:[%s2558 + $0x50] sm:$0xff]
  %v2570 = vld [vmem:[%s2558 + $0x58] sm:$0xff]
  %v2571 = vld [vmem:[%s2558 + $0x60] sm:$0xff]
  %v2572 = vld [vmem:[%s2558 + $0x68] sm:$0xff]
  %v2573 = vld [vmem:[%s2558 + $0x70] sm:$0xff]
  %v2574 = vld [vmem:[%s2558 + $0x78] sm:$0xff]
  %v2575 = vld [vmem:[%s2558 + $0x80] sm:$0xff]
  %v2576 = vld [vmem:[%s2558 + $0x88] sm:$0xff]
  %v2577 = vld [vmem:[%s2558 + $0x90] sm:$0xff]
  %v2578 = vld [vmem:[%s2558 + $0x98] sm:$0xff]
  %v2579 = vld [vmem:[%s2558 + $0xa0] sm:$0xff]
  %v2580 = vld [vmem:[%s2558 + $0xa8] sm:$0xff]
  %v2581 = vld [vmem:[%s2558 + $0xb0] sm:$0xff]
  %v2582 = vld [vmem:[%s2558 + $0xb8] sm:$0xff]
  %v2583 = vld [vmem:[%s2558 + $0xc0] sm:$0xff]
  %v2584 = vld [vmem:[%s2558 + $0xc8] sm:$0xff]
  %v2585 = vld [vmem:[%s2558 + $0xd0] sm:$0xff]
  %v2586 = vld [vmem:[%s2558 + $0xd8] sm:$0xff]
  %v2587 = vld [vmem:[%s2558 + $0xe0] sm:$0xff]
  %v2588 = vld [vmem:[%s2558 + $0xe8] sm:$0xff]
  %v2589 = vld [vmem:[%s2558 + $0xf0] sm:$0xff]
  %v2590 = vld [vmem:[%s2558 + $0xf8] sm:$0xff]
  %v2623 = vunpack.c.l.b16 %v2559
  %v2624 = vunpack.c.h.b16 %v2559
  %v2625 = vunpack.c.l.b16 %v2560
  %v2626 = vunpack.c.h.b16 %v2560
  %v2627 = vunpack.c.l.b16 %v2561
  %v2628 = vunpack.c.h.b16 %v2561
  %v2629 = vunpack.c.l.b16 %v2562
  %v2630 = vunpack.c.h.b16 %v2562
  %v2631 = vunpack.c.l.b16 %v2563
  %v2632 = vunpack.c.h.b16 %v2563
  %v2633 = vunpack.c.l.b16 %v2564
  %v2634 = vunpack.c.h.b16 %v2564
  %v2635 = vunpack.c.l.b16 %v2565
  %v2636 = vunpack.c.h.b16 %v2565
  %v2637 = vunpack.c.l.b16 %v2566
  %v2638 = vunpack.c.h.b16 %v2566
  %v2639 = vunpack.c.l.b16 %v2567
  %v2640 = vunpack.c.h.b16 %v2567
  %v2641 = vunpack.c.l.b16 %v2568
  %v2642 = vunpack.c.h.b16 %v2568
  %v2643 = vunpack.c.l.b16 %v2569
  %v2644 = vunpack.c.h.b16 %v2569
  %v2645 = vunpack.c.l.b16 %v2570
  %v2646 = vunpack.c.h.b16 %v2570
  %v2647 = vunpack.c.l.b16 %v2571
  %v2648 = vunpack.c.h.b16 %v2571
  %v2649 = vunpack.c.l.b16 %v2572
  %v2650 = vunpack.c.h.b16 %v2572
  %v2651 = vunpack.c.l.b16 %v2573
  %v2652 = vunpack.c.h.b16 %v2573
  %v2653 = vunpack.c.l.b16 %v2574
  %v2654 = vunpack.c.h.b16 %v2574
  %v2655 = vunpack.c.l.b16 %v2575
  %v2656 = vunpack.c.h.b16 %v2575
  %v2657 = vunpack.c.l.b16 %v2576
  %v2658 = vunpack.c.h.b16 %v2576
  %v2659 = vunpack.c.l.b16 %v2577
  %v2660 = vunpack.c.h.b16 %v2577
  %v2661 = vunpack.c.l.b16 %v2578
  %v2662 = vunpack.c.h.b16 %v2578
  %v2663 = vunpack.c.l.b16 %v2579
  %v2664 = vunpack.c.h.b16 %v2579
  %v2665 = vunpack.c.l.b16 %v2580
  %v2666 = vunpack.c.h.b16 %v2580
  %v2667 = vunpack.c.l.b16 %v2581
  %v2668 = vunpack.c.h.b16 %v2581
  %v2669 = vunpack.c.l.b16 %v2582
  %v2670 = vunpack.c.h.b16 %v2582
  %v2671 = vunpack.c.l.b16 %v2583
  %v2672 = vunpack.c.h.b16 %v2583
  %v2673 = vunpack.c.l.b16 %v2584
  %v2674 = vunpack.c.h.b16 %v2584
  %v2675 = vunpack.c.l.b16 %v2585
  %v2676 = vunpack.c.h.b16 %v2585
  %v2677 = vunpack.c.l.b16 %v2586
  %v2678 = vunpack.c.h.b16 %v2586
  %v2679 = vunpack.c.l.b16 %v2587
  %v2680 = vunpack.c.h.b16 %v2587
  %v2681 = vunpack.c.l.b16 %v2588
  %v2682 = vunpack.c.h.b16 %v2588
  %v2683 = vunpack.c.l.b16 %v2589
  %v2684 = vunpack.c.h.b16 %v2589
  %v2685 = vunpack.c.l.b16 %v2590
  %v2686 = vunpack.c.h.b16 %v2590
  %v2687 = vpack.c.b16 %v2625, %v2623
  %v2688 = vpack.c.b16 %v2626, %v2624
  %v2689 = vpack.c.b16 %v2629, %v2627
  %v2690 = vpack.c.b16 %v2630, %v2628
  %v2691 = vpack.c.b16 %v2633, %v2631
  %v2692 = vpack.c.b16 %v2634, %v2632
  %v2693 = vpack.c.b16 %v2637, %v2635
  %v2694 = vpack.c.b16 %v2638, %v2636
  %v2695 = vpack.c.b16 %v2641, %v2639
  %v2696 = vpack.c.b16 %v2642, %v2640
  %v2697 = vpack.c.b16 %v2645, %v2643
  %v2698 = vpack.c.b16 %v2646, %v2644
  %v2699 = vpack.c.b16 %v2649, %v2647
  %v2700 = vpack.c.b16 %v2650, %v2648
  %v2701 = vpack.c.b16 %v2653, %v2651
  %v2702 = vpack.c.b16 %v2654, %v2652
  %v2703 = vpack.c.b16 %v2657, %v2655
  %v2704 = vpack.c.b16 %v2658, %v2656
  %v2705 = vpack.c.b16 %v2661, %v2659
  %v2706 = vpack.c.b16 %v2662, %v2660
  %v2707 = vpack.c.b16 %v2665, %v2663
  %v2708 = vpack.c.b16 %v2666, %v2664
  %v2709 = vpack.c.b16 %v2669, %v2667
  %v2710 = vpack.c.b16 %v2670, %v2668
  %v2711 = vpack.c.b16 %v2673, %v2671
  %v2712 = vpack.c.b16 %v2674, %v2672
  %v2713 = vpack.c.b16 %v2677, %v2675
  %v2714 = vpack.c.b16 %v2678, %v2676
  %v2715 = vpack.c.b16 %v2681, %v2679
  %v2716 = vpack.c.b16 %v2682, %v2680
  %v2717 = vpack.c.b16 %v2685, %v2683
  %v2718 = vpack.c.b16 %v2686, %v2684
  %2751 = vmatprep.subr.bf16.mxu0 %v2688
  %2752 = vmatpush1.bf16.msra.mxu0 %v2687
  %2753 = vmatprep.subr.bf16.mxu0 %v2690
  %2754 = vmatpush1.bf16.msra.mxu0 %v2689
  %2755 = vmatprep.subr.bf16.mxu0 %v2692
  %2756 = vmatpush1.bf16.msra.mxu0 %v2691
  %2757 = vmatprep.subr.bf16.mxu0 %v2694
  %2758 = vmatpush1.bf16.msra.mxu0 %v2693
  %2759 = vmatprep.subr.bf16.mxu0 %v2696
  %2760 = vmatpush1.bf16.msra.mxu0 %v2695
  %2761 = vmatprep.subr.bf16.mxu0 %v2698
  %2762 = vmatpush1.bf16.msra.mxu0 %v2697
  %2763 = vmatprep.subr.bf16.mxu0 %v2700
  %2764 = vmatpush1.bf16.msra.mxu0 %v2699
  %2765 = vmatprep.subr.bf16.mxu0 %v2702
  %2766 = vmatpush1.bf16.msra.mxu0 %v2701
  %2767 = vmatprep.subr.bf16.mxu0 %v2704
  %2768 = vmatpush1.bf16.msra.mxu0 %v2703
  %2769 = vmatprep.subr.bf16.mxu0 %v2706
  %2770 = vmatpush1.bf16.msra.mxu0 %v2705
  %2771 = vmatprep.subr.bf16.mxu0 %v2708
  %2772 = vmatpush1.bf16.msra.mxu0 %v2707
  %2773 = vmatprep.subr.bf16.mxu0 %v2710
  %2774 = vmatpush1.bf16.msra.mxu0 %v2709
  %2775 = vmatprep.subr.bf16.mxu0 %v2712
  %2776 = vmatpush1.bf16.msra.mxu0 %v2711
  %2777 = vmatprep.subr.bf16.mxu0 %v2714
  %2778 = vmatpush1.bf16.msra.mxu0 %v2713
  %2779 = vmatprep.subr.bf16.mxu0 %v2716
  %2780 = vmatpush1.bf16.msra.mxu0 %v2715
  %2781 = vmatprep.subr.bf16.mxu0 %v2718
  %2782 = vmatpush1.bf16.msra.mxu0 %v2717
  %2783 = vmatprep.mubr.bf16.mxu0 %v2537
  %2784 = vmatmul.mubr.bf16.gmra.mrb[0].mxu0 %v2474
  %v2785 = vpop.f32.mrb[0].mxu0
  %v2786 = vadd.f32 0.0, %v2785
  %v2787 = vpop.f32.mrb[0].mxu0
  %v2788 = vadd.f32 0.0, %v2787
  %v2789 = vpop.f32.mrb[0].mxu0
  %v2790 = vadd.f32 0.0, %v2789
  %v2791 = vpop.f32.mrb[0].mxu0
  %v2792 = vadd.f32 0.0, %v2791
  %2793 = vmatprep.mubr.bf16.mxu0 %v2542
  %2794 = vmatmul.mubr.bf16.gmra.mrb[0].mxu0 %v2479
  %v2795 = vpop.f32.mrb[0].mxu0
  %v2796 = vadd.f32 0.0, %v2795
  %v2797 = vpop.f32.mrb[0].mxu0
  %v2798 = vadd.f32 0.0, %v2797
  %v2799 = vpop.f32.mrb[0].mxu0
  %v2800 = vadd.f32 0.0, %v2799
  %v2801 = vpop.f32.mrb[0].mxu0
  %v2802 = vadd.f32 0.0, %v2801
  %2803 = vmatprep.mubr.bf16.mxu0 %v2546
  %2804 = vmatmul.mubr.bf16.gmra.mrb[0].mxu0 %v2483
  %v2805 = vpop.f32.mrb[0].mxu0
  %v2806 = vadd.f32 0.0, %v2805
  %v2807 = vpop.f32.mrb[0].mxu0
  %v2808 = vadd.f32 0.0, %v2807
  %v2809 = vpop.f32.mrb[0].mxu0
  %v2810 = vadd.f32 0.0, %v2809
  %v2811 = vpop.f32.mrb[0].mxu0
  %v2812 = vadd.f32 0.0, %v2811
  %2813 = vmatprep.mubr.bf16.mxu0 %v2552
  %2814 = vmatmul.mubr.bf16.gmra.mrb[0].mxu0 %v2489
  %v2815 = vpop.f32.mrb[0].mxu0
  %v2816 = vadd.f32 0.0, %v2815
  %v2817 = vpop.f32.mrb[0].mxu0
  %v2818 = vadd.f32 0.0, %v2817
  %v2819 = vpop.f32.mrb[0].mxu0
  %v2820 = vadd.f32 0.0, %v2819
  %v2821 = vpop.f32.mrb[0].mxu0
  %v2822 = vadd.f32 0.0, %v2821
  %2823 = vmatprep.mubr.bf16.mxu0 %v2556
  %2824 = vmatmul.mubr.bf16.gmra.mrb[0].mxu0 %v2492
  %v2825 = vpop.f32.mrb[0].mxu0
  %v2826 = vadd.f32 0.0, %v2825
  %v2827 = vpop.f32.mrb[0].mxu0
  %v2828 = vadd.f32 0.0, %v2827
  %v2829 = vpop.f32.mrb[0].mxu0
  %v2830 = vadd.f32 0.0, %v2829
  %v2831 = vpop.f32.mrb[0].mxu0
  %v2832 = vadd.f32 0.0, %v2831
  %2833 = vdwg.mxu0
  %v2866 = vunpack.c.l.b16 %v2420
  %v2867 = vunpack.c.h.b16 %v2420
  %v2868 = vunpack.c.l.b16 %v2421
  %v2869 = vunpack.c.h.b16 %v2421
  %v2870 = vunpack.c.l.b16 %v2422
  %v2871 = vunpack.c.h.b16 %v2422
  %v2872 = vunpack.c.l.b16 %v2423
  %v2873 = vunpack.c.h.b16 %v2423
  %v2874 = vunpack.c.l.b16 %v2424
  %v2875 = vunpack.c.h.b16 %v2424
  %v2876 = vunpack.c.l.b16 %v2425
  %v2877 = vunpack.c.h.b16 %v2425
  %v2878 = vunpack.c.l.b16 %v2426
  %v2879 = vunpack.c.h.b16 %v2426
  %v2880 = vunpack.c.l.b16 %v2427
  %v2881 = vunpack.c.h.b16 %v2427
  %v2882 = vunpack.c.l.b16 %v2428
  %v2883 = vunpack.c.h.b16 %v2428
  %v2884 = vunpack.c.l.b16 %v2429
  %v2885 = vunpack.c.h.b16 %v2429
  %v2886 = vunpack.c.l.b16 %v2430
  %v2887 = vunpack.c.h.b16 %v2430
  %v2888 = vunpack.c.l.b16 %v2431
  %v2889 = vunpack.c.h.b16 %v2431
  %v2890 = vunpack.c.l.b16 %v2432
  %v2891 = vunpack.c.h.b16 %v2432
  %v2892 = vunpack.c.l.b16 %v2433
  %v2893 = vunpack.c.h.b16 %v2433
  %v2894 = vunpack.c.l.b16 %v2434
  %v2895 = vunpack.c.h.b16 %v2434
  %v2896 = vunpack.c.l.b16 %v2435
  %v2897 = vunpack.c.h.b16 %v2435
  %v2898 = vunpack.c.l.b16 %v2436
  %v2899 = vunpack.c.h.b16 %v2436
  %v2900 = vunpack.c.l.b16 %v2437
  %v2901 = vunpack.c.h.b16 %v2437
  %v2902 = vunpack.c.l.b16 %v2438
  %v2903 = vunpack.c.h.b16 %v2438
  %v2904 = vunpack.c.l.b16 %v2439
  %v2905 = vunpack.c.h.b16 %v2439
  %v2906 = vunpack.c.l.b16 %v2440
  %v2907 = vunpack.c.h.b16 %v2440
  %v2908 = vunpack.c.l.b16 %v2441
  %v2909 = vunpack.c.h.b16 %v2441
  %v2910 = vunpack.c.l.b16 %v2442
  %v2911 = vunpack.c.h.b16 %v2442
  %v2912 = vunpack.c.l.b16 %v2443
  %v2913 = vunpack.c.h.b16 %v2443
  %v2914 = vunpack.c.l.b16 %v2444
  %v2915 = vunpack.c.h.b16 %v2444
  %v2916 = vunpack.c.l.b16 %v2445
  %v2917 = vunpack.c.h.b16 %v2445
  %v2918 = vunpack.c.l.b16 %v2446
  %v2919 = vunpack.c.h.b16 %v2446
  %v2920 = vunpack.c.l.b16 %v2447
  %v2921 = vunpack.c.h.b16 %v2447
  %v2922 = vunpack.c.l.b16 %v2448
  %v2923 = vunpack.c.h.b16 %v2448
  %v2924 = vunpack.c.l.b16 %v2449
  %v2925 = vunpack.c.h.b16 %v2449
  %v2926 = vunpack.c.l.b16 %v2450
  %v2927 = vunpack.c.h.b16 %v2450
  %v2928 = vunpack.c.l.b16 %v2451
  %v2929 = vunpack.c.h.b16 %v2451
  %v2930 = vpack.c.b16 %v2868, %v2866
  %v2931 = vpack.c.b16 %v2869, %v2867
  %v2932 = vpack.c.b16 %v2872, %v2870
  %v2933 = vpack.c.b16 %v2873, %v2871
  %v2934 = vpack.c.b16 %v2876, %v2874
  %v2935 = vpack.c.b16 %v2877, %v2875
  %v2936 = vpack.c.b16 %v2880, %v2878
  %v2937 = vpack.c.b16 %v2881, %v2879
  %v2938 = vpack.c.b16 %v2884, %v2882
  %v2939 = vpack.c.b16 %v2885, %v2883
  %v2940 = vpack.c.b16 %v2888, %v2886
  %v2941 = vpack.c.b16 %v2889, %v2887
  %v2942 = vpack.c.b16 %v2892, %v2890
  %v2943 = vpack.c.b16 %v2893, %v2891
  %v2944 = vpack.c.b16 %v2896, %v2894
  %v2945 = vpack.c.b16 %v2897, %v2895
  %v2946 = vpack.c.b16 %v2900, %v2898
  %v2947 = vpack.c.b16 %v2901, %v2899
  %v2948 = vpack.c.b16 %v2904, %v2902
  %v2949 = vpack.c.b16 %v2905, %v2903
  %v2950 = vpack.c.b16 %v2908, %v2906
  %v2951 = vpack.c.b16 %v2909, %v2907
  %v2952 = vpack.c.b16 %v2912, %v2910
  %v2953 = vpack.c.b16 %v2913, %v2911
  %v2954 = vpack.c.b16 %v2916, %v2914
  %v2955 = vpack.c.b16 %v2917, %v2915
  %v2956 = vpack.c.b16 %v2920, %v2918
  %v2957 = vpack.c.b16 %v2921, %v2919
  %v2958 = vpack.c.b16 %v2924, %v2922
  %v2959 = vpack.c.b16 %v2925, %v2923
  %v2960 = vpack.c.b16 %v2928, %v2926
  %v2961 = vpack.c.b16 %v2929, %v2927
  %2994 = vmatprep.subr.bf16.mxu0 %v2931
  %2995 = vmatpush1.bf16.msra.mxu0 %v2930
  %2996 = vmatprep.subr.bf16.mxu0 %v2933
  %2997 = vmatpush1.bf16.msra.mxu0 %v2932
  %2998 = vmatprep.subr.bf16.mxu0 %v2935
  %2999 = vmatpush1.bf16.msra.mxu0 %v2934
  %3000 = vmatprep.subr.bf16.mxu0 %v2937
  %3001 = vmatpush1.bf16.msra.mxu0 %v2936
  %3002 = vmatprep.subr.bf16.mxu0 %v2939
  %3003 = vmatpush1.bf16.msra.mxu0 %v2938
  %3004 = vmatprep.subr.bf16.mxu0 %v2941
  %3005 = vmatpush1.bf16.msra.mxu0 %v2940
  %3006 = vmatprep.subr.bf16.mxu0 %v2943
  %3007 = vmatpush1.bf16.msra.mxu0 %v2942
  %3008 = vmatprep.subr.bf16.mxu0 %v2945
  %3009 = vmatpush1.bf16.msra.mxu0 %v2944
  %3010 = vmatprep.subr.bf16.mxu0 %v2947
  %3011 = vmatpush1.bf16.msra.mxu0 %v2946
  %3012 = vmatprep.subr.bf16.mxu0 %v2949
  %3013 = vmatpush1.bf16.msra.mxu0 %v2948
  %3014 = vmatprep.subr.bf16.mxu0 %v2951
  %3015 = vmatpush1.bf16.msra.mxu0 %v2950
  %3016 = vmatprep.subr.bf16.mxu0 %v2953
  %3017 = vmatpush1.bf16.msra.mxu0 %v2952
  %3018 = vmatprep.subr.bf16.mxu0 %v2955
  %3019 = vmatpush1.bf16.msra.mxu0 %v2954
  %3020 = vmatprep.subr.bf16.mxu0 %v2957
  %3021 = vmatpush1.bf16.msra.mxu0 %v2956
  %3022 = vmatprep.subr.bf16.mxu0 %v2959
  %3023 = vmatpush1.bf16.msra.mxu0 %v2958
  %3024 = vmatprep.subr.bf16.mxu0 %v2961
  %3025 = vmatpush1.bf16.msra.mxu0 %v2960
  %3026 = vmatprep.mubr.bf16.mxu0 %v2399
  %3027 = vmatmul.mubr.bf16.gmra.mrb[0].mxu0 %v2297
  %v3028 = vpop.f32.mrb[0].mxu0
  %v3029 = vadd.f32 %v2786, %v3028
  %v3030 = vpop.f32.mrb[0].mxu0
  %v3031 = vadd.f32 %v2788, %v3030
  %v3032 = vpop.f32.mrb[0].mxu0
  %v3033 = vadd.f32 %v2790, %v3032
  %v3034 = vpop.f32.mrb[0].mxu0
  %v3035 = vadd.f32 %v2792, %v3034
  %3036 = vmatprep.mubr.bf16.mxu0 %v2405
  %3037 = vmatmul.mubr.bf16.gmra.mrb[0].mxu0 %v2305
  %v3038 = vpop.f32.mrb[0].mxu0
  %v3039 = vadd.f32 %v2796, %v3038
  %v3040 = vpop.f32.mrb[0].mxu0
  %v3041 = vadd.f32 %v2798, %v3040
  %v3042 = vpop.f32.mrb[0].mxu0
  %v3043 = vadd.f32 %v2800, %v3042
  %v3044 = vpop.f32.mrb[0].mxu0
  %v3045 = vadd.f32 %v2802, %v3044
  %3046 = vmatprep.mubr.bf16.mxu0 %v2409
  %3047 = vmatmul.mubr.bf16.gmra.mrb[0].mxu0 %v2310
  %v3048 = vpop.f32.mrb[0].mxu0
  %v3049 = vadd.f32 %v2806, %v3048
  %v3050 = vpop.f32.mrb[0].mxu0
  %v3051 = vadd.f32 %v2808, %v3050
  %v3052 = vpop.f32.mrb[0].mxu0
  %v3053 = vadd.f32 %v2810, %v3052
  %v3054 = vpop.f32.mrb[0].mxu0
  %v3055 = vadd.f32 %v2812, %v3054
  %3056 = vmatprep.mubr.bf16.mxu0 %v2415
  %3057 = vmatmul.mubr.bf16.gmra.mrb[0].mxu0 %v2318
  %v3058 = vpop.f32.mrb[0].mxu0
  %v3059 = vadd.f32 %v2816, %v3058
  %v3060 = vpop.f32.mrb[0].mxu0
  %v3061 = vadd.f32 %v2818, %v3060
  %v3062 = vpop.f32.mrb[0].mxu0
  %v3063 = vadd.f32 %v2820, %v3062
  %v3064 = vpop.f32.mrb[0].mxu0
  %v3065 = vadd.f32 %v2822, %v3064
  %3066 = vmatprep.mubr.bf16.mxu0 %v2418
  %3067 = vmatmul.mubr.bf16.gmra.mrb[0].mxu0 %v2322
  %v3068 = vpop.f32.mrb[0].mxu0
  %v3069 = vadd.f32 %v2826, %v3068
  %v3070 = vpop.f32.mrb[0].mxu0
  %v3071 = vadd.f32 %v2828, %v3070
  %v3072 = vpop.f32.mrb[0].mxu0
  %v3073 = vadd.f32 %v2830, %v3072
  %v3074 = vpop.f32.mrb[0].mxu0
  %v3075 = vadd.f32 %v2832, %v3074
  %3076 = vdwg.mxu0
  %v3077 = vrot.slane %v2268, 2
  %v3078 = vsel %vm2274, %v3077, %v2289
  %v3079 = vrot.slane %v2269, 4
  %v3080 = vsel %vm2279, %v3079, %v2291
  %v3081 = vrot.slane %v2270, 6
  %v3082 = vsel %vm2284, %v3081, %v2293
  %v3085 = vsel %vm2294, %v2275, %v2280
  %v3087 = vsel %vm2299, %v2280, %v2285
  %v3088 = vsel %vm2303, %v3087, %v2267
  %v3091 = vsel %vm2307, %v2268, %v3078
  %v3094 = vsel %vm2312, %v2289, %v3080
  %v3096 = vsel %vm2316, %v3094, %v3081
  %v3099 = vsel %vm2320, %v3082, %v2271
  %v3101 = vrot.slane %v2326, 3
  %v3102 = vor.u32 %v2331, %v3101
  %v3103 = vsel %vm2366, %v2346, %v2367
  %v3104 = vrot.slane %v2358, 2
  %v3105 = vrot.slane %v2361, 3
  %v3106 = vor.u32 %v3104, %v3105
  %v3107 = vsel %vm2330, %v3106, %v2378
  %v3108 = vrot.slane %v2373, 4
  %v3109 = vrot.slane %v2369, 5
  %v3110 = vor.u32 %v3108, %v3109
  %v3111 = vsel %vm2341, %v3110, %v2388
  %v3112 = vrot.slane %v2384, 6
  %v3113 = vrot.slane %v2380, 7
  %v3114 = vor.u32 %v3112, %v3113
  %v3115 = vsel %vm2354, %v3114, %v2396
  %v3116 = vrot.slane %v2393, 1
  %v3117 = vor.u32 %v2390, %v3116
  %v3119 = vshll.u32 0, 16
  %v3121 = vrot.slane %v3119, 1
  %v3122 = vsel %vm2366, %v3117, %v3121
  %v3125 = vsel %vm2294, %v3102, %v2344
  %v3127 = vsel %vm2299, %v2344, %v2357
  %v3129 = vsel %vm2303, %v3127, %v3103
  %v3133 = vsel %vm2307, %v2368, %v3107
  %v3137 = vsel %vm2312, %v2378, %v3111
  %v3139 = vsel %vm2316, %v3137, %v3114
  %v3143 = vsel %vm2320, %v3115, %v3122
  %s3145 = scalar_lea.vmem %s5, 512
  %v3146 = vld [vmem:[%s3145] sm:$0xff]
  %v3147 = vld [vmem:[%s3145 + $0x8] sm:$0xff]
  %v3148 = vld [vmem:[%s3145 + $0x10] sm:$0xff]
  %v3149 = vld [vmem:[%s3145 + $0x18] sm:$0xff]
  %v3150 = vld [vmem:[%s3145 + $0x20] sm:$0xff]
  %v3151 = vld [vmem:[%s3145 + $0x28] sm:$0xff]
  %v3152 = vld [vmem:[%s3145 + $0x30] sm:$0xff]
  %v3153 = vld [vmem:[%s3145 + $0x38] sm:$0xff]
  %v3154 = vld [vmem:[%s3145 + $0x40] sm:$0xff]
  %v3155 = vld [vmem:[%s3145 + $0x48] sm:$0xff]
  %v3156 = vld [vmem:[%s3145 + $0x50] sm:$0xff]
  %v3157 = vld [vmem:[%s3145 + $0x58] sm:$0xff]
  %v3158 = vld [vmem:[%s3145 + $0x60] sm:$0xff]
  %v3159 = vld [vmem:[%s3145 + $0x68] sm:$0xff]
  %v3160 = vld [vmem:[%s3145 + $0x70] sm:$0xff]
  %v3161 = vld [vmem:[%s3145 + $0x78] sm:$0xff]
  %v3162 = vld [vmem:[%s3145 + $0x80] sm:$0xff]
  %v3163 = vld [vmem:[%s3145 + $0x88] sm:$0xff]
  %v3164 = vld [vmem:[%s3145 + $0x90] sm:$0xff]
  %v3165 = vld [vmem:[%s3145 + $0x98] sm:$0xff]
  %v3166 = vld [vmem:[%s3145 + $0xa0] sm:$0xff]
  %v3167 = vld [vmem:[%s3145 + $0xa8] sm:$0xff]
  %v3168 = vld [vmem:[%s3145 + $0xb0] sm:$0xff]
  %v3169 = vld [vmem:[%s3145 + $0xb8] sm:$0xff]
  %v3170 = vld [vmem:[%s3145 + $0xc0] sm:$0xff]
  %v3171 = vld [vmem:[%s3145 + $0xc8] sm:$0xff]
  %v3172 = vld [vmem:[%s3145 + $0xd0] sm:$0xff]
  %v3173 = vld [vmem:[%s3145 + $0xd8] sm:$0xff]
  %v3174 = vld [vmem:[%s3145 + $0xe0] sm:$0xff]
  %v3175 = vld [vmem:[%s3145 + $0xe8] sm:$0xff]
  %v3176 = vld [vmem:[%s3145 + $0xf0] sm:$0xff]
  %v3177 = vld [vmem:[%s3145 + $0xf8] sm:$0xff]
  %v3210 = vunpack.c.l.b16 %v3146
  %v3211 = vunpack.c.h.b16 %v3146
  %v3212 = vunpack.c.l.b16 %v3147
  %v3213 = vunpack.c.h.b16 %v3147
  %v3214 = vunpack.c.l.b16 %v3148
  %v3215 = vunpack.c.h.b16 %v3148
  %v3216 = vunpack.c.l.b16 %v3149
  %v3217 = vunpack.c.h.b16 %v3149
  %v3218 = vunpack.c.l.b16 %v3150
  %v3219 = vunpack.c.h.b16 %v3150
  %v3220 = vunpack.c.l.b16 %v3151
  %v3221 = vunpack.c.h.b16 %v3151
  %v3222 = vunpack.c.l.b16 %v3152
  %v3223 = vunpack.c.h.b16 %v3152
  %v3224 = vunpack.c.l.b16 %v3153
  %v3225 = vunpack.c.h.b16 %v3153
  %v3226 = vunpack.c.l.b16 %v3154
  %v3227 = vunpack.c.h.b16 %v3154
  %v3228 = vunpack.c.l.b16 %v3155
  %v3229 = vunpack.c.h.b16 %v3155
  %v3230 = vunpack.c.l.b16 %v3156
  %v3231 = vunpack.c.h.b16 %v3156
  %v3232 = vunpack.c.l.b16 %v3157
  %v3233 = vunpack.c.h.b16 %v3157
  %v3234 = vunpack.c.l.b16 %v3158
  %v3235 = vunpack.c.h.b16 %v3158
  %v3236 = vunpack.c.l.b16 %v3159
  %v3237 = vunpack.c.h.b16 %v3159
  %v3238 = vunpack.c.l.b16 %v3160
  %v3239 = vunpack.c.h.b16 %v3160
  %v3240 = vunpack.c.l.b16 %v3161
  %v3241 = vunpack.c.h.b16 %v3161
  %v3242 = vunpack.c.l.b16 %v3162
  %v3243 = vunpack.c.h.b16 %v3162
  %v3244 = vunpack.c.l.b16 %v3163
  %v3245 = vunpack.c.h.b16 %v3163
  %v3246 = vunpack.c.l.b16 %v3164
  %v3247 = vunpack.c.h.b16 %v3164
  %v3248 = vunpack.c.l.b16 %v3165
  %v3249 = vunpack.c.h.b16 %v3165
  %v3250 = vunpack.c.l.b16 %v3166
  %v3251 = vunpack.c.h.b16 %v3166
  %v3252 = vunpack.c.l.b16 %v3167
  %v3253 = vunpack.c.h.b16 %v3167
  %v3254 = vunpack.c.l.b16 %v3168
  %v3255 = vunpack.c.h.b16 %v3168
  %v3256 = vunpack.c.l.b16 %v3169
  %v3257 = vunpack.c.h.b16 %v3169
  %v3258 = vunpack.c.l.b16 %v3170
  %v3259 = vunpack.c.h.b16 %v3170
  %v3260 = vunpack.c.l.b16 %v3171
  %v3261 = vunpack.c.h.b16 %v3171
  %v3262 = vunpack.c.l.b16 %v3172
  %v3263 = vunpack.c.h.b16 %v3172
  %v3264 = vunpack.c.l.b16 %v3173
  %v3265 = vunpack.c.h.b16 %v3173
  %v3266 = vunpack.c.l.b16 %v3174
  %v3267 = vunpack.c.h.b16 %v3174
  %v3268 = vunpack.c.l.b16 %v3175
  %v3269 = vunpack.c.h.b16 %v3175
  %v3270 = vunpack.c.l.b16 %v3176
  %v3271 = vunpack.c.h.b16 %v3176
  %v3272 = vunpack.c.l.b16 %v3177
  %v3273 = vunpack.c.h.b16 %v3177
  %v3274 = vpack.c.b16 %v3212, %v3210
  %v3275 = vpack.c.b16 %v3213, %v3211
  %v3276 = vpack.c.b16 %v3216, %v3214
  %v3277 = vpack.c.b16 %v3217, %v3215
  %v3278 = vpack.c.b16 %v3220, %v3218
  %v3279 = vpack.c.b16 %v3221, %v3219
  %v3280 = vpack.c.b16 %v3224, %v3222
  %v3281 = vpack.c.b16 %v3225, %v3223
  %v3282 = vpack.c.b16 %v3228, %v3226
  %v3283 = vpack.c.b16 %v3229, %v3227
  %v3284 = vpack.c.b16 %v3232, %v3230
  %v3285 = vpack.c.b16 %v3233, %v3231
  %v3286 = vpack.c.b16 %v3236, %v3234
  %v3287 = vpack.c.b16 %v3237, %v3235
  %v3288 = vpack.c.b16 %v3240, %v3238
  %v3289 = vpack.c.b16 %v3241, %v3239
  %v3290 = vpack.c.b16 %v3244, %v3242
  %v3291 = vpack.c.b16 %v3245, %v3243
  %v3292 = vpack.c.b16 %v3248, %v3246
  %v3293 = vpack.c.b16 %v3249, %v3247
  %v3294 = vpack.c.b16 %v3252, %v3250
  %v3295 = vpack.c.b16 %v3253, %v3251
  %v3296 = vpack.c.b16 %v3256, %v3254
  %v3297 = vpack.c.b16 %v3257, %v3255
  %v3298 = vpack.c.b16 %v3260, %v3258
  %v3299 = vpack.c.b16 %v3261, %v3259
  %v3300 = vpack.c.b16 %v3264, %v3262
  %v3301 = vpack.c.b16 %v3265, %v3263
  %v3302 = vpack.c.b16 %v3268, %v3266
  %v3303 = vpack.c.b16 %v3269, %v3267
  %v3304 = vpack.c.b16 %v3272, %v3270
  %v3305 = vpack.c.b16 %v3273, %v3271
  %3338 = vmatprep.subr.bf16.mxu0 %v3275
  %3339 = vmatpush1.bf16.msra.mxu0 %v3274
  %3340 = vmatprep.subr.bf16.mxu0 %v3277
  %3341 = vmatpush1.bf16.msra.mxu0 %v3276
  %3342 = vmatprep.subr.bf16.mxu0 %v3279
  %3343 = vmatpush1.bf16.msra.mxu0 %v3278
  %3344 = vmatprep.subr.bf16.mxu0 %v3281
  %3345 = vmatpush1.bf16.msra.mxu0 %v3280
  %3346 = vmatprep.subr.bf16.mxu0 %v3283
  %3347 = vmatpush1.bf16.msra.mxu0 %v3282
  %3348 = vmatprep.subr.bf16.mxu0 %v3285
  %3349 = vmatpush1.bf16.msra.mxu0 %v3284
  %3350 = vmatprep.subr.bf16.mxu0 %v3287
  %3351 = vmatpush1.bf16.msra.mxu0 %v3286
  %3352 = vmatprep.subr.bf16.mxu0 %v3289
  %3353 = vmatpush1.bf16.msra.mxu0 %v3288
  %3354 = vmatprep.subr.bf16.mxu0 %v3291
  %3355 = vmatpush1.bf16.msra.mxu0 %v3290
  %3356 = vmatprep.subr.bf16.mxu0 %v3293
  %3357 = vmatpush1.bf16.msra.mxu0 %v3292
  %3358 = vmatprep.subr.bf16.mxu0 %v3295
  %3359 = vmatpush1.bf16.msra.mxu0 %v3294
  %3360 = vmatprep.subr.bf16.mxu0 %v3297
  %3361 = vmatpush1.bf16.msra.mxu0 %v3296
  %3362 = vmatprep.subr.bf16.mxu0 %v3299
  %3363 = vmatpush1.bf16.msra.mxu0 %v3298
  %3364 = vmatprep.subr.bf16.mxu0 %v3301
  %3365 = vmatpush1.bf16.msra.mxu0 %v3300
  %3366 = vmatprep.subr.bf16.mxu0 %v3303
  %3367 = vmatpush1.bf16.msra.mxu0 %v3302
  %3368 = vmatprep.subr.bf16.mxu0 %v3305
  %3369 = vmatpush1.bf16.msra.mxu0 %v3304
  %3370 = vmatprep.mubr.bf16.mxu0 %v3125
  %3371 = vmatmul.mubr.bf16.gmra.mrb[0].mxu0 %v3085
  %v3372 = vpop.f32.mrb[0].mxu0
  %v3373 = vadd.f32 0.0, %v3372
  %v3374 = vpop.f32.mrb[0].mxu0
  %v3375 = vadd.f32 0.0, %v3374
  %v3376 = vpop.f32.mrb[0].mxu0
  %v3377 = vadd.f32 0.0, %v3376
  %v3378 = vpop.f32.mrb[0].mxu0
  %v3379 = vadd.f32 0.0, %v3378
  %3380 = vmatprep.mubr.bf16.mxu0 %v3129
  %3381 = vmatmul.mubr.bf16.gmra.mrb[0].mxu0 %v3088
  %v3382 = vpop.f32.mrb[0].mxu0
  %v3383 = vadd.f32 0.0, %v3382
  %v3384 = vpop.f32.mrb[0].mxu0
  %v3385 = vadd.f32 0.0, %v3384
  %v3386 = vpop.f32.mrb[0].mxu0
  %v3387 = vadd.f32 0.0, %v3386
  %v3388 = vpop.f32.mrb[0].mxu0
  %v3389 = vadd.f32 0.0, %v3388
  %3390 = vmatprep.mubr.bf16.mxu0 %v3133
  %3391 = vmatmul.mubr.bf16.gmra.mrb[0].mxu0 %v3091
  %v3392 = vpop.f32.mrb[0].mxu0
  %v3393 = vadd.f32 0.0, %v3392
  %v3394 = vpop.f32.mrb[0].mxu0
  %v3395 = vadd.f32 0.0, %v3394
  %v3396 = vpop.f32.mrb[0].mxu0
  %v3397 = vadd.f32 0.0, %v3396
  %v3398 = vpop.f32.mrb[0].mxu0
  %v3399 = vadd.f32 0.0, %v3398
  %3400 = vmatprep.mubr.bf16.mxu0 %v3139
  %3401 = vmatmul.mubr.bf16.gmra.mrb[0].mxu0 %v3096
  %v3402 = vpop.f32.mrb[0].mxu0
  %v3403 = vadd.f32 0.0, %v3402
  %v3404 = vpop.f32.mrb[0].mxu0
  %v3405 = vadd.f32 0.0, %v3404
  %v3406 = vpop.f32.mrb[0].mxu0
  %v3407 = vadd.f32 0.0, %v3406
  %v3408 = vpop.f32.mrb[0].mxu0
  %v3409 = vadd.f32 0.0, %v3408
  %3410 = vmatprep.mubr.bf16.mxu0 %v3143
  %3411 = vmatmul.mubr.bf16.gmra.mrb[0].mxu0 %v3099
  %v3412 = vpop.f32.mrb[0].mxu0
  %v3413 = vadd.f32 0.0, %v3412
  %v3414 = vpop.f32.mrb[0].mxu0
  %v3415 = vadd.f32 0.0, %v3414
  %v3416 = vpop.f32.mrb[0].mxu0
  %v3417 = vadd.f32 0.0, %v3416
  %v3418 = vpop.f32.mrb[0].mxu0
  %v3419 = vadd.f32 0.0, %v3418
  %3420 = vdwg.mxu0
  %v3421 = vadd.f32 %v3029, %v3373
  %v3422 = vadd.f32 %v3031, %v3375
  %v3423 = vadd.f32 %v3033, %v3377
  %v3424 = vadd.f32 %v3035, %v3379
  %v3425 = vadd.f32 %v3039, %v3383
  %v3426 = vadd.f32 %v3041, %v3385
  %v3427 = vadd.f32 %v3043, %v3387
  %v3428 = vadd.f32 %v3045, %v3389
  %v3429 = vadd.f32 %v3049, %v3393
  %v3430 = vadd.f32 %v3051, %v3395
  %v3431 = vadd.f32 %v3053, %v3397
  %v3432 = vadd.f32 %v3055, %v3399
  %v3433 = vadd.f32 %v3059, %v3403
  %v3434 = vadd.f32 %v3061, %v3405
  %v3435 = vadd.f32 %v3063, %v3407
  %v3436 = vadd.f32 %v3065, %v3409
  %v3437 = vadd.f32 %v3069, %v3413
  %v3438 = vadd.f32 %v3071, %v3415
  %v3439 = vadd.f32 %v3073, %v3417
  %v3440 = vadd.f32 %v3075, %v3419
  %v3441 = vld [vmem:[%s6] sm:$0x3]
  %v3443 = vlaneseq
  %v3444 = vshrl.u32 %v3443, 7
  %v3445 = vsub.s32 0, %v3444
  %v3446 = vrot.slane %v3441, %v3445
  %v3447 = vlaneseq
  %v3448 = vshrl.u32 %v3447, 7
  %v3449 = vsub.s32 1, %v3448
  %v3450 = vrot.slane %v3441, %v3449
  %v3453 = vadd.f32 %v3421, %v3446
  %v3454 = vadd.f32 %v3422, %v3450
  %v3455 = vadd.f32 %v3423, %v3446
  %v3456 = vadd.f32 %v3424, %v3450
  %v3457 = vadd.f32 %v3425, %v3446
  %v3458 = vadd.f32 %v3426, %v3450
  %v3459 = vadd.f32 %v3427, %v3446
  %v3460 = vadd.f32 %v3428, %v3450
  %v3461 = vadd.f32 %v3429, %v3446
  %v3462 = vadd.f32 %v3430, %v3450
  %v3463 = vadd.f32 %v3431, %v3446
  %v3464 = vadd.f32 %v3432, %v3450
  %v3465 = vadd.f32 %v3433, %v3446
  %v3466 = vadd.f32 %v3434, %v3450
  %v3467 = vadd.f32 %v3435, %v3446
  %v3468 = vadd.f32 %v3436, %v3450
  %v3469 = vadd.f32 %v3437, %v3446
  %v3470 = vadd.f32 %v3438, %v3450
  %v3471 = vadd.f32 %v3439, %v3446
  %v3472 = vadd.f32 %v3440, %v3450
  %v3473 = vmax.f32 %v3453, 0.0
  %v3474 = vmax.f32 %v3454, 0.0
  %v3475 = vmax.f32 %v3455, 0.0
  %v3476 = vmax.f32 %v3456, 0.0
  %v3477 = vmax.f32 %v3457, 0.0
  %v3478 = vmax.f32 %v3458, 0.0
  %v3479 = vmax.f32 %v3459, 0.0
  %v3480 = vmax.f32 %v3460, 0.0
  %v3481 = vmax.f32 %v3461, 0.0
  %v3482 = vmax.f32 %v3462, 0.0
  %v3483 = vmax.f32 %v3463, 0.0
  %v3484 = vmax.f32 %v3464, 0.0
  %v3485 = vmax.f32 %v3465, 0.0
  %v3486 = vmax.f32 %v3466, 0.0
  %v3487 = vmax.f32 %v3467, 0.0
  %v3488 = vmax.f32 %v3468, 0.0
  %v3489 = vmax.f32 %v3469, 0.0
  %v3490 = vmax.f32 %v3470, 0.0
  %v3491 = vmax.f32 %v3471, 0.0
  %v3492 = vmax.f32 %v3472, 0.0
  %v3493 = vmax.f32 %v3473, %v3474
  %v3494 = vmax.f32 %v3475, %v3476
  %v3495 = vmax.f32 %v3477, %v3478
  %v3496 = vmax.f32 %v3479, %v3480
  %v3497 = vmax.f32 %v3481, %v3482
  %v3498 = vmax.f32 %v3483, %v3484
  %v3499 = vmax.f32 %v3485, %v3486
  %v3500 = vmax.f32 %v3487, %v3488
  %v3501 = vmax.f32 %v3489, %v3490
  %v3502 = vmax.f32 %v3491, %v3492
  %v3503 = vpack.c.bf16 %v3494, %v3493
  %v3504 = vpack.c.bf16 %v3496, %v3495
  %v3505 = vpack.c.bf16 %v3498, %v3497
  %v3506 = vpack.c.bf16 %v3500, %v3499
  %v3507 = vpack.c.bf16 %v3502, %v3501
  %v3508 = vld [vmem:[%s7] sm:$0xf]
  %v3509 = vld [vmem:[%s7 + $0x4] sm:$0xf]
  %v3510 = vld [vmem:[%s7 + $0x8] sm:$0xf]
  %v3511 = vld [vmem:[%s7 + $0xc] sm:$0xf]
  %v3512 = vld [vmem:[%s7 + $0x10] sm:$0xf]
  %v3518 = vunpack.c.l.b16 %v3508
  %v3519 = vunpack.c.l.b16 %v3509
  %v3520 = vunpack.c.l.b16 %v3510
  %v3521 = vunpack.c.l.b16 %v3511
  %v3522 = vunpack.c.l.b16 %v3512
  %v3523 = vpack.c.b16 %v3519, %v3518
  %v3524 = vpack.c.b16 %v3521, %v3520
  %v3525 = vpack.c.b16 %v3522, %v3522
  %vm3526 = vcmask 654336
  %v3528 = vsel %vm3526, %v3523, 0
  %v3531 = vsel %vm3526, %v3524, 0
  %v3534 = vsel %vm3526, %v3525, 0
  %3536 = vmatprep.subr.bf16.mxu0 0
  %3537 = vmatpush1.bf16.msra.mxu0 %v3503
  %3538 = vmatprep.subr.bf16.mxu0 0
  %3539 = vmatpush1.bf16.msra.mxu0 %v3504
  %3540 = vmatprep.subr.bf16.mxu0 0
  %3541 = vmatpush1.bf16.msra.mxu0 %v3505
  %3542 = vmatprep.subr.bf16.mxu0 0
  %3543 = vmatpush1.bf16.msra.mxu0 %v3506
  %3544 = vmatprep.subr.bf16.mxu0 0
  %3545 = vmatpush1.bf16.msra.mxu0 %v3507
  %3546 = vmatprep.subr.bf16.mxu0 0
  %3547 = vmatpush1.bf16.msra.mxu0 0
  %3548 = vmatprep.subr.bf16.mxu0 0
  %3549 = vmatpush1.bf16.msra.mxu0 0
  %3550 = vmatprep.subr.bf16.mxu0 0
  %3551 = vmatpush1.bf16.msra.mxu0 0
  %3552 = vmatprep.subr.bf16.mxu0 0
  %3553 = vmatpush1.bf16.msra.mxu0 0
  %3554 = vmatprep.subr.bf16.mxu0 0
  %3555 = vmatpush1.bf16.msra.mxu0 0
  %3556 = vmatprep.subr.bf16.mxu0 0
  %3557 = vmatpush1.bf16.msra.mxu0 0
  %3558 = vmatprep.subr.bf16.mxu0 0
  %3559 = vmatpush1.bf16.msra.mxu0 0
  %3560 = vmatprep.subr.bf16.mxu0 0
  %3561 = vmatpush1.bf16.msra.mxu0 0
  %3562 = vmatprep.subr.bf16.mxu0 0
  %3563 = vmatpush1.bf16.msra.mxu0 0
  %3564 = vmatprep.subr.bf16.mxu0 0
  %3565 = vmatpush1.bf16.msra.mxu0 0
  %3566 = vmatprep.subr.bf16.mxu0 0
  %3567 = vmatpush1.bf16.msra.mxu0 0
  %3568 = vmatprep.mubr.bf16.mxu0 0
  %3569 = vmatmul.mubr.bf16.gmra.mrb[0].mxu0 %v3528
  %v3570 = vpop.f32.mrb[0].mxu0
  %v3571 = vadd.f32 0.0, %v3570
  %v3572 = vpop.f32.mrb[0].mxu0
  %v3573 = vpop.f32.mrb[0].mxu0
  %v3574 = vadd.f32 0.0, %v3573
  %v3575 = vpop.f32.mrb[0].mxu0
  %3576 = vmatprep.mubr.bf16.mxu0 0
  %3577 = vmatmul.mubr.bf16.gmra.mrb[0].mxu0 %v3531
  %v3578 = vpop.f32.mrb[0].mxu0
  %v3579 = vadd.f32 0.0, %v3578
  %v3580 = vpop.f32.mrb[0].mxu0
  %v3581 = vpop.f32.mrb[0].mxu0
  %v3582 = vadd.f32 0.0, %v3581
  %v3583 = vpop.f32.mrb[0].mxu0
  %3584 = vmatprep.mubr.bf16.mxu0 0
  %3585 = vmatmul.mubr.bf16.gmra.mrb[0].mxu0 %v3534
  %v3586 = vpop.f32.mrb[0].mxu0
  %v3587 = vadd.f32 0.0, %v3586
  %v3588 = vpop.f32.mrb[0].mxu0
  %v3589 = vpop.f32.mrb[0].mxu0
  %v3590 = vpop.f32.mrb[0].mxu0
  %3591 = vdwg.mxu0
  %v3592 = vld [vmem:[%s8] sm:$0xf]
  %v3593 = vld [vmem:[%s8 + $0x4] sm:$0xf]
  %v3594 = vld [vmem:[%s8 + $0x8] sm:$0xf]
  %v3595 = vld [vmem:[%s8 + $0xc] sm:$0xf]
  %v3596 = vld [vmem:[%s8 + $0x10] sm:$0xf]
  %v3602 = vunpack.c.l.b16 %v3592
  %v3603 = vunpack.c.l.b16 %v3593
  %v3604 = vunpack.c.l.b16 %v3594
  %v3605 = vunpack.c.l.b16 %v3595
  %v3606 = vunpack.c.l.b16 %v3596
  %v3607 = vpack.c.b16 %v3603, %v3602
  %v3608 = vpack.c.b16 %v3605, %v3604
  %v3609 = vpack.c.b16 %v3606, %v3606
  %v3611 = vsel %vm3526, %v3607, 0
  %v3614 = vsel %vm3526, %v3608, 0
  %v3617 = vsel %vm3526, %v3609, 0
  %3619 = vmatprep.subr.bf16.mxu0 0
  %3620 = vmatpush1.bf16.msra.mxu0 %v3503
  %3621 = vmatprep.subr.bf16.mxu0 0
  %3622 = vmatpush1.bf16.msra.mxu0 %v3504
  %3623 = vmatprep.subr.bf16.mxu0 0
  %3624 = vmatpush1.bf16.msra.mxu0 %v3505
  %3625 = vmatprep.subr.bf16.mxu0 0
  %3626 = vmatpush1.bf16.msra.mxu0 %v3506
  %3627 = vmatprep.subr.bf16.mxu0 0
  %3628 = vmatpush1.bf16.msra.mxu0 %v3507
  %3629 = vmatprep.subr.bf16.mxu0 0
  %3630 = vmatpush1.bf16.msra.mxu0 0
  %3631 = vmatprep.subr.bf16.mxu0 0
  %3632 = vmatpush1.bf16.msra.mxu0 0
  %3633 = vmatprep.subr.bf16.mxu0 0
  %3634 = vmatpush1.bf16.msra.mxu0 0
  %3635 = vmatprep.subr.bf16.mxu0 0
  %3636 = vmatpush1.bf16.msra.mxu0 0
  %3637 = vmatprep.subr.bf16.mxu0 0
  %3638 = vmatpush1.bf16.msra.mxu0 0
  %3639 = vmatprep.subr.bf16.mxu0 0
  %3640 = vmatpush1.bf16.msra.mxu0 0
  %3641 = vmatprep.subr.bf16.mxu0 0
  %3642 = vmatpush1.bf16.msra.mxu0 0
  %3643 = vmatprep.subr.bf16.mxu0 0
  %3644 = vmatpush1.bf16.msra.mxu0 0
  %3645 = vmatprep.subr.bf16.mxu0 0
  %3646 = vmatpush1.bf16.msra.mxu0 0
  %3647 = vmatprep.subr.bf16.mxu0 0
  %3648 = vmatpush1.bf16.msra.mxu0 0
  %3649 = vmatprep.subr.bf16.mxu0 0
  %3650 = vmatpush1.bf16.msra.mxu0 0
  %3651 = vmatprep.mubr.bf16.mxu0 0
  %3652 = vmatmul.mubr.bf16.gmra.mrb[0].mxu0 %v3611
  %v3653 = vpop.f32.mrb[0].mxu0
  %v3654 = vadd.f32 0.0, %v3653
  %v3655 = vpop.f32.mrb[0].mxu0
  %v3656 = vpop.f32.mrb[0].mxu0
  %v3657 = vadd.f32 0.0, %v3656
  %v3658 = vpop.f32.mrb[0].mxu0
  %3659 = vmatprep.mubr.bf16.mxu0 0
  %3660 = vmatmul.mubr.bf16.gmra.mrb[0].mxu0 %v3614
  %v3661 = vpop.f32.mrb[0].mxu0
  %v3662 = vadd.f32 0.0, %v3661
  %v3663 = vpop.f32.mrb[0].mxu0
  %v3664 = vpop.f32.mrb[0].mxu0
  %v3665 = vadd.f32 0.0, %v3664
  %v3666 = vpop.f32.mrb[0].mxu0
  %3667 = vmatprep.mubr.bf16.mxu0 0
  %3668 = vmatmul.mubr.bf16.gmra.mrb[0].mxu0 %v3617
  %v3669 = vpop.f32.mrb[0].mxu0
  %v3670 = vadd.f32 0.0, %v3669
  %v3671 = vpop.f32.mrb[0].mxu0
  %v3672 = vpop.f32.mrb[0].mxu0
  %v3673 = vpop.f32.mrb[0].mxu0
  %3674 = vdwg.mxu0
  %v3675 = vmax.f32 %v3571, %v3654
  %v3676 = vmax.f32 %v3574, %v3657
  %v3677 = vmax.f32 %v3579, %v3662
  %v3678 = vmax.f32 %v3582, %v3665
  %v3679 = vmax.f32 %v3587, %v3670
  %v3680 = vpack.c.bf16 %v3676, %v3675
  %v3681 = vpack.c.bf16 %v3678, %v3677
  %v3682 = vpack.c.bf16 %v3679, %v3679
  %v3683 = vld [vmem:[%s9] sm:$0xf]
  %v3684 = vld [vmem:[%s9 + $0x4] sm:$0xf]
  %v3685 = vld [vmem:[%s9 + $0x8] sm:$0xf]
  %v3686 = vld [vmem:[%s9 + $0xc] sm:$0xf]
  %v3687 = vld [vmem:[%s9 + $0x10] sm:$0xf]
  %v3688 = vld [vmem:[%s9 + $0x14] sm:$0xf]
  %v3689 = vld [vmem:[%s9 + $0x18] sm:$0xf]
  %v3690 = vld [vmem:[%s9 + $0x1c] sm:$0xf]
  %v3691 = vld [vmem:[%s9 + $0x20] sm:$0xf]
  %v3692 = vld [vmem:[%s9 + $0x24] sm:$0xf]
  %v3693 = vld [vmem:[%s9 + $0x28] sm:$0xf]
  %v3694 = vld [vmem:[%s9 + $0x2c] sm:$0xf]
  %v3695 = vld [vmem:[%s9 + $0x30] sm:$0xf]
  %v3696 = vld [vmem:[%s9 + $0x34] sm:$0xf]
  %v3697 = vld [vmem:[%s9 + $0x38] sm:$0xf]
  %v3698 = vld [vmem:[%s9 + $0x3c] sm:$0xf]
  %s3699 = scalar_lea.vmem %s9, 64
  %v3700 = vld [vmem:[%s3699] sm:$0xf]
  %v3701 = vld [vmem:[%s3699 + $0x4] sm:$0xf]
  %v3702 = vld [vmem:[%s3699 + $0x8] sm:$0xf]
  %v3703 = vld [vmem:[%s3699 + $0xc] sm:$0xf]
  %v3704 = vld [vmem:[%s3699 + $0x10] sm:$0xf]
  %v3705 = vld [vmem:[%s3699 + $0x14] sm:$0xf]
  %v3706 = vld [vmem:[%s3699 + $0x18] sm:$0xf]
  %v3707 = vld [vmem:[%s3699 + $0x1c] sm:$0xf]
  %v3708 = vld [vmem:[%s3699 + $0x20] sm:$0xf]
  %v3709 = vld [vmem:[%s3699 + $0x24] sm:$0xf]
  %v3710 = vld [vmem:[%s3699 + $0x28] sm:$0xf]
  %v3711 = vld [vmem:[%s3699 + $0x2c] sm:$0xf]
  %v3712 = vld [vmem:[%s3699 + $0x30] sm:$0xf]
  %v3713 = vld [vmem:[%s3699 + $0x34] sm:$0xf]
  %v3714 = vld [vmem:[%s3699 + $0x38] sm:$0xf]
  %v3715 = vld [vmem:[%s3699 + $0x3c] sm:$0xf]
  %v3717 = vrot.slane %v3680, 4
  %v3735 = vunpack.c.l.b16 %v3700
  %v3736 = vunpack.c.l.b16 %v3701
  %v3737 = vunpack.c.l.b16 %v3702
  %v3738 = vunpack.c.l.b16 %v3703
  %v3739 = vunpack.c.l.b16 %v3704
  %v3740 = vunpack.c.l.b16 %v3705
  %v3741 = vunpack.c.l.b16 %v3706
  %v3742 = vunpack.c.l.b16 %v3707
  %v3743 = vunpack.c.l.b16 %v3708
  %v3744 = vunpack.c.l.b16 %v3709
  %v3745 = vunpack.c.l.b16 %v3710
  %v3746 = vunpack.c.l.b16 %v3711
  %v3747 = vunpack.c.l.b16 %v3712
  %v3748 = vunpack.c.l.b16 %v3713
  %v3749 = vunpack.c.l.b16 %v3714
  %v3750 = vunpack.c.l.b16 %v3715
  %v3751 = vpack.c.b16 %v3736, %v3735
  %v3752 = vpack.c.b16 %v3738, %v3737
  %v3753 = vpack.c.b16 %v3740, %v3739
  %v3754 = vpack.c.b16 %v3742, %v3741
  %v3755 = vpack.c.b16 %v3744, %v3743
  %v3756 = vpack.c.b16 %v3746, %v3745
  %v3757 = vpack.c.b16 %v3748, %v3747
  %v3758 = vpack.c.b16 %v3750, %v3749
  %3767 = vmatprep.subr.bf16.mxu0 0
  %3768 = vmatpush1.bf16.msra.mxu0 %v3751
  %3769 = vmatprep.subr.bf16.mxu0 0
  %3770 = vmatpush1.bf16.msra.mxu0 %v3752
  %3771 = vmatprep.subr.bf16.mxu0 0
  %3772 = vmatpush1.bf16.msra.mxu0 %v3753
  %3773 = vmatprep.subr.bf16.mxu0 0
  %3774 = vmatpush1.bf16.msra.mxu0 %v3754
  %3775 = vmatprep.subr.bf16.mxu0 0
  %3776 = vmatpush1.bf16.msra.mxu0 %v3755
  %3777 = vmatprep.subr.bf16.mxu0 0
  %3778 = vmatpush1.bf16.msra.mxu0 %v3756
  %3779 = vmatprep.subr.bf16.mxu0 0
  %3780 = vmatpush1.bf16.msra.mxu0 %v3757
  %3781 = vmatprep.subr.bf16.mxu0 0
  %3782 = vmatpush1.bf16.msra.mxu0 %v3758
  %3783 = vmatprep.subr.bf16.mxu0 0
  %3784 = vmatpush1.bf16.msra.mxu0 0
  %3785 = vmatprep.subr.bf16.mxu0 0
  %3786 = vmatpush1.bf16.msra.mxu0 0
  %3787 = vmatprep.subr.bf16.mxu0 0
  %3788 = vmatpush1.bf16.msra.mxu0 0
  %3789 = vmatprep.subr.bf16.mxu0 0
  %3790 = vmatpush1.bf16.msra.mxu0 0
  %3791 = vmatprep.subr.bf16.mxu0 0
  %3792 = vmatpush1.bf16.msra.mxu0 0
  %3793 = vmatprep.subr.bf16.mxu0 0
  %3794 = vmatpush1.bf16.msra.mxu0 0
  %3795 = vmatprep.subr.bf16.mxu0 0
  %3796 = vmatpush1.bf16.msra.mxu0 0
  %3797 = vmatprep.subr.bf16.mxu0 0
  %3798 = vmatpush1.bf16.msra.mxu0 0
  %3799 = vmatprep.mubr.bf16.mxu0 0
  %3800 = vmatmul.mubr.bf16.gmra.mrb[0].mxu0 %v3717
  %v3801 = vpop.f32.mrb[0].mxu0
  %v3802 = vadd.f32 0.0, %v3801
  %v3803 = vpop.f32.mrb[0].mxu0
  %v3804 = vpop.f32.mrb[0].mxu0
  %v3805 = vpop.f32.mrb[0].mxu0
  %3806 = vdwg.mxu0
  %v3823 = vunpack.c.l.b16 %v3683
  %v3824 = vunpack.c.l.b16 %v3684
  %v3825 = vunpack.c.l.b16 %v3685
  %v3826 = vunpack.c.l.b16 %v3686
  %v3827 = vunpack.c.l.b16 %v3687
  %v3828 = vunpack.c.l.b16 %v3688
  %v3829 = vunpack.c.l.b16 %v3689
  %v3830 = vunpack.c.l.b16 %v3690
  %v3831 = vunpack.c.l.b16 %v3691
  %v3832 = vunpack.c.l.b16 %v3692
  %v3833 = vunpack.c.l.b16 %v3693
  %v3834 = vunpack.c.l.b16 %v3694
  %v3835 = vunpack.c.l.b16 %v3695
  %v3836 = vunpack.c.l.b16 %v3696
  %v3837 = vunpack.c.l.b16 %v3697
  %v3838 = vunpack.c.l.b16 %v3698
  %v3839 = vpack.c.b16 %v3824, %v3823
  %v3840 = vpack.c.b16 %v3826, %v3825
  %v3841 = vpack.c.b16 %v3828, %v3827
  %v3842 = vpack.c.b16 %v3830, %v3829
  %v3843 = vpack.c.b16 %v3832, %v3831
  %v3844 = vpack.c.b16 %v3834, %v3833
  %v3845 = vpack.c.b16 %v3836, %v3835
  %v3846 = vpack.c.b16 %v3838, %v3837
  %3855 = vmatprep.subr.bf16.mxu0 0
  %3856 = vmatpush1.bf16.msra.mxu0 %v3839
  %3857 = vmatprep.subr.bf16.mxu0 0
  %3858 = vmatpush1.bf16.msra.mxu0 %v3840
  %3859 = vmatprep.subr.bf16.mxu0 0
  %3860 = vmatpush1.bf16.msra.mxu0 %v3841
  %3861 = vmatprep.subr.bf16.mxu0 0
  %3862 = vmatpush1.bf16.msra.mxu0 %v3842
  %3863 = vmatprep.subr.bf16.mxu0 0
  %3864 = vmatpush1.bf16.msra.mxu0 %v3843
  %3865 = vmatprep.subr.bf16.mxu0 0
  %3866 = vmatpush1.bf16.msra.mxu0 %v3844
  %3867 = vmatprep.subr.bf16.mxu0 0
  %3868 = vmatpush1.bf16.msra.mxu0 %v3845
  %3869 = vmatprep.subr.bf16.mxu0 0
  %3870 = vmatpush1.bf16.msra.mxu0 %v3846
  %3871 = vmatprep.subr.bf16.mxu0 0
  %3872 = vmatpush1.bf16.msra.mxu0 0
  %3873 = vmatprep.subr.bf16.mxu0 0
  %3874 = vmatpush1.bf16.msra.mxu0 0
  %3875 = vmatprep.subr.bf16.mxu0 0
  %3876 = vmatpush1.bf16.msra.mxu0 0
  %3877 = vmatprep.subr.bf16.mxu0 0
  %3878 = vmatpush1.bf16.msra.mxu0 0
  %3879 = vmatprep.subr.bf16.mxu0 0
  %3880 = vmatpush1.bf16.msra.mxu0 0
  %3881 = vmatprep.subr.bf16.mxu0 0
  %3882 = vmatpush1.bf16.msra.mxu0 0
  %3883 = vmatprep.subr.bf16.mxu0 0
  %3884 = vmatpush1.bf16.msra.mxu0 0
  %3885 = vmatprep.subr.bf16.mxu0 0
  %3886 = vmatpush1.bf16.msra.mxu0 0
  %3887 = vmatprep.mubr.bf16.mxu0 0
  %3888 = vmatmul.mubr.bf16.gmra.mrb[0].mxu0 %v3680
  %v3889 = vpop.f32.mrb[0].mxu0
  %v3890 = vadd.f32 %v3802, %v3889
  %v3891 = vpop.f32.mrb[0].mxu0
  %v3892 = vpop.f32.mrb[0].mxu0
  %v3893 = vpop.f32.mrb[0].mxu0
  %3894 = vdwg.mxu0
  %s3895 = scalar_lea.vmem %s9, 128
  %v3896 = vld [vmem:[%s3895] sm:$0xf]
  %v3897 = vld [vmem:[%s3895 + $0x4] sm:$0xf]
  %v3898 = vld [vmem:[%s3895 + $0x8] sm:$0xf]
  %v3899 = vld [vmem:[%s3895 + $0xc] sm:$0xf]
  %v3900 = vld [vmem:[%s3895 + $0x10] sm:$0xf]
  %v3901 = vld [vmem:[%s3895 + $0x14] sm:$0xf]
  %v3902 = vld [vmem:[%s3895 + $0x18] sm:$0xf]
  %v3903 = vld [vmem:[%s3895 + $0x1c] sm:$0xf]
  %v3904 = vld [vmem:[%s3895 + $0x20] sm:$0xf]
  %v3905 = vld [vmem:[%s3895 + $0x24] sm:$0xf]
  %v3906 = vld [vmem:[%s3895 + $0x28] sm:$0xf]
  %v3907 = vld [vmem:[%s3895 + $0x2c] sm:$0xf]
  %v3908 = vld [vmem:[%s3895 + $0x30] sm:$0xf]
  %v3909 = vld [vmem:[%s3895 + $0x34] sm:$0xf]
  %v3910 = vld [vmem:[%s3895 + $0x38] sm:$0xf]
  %v3911 = vld [vmem:[%s3895 + $0x3c] sm:$0xf]
  %v3928 = vunpack.c.l.b16 %v3896
  %v3929 = vunpack.c.l.b16 %v3897
  %v3930 = vunpack.c.l.b16 %v3898
  %v3931 = vunpack.c.l.b16 %v3899
  %v3932 = vunpack.c.l.b16 %v3900
  %v3933 = vunpack.c.l.b16 %v3901
  %v3934 = vunpack.c.l.b16 %v3902
  %v3935 = vunpack.c.l.b16 %v3903
  %v3936 = vunpack.c.l.b16 %v3904
  %v3937 = vunpack.c.l.b16 %v3905
  %v3938 = vunpack.c.l.b16 %v3906
  %v3939 = vunpack.c.l.b16 %v3907
  %v3940 = vunpack.c.l.b16 %v3908
  %v3941 = vunpack.c.l.b16 %v3909
  %v3942 = vunpack.c.l.b16 %v3910
  %v3943 = vunpack.c.l.b16 %v3911
  %v3944 = vpack.c.b16 %v3929, %v3928
  %v3945 = vpack.c.b16 %v3931, %v3930
  %v3946 = vpack.c.b16 %v3933, %v3932
  %v3947 = vpack.c.b16 %v3935, %v3934
  %v3948 = vpack.c.b16 %v3937, %v3936
  %v3949 = vpack.c.b16 %v3939, %v3938
  %v3950 = vpack.c.b16 %v3941, %v3940
  %v3951 = vpack.c.b16 %v3943, %v3942
  %3960 = vmatprep.subr.bf16.mxu0 0
  %3961 = vmatpush1.bf16.msra.mxu0 %v3944
  %3962 = vmatprep.subr.bf16.mxu0 0
  %3963 = vmatpush1.bf16.msra.mxu0 %v3945
  %3964 = vmatprep.subr.bf16.mxu0 0
  %3965 = vmatpush1.bf16.msra.mxu0 %v3946
  %3966 = vmatprep.subr.bf16.mxu0 0
  %3967 = vmatpush1.bf16.msra.mxu0 %v3947
  %3968 = vmatprep.subr.bf16.mxu0 0
  %3969 = vmatpush1.bf16.msra.mxu0 %v3948
  %3970 = vmatprep.subr.bf16.mxu0 0
  %3971 = vmatpush1.bf16.msra.mxu0 %v3949
  %3972 = vmatprep.subr.bf16.mxu0 0
  %3973 = vmatpush1.bf16.msra.mxu0 %v3950
  %3974 = vmatprep.subr.bf16.mxu0 0
  %3975 = vmatpush1.bf16.msra.mxu0 %v3951
  %3976 = vmatprep.subr.bf16.mxu0 0
  %3977 = vmatpush1.bf16.msra.mxu0 0
  %3978 = vmatprep.subr.bf16.mxu0 0
  %3979 = vmatpush1.bf16.msra.mxu0 0
  %3980 = vmatprep.subr.bf16.mxu0 0
  %3981 = vmatpush1.bf16.msra.mxu0 0
  %3982 = vmatprep.subr.bf16.mxu0 0
  %3983 = vmatpush1.bf16.msra.mxu0 0
  %3984 = vmatprep.subr.bf16.mxu0 0
  %3985 = vmatpush1.bf16.msra.mxu0 0
  %3986 = vmatprep.subr.bf16.mxu0 0
  %3987 = vmatpush1.bf16.msra.mxu0 0
  %3988 = vmatprep.subr.bf16.mxu0 0
  %3989 = vmatpush1.bf16.msra.mxu0 0
  %3990 = vmatprep.subr.bf16.mxu0 0
  %3991 = vmatpush1.bf16.msra.mxu0 0
  %3992 = vmatprep.mubr.bf16.mxu0 0
  %3993 = vmatmul.mubr.bf16.gmra.mrb[0].mxu0 %v3681
  %v3994 = vpop.f32.mrb[0].mxu0
  %v3995 = vadd.f32 0.0, %v3994
  %v3996 = vpop.f32.mrb[0].mxu0
  %v3997 = vpop.f32.mrb[0].mxu0
  %v3998 = vpop.f32.mrb[0].mxu0
  %3999 = vdwg.mxu0
  %v4000 = vadd.f32 %v3890, %v3995
  %s4001 = scalar_lea.vmem %s9, 192
  %v4002 = vld [vmem:[%s4001] sm:$0xf]
  %v4003 = vld [vmem:[%s4001 + $0x4] sm:$0xf]
  %v4004 = vld [vmem:[%s4001 + $0x8] sm:$0xf]
  %v4005 = vld [vmem:[%s4001 + $0xc] sm:$0xf]
  %v4006 = vld [vmem:[%s4001 + $0x10] sm:$0xf]
  %v4007 = vld [vmem:[%s4001 + $0x14] sm:$0xf]
  %v4008 = vld [vmem:[%s4001 + $0x18] sm:$0xf]
  %v4009 = vld [vmem:[%s4001 + $0x1c] sm:$0xf]
  %v4010 = vld [vmem:[%s4001 + $0x20] sm:$0xf]
  %v4011 = vld [vmem:[%s4001 + $0x24] sm:$0xf]
  %v4012 = vld [vmem:[%s4001 + $0x28] sm:$0xf]
  %v4013 = vld [vmem:[%s4001 + $0x2c] sm:$0xf]
  %v4014 = vld [vmem:[%s4001 + $0x30] sm:$0xf]
  %v4015 = vld [vmem:[%s4001 + $0x34] sm:$0xf]
  %v4016 = vld [vmem:[%s4001 + $0x38] sm:$0xf]
  %v4017 = vld [vmem:[%s4001 + $0x3c] sm:$0xf]
  %v4019 = vrot.slane %v3681, 4
  %v4037 = vunpack.c.l.b16 %v4002
  %v4038 = vunpack.c.l.b16 %v4003
  %v4039 = vunpack.c.l.b16 %v4004
  %v4040 = vunpack.c.l.b16 %v4005
  %v4041 = vunpack.c.l.b16 %v4006
  %v4042 = vunpack.c.l.b16 %v4007
  %v4043 = vunpack.c.l.b16 %v4008
  %v4044 = vunpack.c.l.b16 %v4009
  %v4045 = vunpack.c.l.b16 %v4010
  %v4046 = vunpack.c.l.b16 %v4011
  %v4047 = vunpack.c.l.b16 %v4012
  %v4048 = vunpack.c.l.b16 %v4013
  %v4049 = vunpack.c.l.b16 %v4014
  %v4050 = vunpack.c.l.b16 %v4015
  %v4051 = vunpack.c.l.b16 %v4016
  %v4052 = vunpack.c.l.b16 %v4017
  %v4053 = vpack.c.b16 %v4038, %v4037
  %v4054 = vpack.c.b16 %v4040, %v4039
  %v4055 = vpack.c.b16 %v4042, %v4041
  %v4056 = vpack.c.b16 %v4044, %v4043
  %v4057 = vpack.c.b16 %v4046, %v4045
  %v4058 = vpack.c.b16 %v4048, %v4047
  %v4059 = vpack.c.b16 %v4050, %v4049
  %v4060 = vpack.c.b16 %v4052, %v4051
  %4069 = vmatprep.subr.bf16.mxu0 0
  %4070 = vmatpush1.bf16.msra.mxu0 %v4053
  %4071 = vmatprep.subr.bf16.mxu0 0
  %4072 = vmatpush1.bf16.msra.mxu0 %v4054
  %4073 = vmatprep.subr.bf16.mxu0 0
  %4074 = vmatpush1.bf16.msra.mxu0 %v4055
  %4075 = vmatprep.subr.bf16.mxu0 0
  %4076 = vmatpush1.bf16.msra.mxu0 %v4056
  %4077 = vmatprep.subr.bf16.mxu0 0
  %4078 = vmatpush1.bf16.msra.mxu0 %v4057
  %4079 = vmatprep.subr.bf16.mxu0 0
  %4080 = vmatpush1.bf16.msra.mxu0 %v4058
  %4081 = vmatprep.subr.bf16.mxu0 0
  %4082 = vmatpush1.bf16.msra.mxu0 %v4059
  %4083 = vmatprep.subr.bf16.mxu0 0
  %4084 = vmatpush1.bf16.msra.mxu0 %v4060
  %4085 = vmatprep.subr.bf16.mxu0 0
  %4086 = vmatpush1.bf16.msra.mxu0 0
  %4087 = vmatprep.subr.bf16.mxu0 0
  %4088 = vmatpush1.bf16.msra.mxu0 0
  %4089 = vmatprep.subr.bf16.mxu0 0
  %4090 = vmatpush1.bf16.msra.mxu0 0
  %4091 = vmatprep.subr.bf16.mxu0 0
  %4092 = vmatpush1.bf16.msra.mxu0 0
  %4093 = vmatprep.subr.bf16.mxu0 0
  %4094 = vmatpush1.bf16.msra.mxu0 0
  %4095 = vmatprep.subr.bf16.mxu0 0
  %4096 = vmatpush1.bf16.msra.mxu0 0
  %4097 = vmatprep.subr.bf16.mxu0 0
  %4098 = vmatpush1.bf16.msra.mxu0 0
  %4099 = vmatprep.subr.bf16.mxu0 0
  %4100 = vmatpush1.bf16.msra.mxu0 0
  %4101 = vmatprep.mubr.bf16.mxu0 0
  %4102 = vmatmul.mubr.bf16.gmra.mrb[0].mxu0 %v4019
  %v4103 = vpop.f32.mrb[0].mxu0
  %v4104 = vadd.f32 0.0, %v4103
  %v4105 = vpop.f32.mrb[0].mxu0
  %v4106 = vpop.f32.mrb[0].mxu0
  %v4107 = vpop.f32.mrb[0].mxu0
  %4108 = vdwg.mxu0
  %v4109 = vadd.f32 %v4000, %v4104
  %s4110 = scalar_lea.vmem %s9, 256
  %v4111 = vld [vmem:[%s4110] sm:$0xf]
  %v4112 = vld [vmem:[%s4110 + $0x4] sm:$0xf]
  %v4113 = vld [vmem:[%s4110 + $0x8] sm:$0xf]
  %v4114 = vld [vmem:[%s4110 + $0xc] sm:$0xf]
  %v4115 = vld [vmem:[%s4110 + $0x10] sm:$0xf]
  %v4116 = vld [vmem:[%s4110 + $0x14] sm:$0xf]
  %v4117 = vld [vmem:[%s4110 + $0x18] sm:$0xf]
  %v4118 = vld [vmem:[%s4110 + $0x1c] sm:$0xf]
  %v4119 = vld [vmem:[%s4110 + $0x20] sm:$0xf]
  %v4120 = vld [vmem:[%s4110 + $0x24] sm:$0xf]
  %v4121 = vld [vmem:[%s4110 + $0x28] sm:$0xf]
  %v4122 = vld [vmem:[%s4110 + $0x2c] sm:$0xf]
  %v4123 = vld [vmem:[%s4110 + $0x30] sm:$0xf]
  %v4124 = vld [vmem:[%s4110 + $0x34] sm:$0xf]
  %v4125 = vld [vmem:[%s4110 + $0x38] sm:$0xf]
  %v4126 = vld [vmem:[%s4110 + $0x3c] sm:$0xf]
  %v4143 = vunpack.c.l.b16 %v4111
  %v4144 = vunpack.c.l.b16 %v4112
  %v4145 = vunpack.c.l.b16 %v4113
  %v4146 = vunpack.c.l.b16 %v4114
  %v4147 = vunpack.c.l.b16 %v4115
  %v4148 = vunpack.c.l.b16 %v4116
  %v4149 = vunpack.c.l.b16 %v4117
  %v4150 = vunpack.c.l.b16 %v4118
  %v4151 = vunpack.c.l.b16 %v4119
  %v4152 = vunpack.c.l.b16 %v4120
  %v4153 = vunpack.c.l.b16 %v4121
  %v4154 = vunpack.c.l.b16 %v4122
  %v4155 = vunpack.c.l.b16 %v4123
  %v4156 = vunpack.c.l.b16 %v4124
  %v4157 = vunpack.c.l.b16 %v4125
  %v4158 = vunpack.c.l.b16 %v4126
  %v4159 = vpack.c.b16 %v4144, %v4143
  %v4160 = vpack.c.b16 %v4146, %v4145
  %v4161 = vpack.c.b16 %v4148, %v4147
  %v4162 = vpack.c.b16 %v4150, %v4149
  %v4163 = vpack.c.b16 %v4152, %v4151
  %v4164 = vpack.c.b16 %v4154, %v4153
  %v4165 = vpack.c.b16 %v4156, %v4155
  %v4166 = vpack.c.b16 %v4158, %v4157
  %4175 = vmatprep.subr.bf16.mxu0 0
  %4176 = vmatpush1.bf16.msra.mxu0 %v4159
  %4177 = vmatprep.subr.bf16.mxu0 0
  %4178 = vmatpush1.bf16.msra.mxu0 %v4160
  %4179 = vmatprep.subr.bf16.mxu0 0
  %4180 = vmatpush1.bf16.msra.mxu0 %v4161
  %4181 = vmatprep.subr.bf16.mxu0 0
  %4182 = vmatpush1.bf16.msra.mxu0 %v4162
  %4183 = vmatprep.subr.bf16.mxu0 0
  %4184 = vmatpush1.bf16.msra.mxu0 %v4163
  %4185 = vmatprep.subr.bf16.mxu0 0
  %4186 = vmatpush1.bf16.msra.mxu0 %v4164
  %4187 = vmatprep.subr.bf16.mxu0 0
  %4188 = vmatpush1.bf16.msra.mxu0 %v4165
  %4189 = vmatprep.subr.bf16.mxu0 0
  %4190 = vmatpush1.bf16.msra.mxu0 %v4166
  %4191 = vmatprep.subr.bf16.mxu0 0
  %4192 = vmatpush1.bf16.msra.mxu0 0
  %4193 = vmatprep.subr.bf16.mxu0 0
  %4194 = vmatpush1.bf16.msra.mxu0 0
  %4195 = vmatprep.subr.bf16.mxu0 0
  %4196 = vmatpush1.bf16.msra.mxu0 0
  %4197 = vmatprep.subr.bf16.mxu0 0
  %4198 = vmatpush1.bf16.msra.mxu0 0
  %4199 = vmatprep.subr.bf16.mxu0 0
  %4200 = vmatpush1.bf16.msra.mxu0 0
  %4201 = vmatprep.subr.bf16.mxu0 0
  %4202 = vmatpush1.bf16.msra.mxu0 0
  %4203 = vmatprep.subr.bf16.mxu0 0
  %4204 = vmatpush1.bf16.msra.mxu0 0
  %4205 = vmatprep.subr.bf16.mxu0 0
  %4206 = vmatpush1.bf16.msra.mxu0 0
  %4207 = vmatprep.mubr.bf16.mxu0 0
  %4208 = vmatmul.mubr.bf16.gmra.mrb[0].mxu0 %v3682
  %v4209 = vpop.f32.mrb[0].mxu0
  %v4210 = vadd.f32 0.0, %v4209
  %v4211 = vpop.f32.mrb[0].mxu0
  %v4212 = vpop.f32.mrb[0].mxu0
  %v4213 = vpop.f32.mrb[0].mxu0
  %4214 = vdwg.mxu0
  %v4215 = vadd.f32 %v4109, %v4210
  %v4216 = vld [vmem:[%s10] sm:$0x1]
  %v4218 = vlaneseq
  %v4219 = vshrl.u32 %v4218, 7
  %v4220 = vsub.s32 0, %v4219
  %v4221 = vrot.slane %v4216, %v4220
  %v4223 = vadd.f32 %v4215, %v4221
  %v4224 = vmax.f32 %v4223, 0.0
  %v4225 = vpack.c.bf16 %v4224, %v4224
  %v4226 = vld [vmem:[%s11] sm:$0xf]
  %v4227 = vld [vmem:[%s11 + $0x4] sm:$0xf]
  %v4228 = vld [vmem:[%s11 + $0x8] sm:$0xf]
  %v4229 = vld [vmem:[%s11 + $0xc] sm:$0xf]
  %v4230 = vld [vmem:[%s11 + $0x10] sm:$0xf]
  %v4231 = vld [vmem:[%s11 + $0x14] sm:$0xf]
  %v4232 = vld [vmem:[%s11 + $0x18] sm:$0xf]
  %v4233 = vld [vmem:[%s11 + $0x1c] sm:$0xf]
  %v4234 = vld [vmem:[%s11 + $0x20] sm:$0xf]
  %v4235 = vld [vmem:[%s11 + $0x24] sm:$0xf]
  %v4236 = vld [vmem:[%s11 + $0x28] sm:$0xf]
  %v4237 = vld [vmem:[%s11 + $0x2c] sm:$0xf]
  %v4238 = vld [vmem:[%s11 + $0x30] sm:$0xf]
  %v4239 = vld [vmem:[%s11 + $0x34] sm:$0xf]
  %v4240 = vld [vmem:[%s11 + $0x38] sm:$0xf]
  %v4241 = vld [vmem:[%s11 + $0x3c] sm:$0xf]
  %v4242 = vld [vmem:[%s12] sm:$0x1]
  %v4244 = vlaneseq
  %v4245 = vshrl.u32 %v4244, 7
  %v4246 = vsub.s32 0, %v4245
  %v4247 = vrot.slane %v4242, %v4246
  %v4265 = vunpack.c.l.b16 %v4226
  %v4266 = vunpack.c.l.b16 %v4227
  %v4267 = vunpack.c.l.b16 %v4228
  %v4268 = vunpack.c.l.b16 %v4229
  %v4269 = vunpack.c.l.b16 %v4230
  %v4270 = vunpack.c.l.b16 %v4231
  %v4271 = vunpack.c.l.b16 %v4232
  %v4272 = vunpack.c.l.b16 %v4233
  %v4273 = vunpack.c.l.b16 %v4234
  %v4274 = vunpack.c.l.b16 %v4235
  %v4275 = vunpack.c.l.b16 %v4236
  %v4276 = vunpack.c.l.b16 %v4237
  %v4277 = vunpack.c.l.b16 %v4238
  %v4278 = vunpack.c.l.b16 %v4239
  %v4279 = vunpack.c.l.b16 %v4240
  %v4280 = vunpack.c.l.b16 %v4241
  %v4281 = vpack.c.b16 %v4266, %v4265
  %v4282 = vpack.c.b16 %v4268, %v4267
  %v4283 = vpack.c.b16 %v4270, %v4269
  %v4284 = vpack.c.b16 %v4272, %v4271
  %v4285 = vpack.c.b16 %v4274, %v4273
  %v4286 = vpack.c.b16 %v4276, %v4275
  %v4287 = vpack.c.b16 %v4278, %v4277
  %v4288 = vpack.c.b16 %v4280, %v4279
  %4297 = vmatprep.subr.bf16.mxu0 0
  %4298 = vmatpush1.bf16.msra.mxu0 %v4281
  %4299 = vmatprep.subr.bf16.mxu0 0
  %4300 = vmatpush1.bf16.msra.mxu0 %v4282
  %4301 = vmatprep.subr.bf16.mxu0 0
  %4302 = vmatpush1.bf16.msra.mxu0 %v4283
  %4303 = vmatprep.subr.bf16.mxu0 0
  %4304 = vmatpush1.bf16.msra.mxu0 %v4284
  %4305 = vmatprep.subr.bf16.mxu0 0
  %4306 = vmatpush1.bf16.msra.mxu0 %v4285
  %4307 = vmatprep.subr.bf16.mxu0 0
  %4308 = vmatpush1.bf16.msra.mxu0 %v4286
  %4309 = vmatprep.subr.bf16.mxu0 0
  %4310 = vmatpush1.bf16.msra.mxu0 %v4287
  %4311 = vmatprep.subr.bf16.mxu0 0
  %4312 = vmatpush1.bf16.msra.mxu0 %v4288
  %4313 = vmatprep.subr.bf16.mxu0 0
  %4314 = vmatpush1.bf16.msra.mxu0 0
  %4315 = vmatprep.subr.bf16.mxu0 0
  %4316 = vmatpush1.bf16.msra.mxu0 0
  %4317 = vmatprep.subr.bf16.mxu0 0
  %4318 = vmatpush1.bf16.msra.mxu0 0
  %4319 = vmatprep.subr.bf16.mxu0 0
  %4320 = vmatpush1.bf16.msra.mxu0 0
  %4321 = vmatprep.subr.bf16.mxu0 0
  %4322 = vmatpush1.bf16.msra.mxu0 0
  %4323 = vmatprep.subr.bf16.mxu0 0
  %4324 = vmatpush1.bf16.msra.mxu0 0
  %4325 = vmatprep.subr.bf16.mxu0 0
  %4326 = vmatpush1.bf16.msra.mxu0 0
  %4327 = vmatprep.subr.bf16.mxu0 0
  %4328 = vmatpush1.bf16.msra.mxu0 0
  %4329 = vmatprep.mubr.bf16.mxu0 0
  %4330 = vmatmul.mubr.bf16.gmra.mrb[0].mxu0 %v4225
  %v4331 = vpop.f32.mrb[0].mxu0
  %v4332 = vadd.f32 %v4247, %v4331
  %v4333 = vpop.f32.mrb[0].mxu0
  %v4334 = vpop.f32.mrb[0].mxu0
  %v4335 = vpop.f32.mrb[0].mxu0
  %4336 = vdwg.mxu0
  %v4337 = vmax.f32 %v4332, 0.0
  %v4338 = vpack.c.bf16 %v4337, %v4337
  %v4339 = vld [vmem:[%s13] sm:$0xf]
  %v4340 = vld [vmem:[%s13 + $0x4] sm:$0xf]
  %v4341 = vld [vmem:[%s13 + $0x8] sm:$0xf]
  %v4342 = vld [vmem:[%s13 + $0xc] sm:$0xf]
  %v4343 = vld [vmem:[%s13 + $0x10] sm:$0xf]
  %v4344 = vld [vmem:[%s13 + $0x14] sm:$0xf]
  %v4345 = vld [vmem:[%s13 + $0x18] sm:$0xf]
  %v4346 = vld [vmem:[%s13 + $0x1c] sm:$0xf]
  %v4347 = vld [vmem:[%s13 + $0x20] sm:$0xf]
  %v4348 = vld [vmem:[%s13 + $0x24] sm:$0xf]
  %v4349 = vld [vmem:[%s13 + $0x28] sm:$0xf]
  %v4350 = vld [vmem:[%s13 + $0x2c] sm:$0xf]
  %v4351 = vld [vmem:[%s13 + $0x30] sm:$0xf]
  %v4352 = vld [vmem:[%s13 + $0x34] sm:$0xf]
  %v4353 = vld [vmem:[%s13 + $0x38] sm:$0xf]
  %v4354 = vld [vmem:[%s13 + $0x3c] sm:$0xf]
  %v4355 = vld [vmem:[%s14] sm:$0x1]
  %v4357 = vlaneseq
  %v4358 = vshrl.u32 %v4357, 7
  %v4359 = vsub.s32 0, %v4358
  %v4360 = vrot.slane %v4355, %v4359
  %v4378 = vunpack.c.l.b16 %v4339
  %v4379 = vunpack.c.l.b16 %v4340
  %v4380 = vunpack.c.l.b16 %v4341
  %v4381 = vunpack.c.l.b16 %v4342
  %v4382 = vunpack.c.l.b16 %v4343
  %v4383 = vunpack.c.l.b16 %v4344
  %v4384 = vunpack.c.l.b16 %v4345
  %v4385 = vunpack.c.l.b16 %v4346
  %v4386 = vunpack.c.l.b16 %v4347
  %v4387 = vunpack.c.l.b16 %v4348
  %v4388 = vunpack.c.l.b16 %v4349
  %v4389 = vunpack.c.l.b16 %v4350
  %v4390 = vunpack.c.l.b16 %v4351
  %v4391 = vunpack.c.l.b16 %v4352
  %v4392 = vunpack.c.l.b16 %v4353
  %v4393 = vunpack.c.l.b16 %v4354
  %v4394 = vpack.c.b16 %v4379, %v4378
  %v4395 = vpack.c.b16 %v4381, %v4380
  %v4396 = vpack.c.b16 %v4383, %v4382
  %v4397 = vpack.c.b16 %v4385, %v4384
  %v4398 = vpack.c.b16 %v4387, %v4386
  %v4399 = vpack.c.b16 %v4389, %v4388
  %v4400 = vpack.c.b16 %v4391, %v4390
  %v4401 = vpack.c.b16 %v4393, %v4392
  %4410 = vmatprep.subr.bf16.mxu0 0
  %4411 = vmatpush1.bf16.msra.mxu0 %v4394
  %4412 = vmatprep.subr.bf16.mxu0 0
  %4413 = vmatpush1.bf16.msra.mxu0 %v4395
  %4414 = vmatprep.subr.bf16.mxu0 0
  %4415 = vmatpush1.bf16.msra.mxu0 %v4396
  %4416 = vmatprep.subr.bf16.mxu0 0
  %4417 = vmatpush1.bf16.msra.mxu0 %v4397
  %4418 = vmatprep.subr.bf16.mxu0 0
  %4419 = vmatpush1.bf16.msra.mxu0 %v4398
  %4420 = vmatprep.subr.bf16.mxu0 0
  %4421 = vmatpush1.bf16.msra.mxu0 %v4399
  %4422 = vmatprep.subr.bf16.mxu0 0
  %4423 = vmatpush1.bf16.msra.mxu0 %v4400
  %4424 = vmatprep.subr.bf16.mxu0 0
  %4425 = vmatpush1.bf16.msra.mxu0 %v4401
  %4426 = vmatprep.subr.bf16.mxu0 0
  %4427 = vmatpush1.bf16.msra.mxu0 0
  %4428 = vmatprep.subr.bf16.mxu0 0
  %4429 = vmatpush1.bf16.msra.mxu0 0
  %4430 = vmatprep.subr.bf16.mxu0 0
  %4431 = vmatpush1.bf16.msra.mxu0 0
  %4432 = vmatprep.subr.bf16.mxu0 0
  %4433 = vmatpush1.bf16.msra.mxu0 0
  %4434 = vmatprep.subr.bf16.mxu0 0
  %4435 = vmatpush1.bf16.msra.mxu0 0
  %4436 = vmatprep.subr.bf16.mxu0 0
  %4437 = vmatpush1.bf16.msra.mxu0 0
  %4438 = vmatprep.subr.bf16.mxu0 0
  %4439 = vmatpush1.bf16.msra.mxu0 0
  %4440 = vmatprep.subr.bf16.mxu0 0
  %4441 = vmatpush1.bf16.msra.mxu0 0
  %4442 = vmatprep.mubr.bf16.mxu0 0
  %4443 = vmatmul.mubr.bf16.gmra.mrb[0].mxu0 %v4338
  %v4444 = vpop.f32.mrb[0].mxu0
  %v4445 = vadd.f32 %v4360, %v4444
  %v4446 = vpop.f32.mrb[0].mxu0
  %v4447 = vpop.f32.mrb[0].mxu0
  %v4448 = vpop.f32.mrb[0].mxu0
  %4449 = vdwg.mxu0
  %4450 = vst [vmem:[%s15] sm:$0xff] %v4445
  // Predicated region
  $region62: #{net_forward.1} parent=0 // pred_check
    _
  $region63: #{net_forward.1} parent=0 // pred_check_branch
    %4452 = sbr.rel (0) target = $region65
  $region64: #{net_forward.1} parent=0 // pred_region
    _
  $region65: #{net_forward.1} parent=0 // pred_fallthru
    _
  // Predicated region
  $region66: #{net_forward.1} parent=0 // pred_check
    _
  $region67: #{net_forward.1} parent=0 // pred_check_branch
    %4454 = sbr.rel (0) target = $region69
  $region68: #{net_forward.1} parent=0 // pred_region
    _
  $region69: #{net_forward.1} parent=0 // pred_fallthru
    _

</llo_original>
